<compile_context>
chip_gen: v7x
topology: tpu7x:2x2x1
jax: 0.10.0
libtpu: 0.0.40
codegen_flags: <defaults>
</compile_context>

<pallas_src>
import math

import jax
import jax.numpy as jnp
from jax.experimental import pallas as pl
from jax.experimental.pallas import tpu as pltpu


NEG_SLOPE = 0.2
N1, N2, N3, N4 = 2048, 1024, 512, 256   # hidden widths of the 5 Linear layers
TN1 = 512                               # tile of W1's N dim / W2's K dim (4 grid steps)
OUT_PAD = 128                           # pad final N=1 output to a lane-dense width


def _round_up(x, m):
    return (x + m - 1) // m * m


def _lrelu(z):
    return jnp.where(z > 0, z, NEG_SLOPE * z)


def discriminator_kernel(x_ref,
                         w1_ref, b1_ref,
                         w2_ref, b2_ref,
                         w3_ref, b3_ref,
                         w4_ref, b4_ref,
                         w5_ref, b5_ref,
                         out_ref,
                         acc_ref):
    """Fused MLP forward.  Grid = (batch tiles, K tiles of layers 1/2)."""
    k = pl.program_id(1)
    nk = pl.num_programs(1)

    @pl.when(k == 0)
    def _():
        acc_ref[...] = jnp.zeros_like(acc_ref)

    # Layer 1: one 512-wide column tile of the 2048 outputs, + bias + LeakyReLU.
    x = x_ref[...].astype(jnp.bfloat16)                               # (TM, K1)
    h1 = jnp.dot(x, w1_ref[...],
                 preferred_element_type=jnp.float32) + b1_ref[...]    # (TM, TN1)
    h1 = _lrelu(h1)

    # Layer 2: accumulate the matching 512-row K-slice of W2 into f32 scratch.
    acc_ref[...] += jnp.dot(h1.astype(jnp.bfloat16), w2_ref[...],
                            preferred_element_type=jnp.float32)       # (TM, N2)

    # Tail layers (small; run once per batch tile, at the last K step).
    @pl.when(k == nk - 1)
    def _():
        h2 = _lrelu(acc_ref[...] + b2_ref[...])                       # (TM, 1024)
        h3 = _lrelu(jnp.dot(h2.astype(jnp.bfloat16), w3_ref[...],
                            preferred_element_type=jnp.float32) + b3_ref[...])
        h4 = _lrelu(jnp.dot(h3.astype(jnp.bfloat16), w4_ref[...],
                            preferred_element_type=jnp.float32) + b4_ref[...])
        logits = jnp.dot(h4.astype(jnp.bfloat16), w5_ref[...],
                         preferred_element_type=jnp.float32) + b5_ref[...]
        # Numerically stable sigmoid (exp runs on the EUP slot; no overflow path).
        z = jnp.exp(-jnp.abs(logits))
        p = 1.0 / (1.0 + z)
        out_ref[...] = jnp.where(logits >= 0, p, 1.0 - p)


def init_linear_params(key, in_features, out_features):
    """torch.nn.Linear-style U(-1/sqrt(fan_in), 1/sqrt(fan_in)) init."""
    k_w, k_b = jax.random.split(key)
    bound = 1.0 / math.sqrt(in_features)
    w = jax.random.uniform(k_w, (in_features, out_features), jnp.float32,
                           minval=-bound, maxval=bound)   # (in, out): kernel does x @ W
    b = jax.random.uniform(k_b, (1, out_features), jnp.float32,
                           minval=-bound, maxval=bound)
    return w, b


def make_discriminator_params(img_channel, height, width, key):
    d_in = img_channel * height * width
    dims = [d_in, N1, N2, N3, N4, 1]
    keys = jax.random.split(key, len(dims) - 1)
    return [init_linear_params(keys[i], dims[i], dims[i + 1])
            for i in range(len(dims) - 1)]


def discriminator_forward(img, params):
    """img: (B, C, H, W) float32 NCHW.  Returns (B, 1) float32 in (0, 1)."""
    B = img.shape[0]
    x = img.reshape(B, -1).astype(jnp.float32)    # same flattening as torch .view(B, -1)
    d_in = x.shape[1]

    # ---- alignment / padding --------------------------------------------
    d_in_pad = _round_up(d_in, 128)               # lane-align flattened K
    TM = min(128, _round_up(B, 8))                # batch tile (MXU rows), minimal padding
    b_pad = _round_up(B, TM)
    x = jnp.pad(x, ((0, b_pad - B), (0, d_in_pad - d_in)))

    (w1, b1), (w2, b2), (w3, b3), (w4, b4), (w5, b5) = params
    # Weights -> bf16 (halves HBM bytes on this memory-bound kernel); biases f32.
    w1 = jnp.pad(w1, ((0, d_in_pad - d_in), (0, 0))).astype(jnp.bfloat16)
    w2 = w2.astype(jnp.bfloat16)
    w3 = w3.astype(jnp.bfloat16)
    w4 = w4.astype(jnp.bfloat16)
    w5 = jnp.pad(w5, ((0, 0), (0, OUT_PAD - w5.shape[1]))).astype(jnp.bfloat16)
    b5 = jnp.pad(b5, ((0, 0), (0, OUT_PAD - b5.shape[1])))

    nb = b_pad // TM
    nk = N1 // TN1                                # 2048 / 512 = 4

    flops = 2 * b_pad * (d_in_pad * N1 + N1 * N2 + N2 * N3 + N3 * N4
                         + N4 * OUT_PAD)
    bytes_accessed = (x.size * 4 + b_pad * OUT_PAD * 4
                      + sum(int(w.size) * 2 for w in (w1, w2, w3, w4, w5))
                      + sum(int(b.size) * 4 for b in (b1, b2, b3, b4, b5)))

    grid_spec = pltpu.PrefetchScalarGridSpec(
        num_scalar_prefetch=0,
        grid=(nb, nk),
        in_specs=[
            pl.BlockSpec((TM, d_in_pad), lambda i, k: (i, 0)),     # x (per batch tile)
            pl.BlockSpec((d_in_pad, TN1), lambda i, k: (0, k)),    # W1 column tile
            pl.BlockSpec((1, TN1), lambda i, k: (0, k)),           # b1 tile
            pl.BlockSpec((TN1, N2), lambda i, k: (k, 0)),          # W2 row (K) tile
            pl.BlockSpec((1, N2), lambda i, k: (0, 0)),            # b2 (resident)
            pl.BlockSpec((N2, N3), lambda i, k: (0, 0)),           # W3 (resident)
            pl.BlockSpec((1, N3), lambda i, k: (0, 0)),            # b3
            pl.BlockSpec((N3, N4), lambda i, k: (0, 0)),           # W4 (resident)
            pl.BlockSpec((1, N4), lambda i, k: (0, 0)),            # b4
            pl.BlockSpec((N4, OUT_PAD), lambda i, k: (0, 0)),      # W5 (padded, resident)
            pl.BlockSpec((1, OUT_PAD), lambda i, k: (0, 0)),       # b5 (padded)
        ],
        out_specs=pl.BlockSpec((TM, OUT_PAD), lambda i, k: (i, 0)),
        scratch_shapes=[pltpu.VMEM((TM, N2), jnp.float32)],        # layer-2 accumulator
    )

    out = pl.pallas_call(
        discriminator_kernel,
        out_shape=jax.ShapeDtypeStruct((b_pad, OUT_PAD), jnp.float32),
        grid_spec=grid_spec,
        compiler_params=pltpu.CompilerParams(
            dimension_semantics=("parallel", "arbitrary"),
            vmem_limit_bytes=48 * 1024 * 1024,    # < 64 MiB (v7x physical VMEM)
        ),
        cost_estimate=pl.CostEstimate(
            flops=flops,
            transcendentals=b_pad * OUT_PAD,
            bytes_accessed=bytes_accessed,
        ),
    )(x, w1, b1, w2, b2, w3, b3, w4, b4, w5, b5)

    return out[:B, :1]


def discriminator_reference(img, params):
    """Pure-JAX reference using the same bf16 weight / activation casts."""
    h = img.reshape(img.shape[0], -1).astype(jnp.float32)
    n = len(params)
    for i, (w, b) in enumerate(params):
        h = jnp.dot(h.astype(jnp.bfloat16), w.astype(jnp.bfloat16),
                    preferred_element_type=jnp.float32) + b
        if i < n - 1:
            h = jnp.where(h > 0, h, NEG_SLOPE * h)
        else:
            h = jax.nn.sigmoid(h)
    return h


if __name__ == "__main__":
    # Small shapes consistent with the module: batch=2, channels=4, 16x16 image
    # -> flattened input dim = 4*16*16 = 1024.
    B, C, H, W = 2, 4, 16, 16

    key = jax.random.PRNGKey(0)
    k_img, k_params = jax.random.split(key)

    img = jax.random.normal(k_img, (B, C, H, W), dtype=jnp.float32)
    params = make_discriminator_params(C, H, W, k_params)

    out = jax.block_until_ready(discriminator_forward(img, params))
    ref = jax.block_until_ready(discriminator_reference(img, params))

    assert out.shape == (B, 1), out.shape
    assert jnp.allclose(out, ref, atol=1e-3, rtol=1e-3), (out, ref)

    print("KERNEL_OK")
</pallas_src>

<mosaic_0001>
module attributes {stable_mosaic.version = 11 : i64} {
  func.func @discriminator_kernel(%arg0: i32, %arg1: i32, %arg2: memref<8x1024xf32, #tpu.memory_space<vmem>>, %arg3: memref<1024x512xbf16, #tpu.memory_space<vmem>>, %arg4: memref<1x512xf32, #tpu.memory_space<vmem>>, %arg5: memref<512x1024xbf16, #tpu.memory_space<vmem>>, %arg6: memref<1x1024xf32, #tpu.memory_space<vmem>>, %arg7: memref<1024x512xbf16, #tpu.memory_space<vmem>>, %arg8: memref<1x512xf32, #tpu.memory_space<vmem>>, %arg9: memref<512x256xbf16, #tpu.memory_space<vmem>>, %arg10: memref<1x256xf32, #tpu.memory_space<vmem>>, %arg11: memref<256x128xbf16, #tpu.memory_space<vmem>>, %arg12: memref<1x128xf32, #tpu.memory_space<vmem>>, %arg13: memref<8x128xf32, #tpu.memory_space<vmem>>, %arg14: memref<8x1024xf32, #tpu.memory_space<vmem>>) attributes {dimension_semantics = [#tpu.dimension_semantics<parallel>, #tpu.dimension_semantics<arbitrary>], iteration_bounds = array<i64: 1, 4>, scalar_prefetch = 0 : i64, scratch_operands = 1 : i64, tpu.core_type = #tpu.core_type<tc>, window_params = [{transform_indices = @transform_0, window_bounds = array<i64: 8, 1024>}, {transform_indices = @transform_1, window_bounds = array<i64: 1024, 512>}, {transform_indices = @transform_2, window_bounds = array<i64: 1, 512>}, {transform_indices = @transform_3, window_bounds = array<i64: 512, 1024>}, {pipeline_mode = #tpu.pipeline_mode<synchronous>, transform_indices = @transform_4, window_bounds = array<i64: 1, 1024>}, {pipeline_mode = #tpu.pipeline_mode<synchronous>, transform_indices = @transform_5, window_bounds = array<i64: 1024, 512>}, {pipeline_mode = #tpu.pipeline_mode<synchronous>, transform_indices = @transform_6, window_bounds = array<i64: 1, 512>}, {pipeline_mode = #tpu.pipeline_mode<synchronous>, transform_indices = @transform_7, window_bounds = array<i64: 512, 256>}, {pipeline_mode = #tpu.pipeline_mode<synchronous>, transform_indices = @transform_8, window_bounds = array<i64: 1, 256>}, {pipeline_mode = #tpu.pipeline_mode<synchronous>, transform_indices = @transform_9, window_bounds = array<i64: 256, 128>}, {pipeline_mode = #tpu.pipeline_mode<synchronous>, transform_indices = @transform_10, window_bounds = array<i64: 1, 128>}, {transform_indices = @transform_11, window_bounds = array<i64: 8, 128>}]} {
    %c0_i32 = arith.constant 0 : i32
    %0 = arith.cmpi eq, %arg1, %c0_i32 : i32
    %1 = arith.extui %0 : i1 to i32
    %c0_i32_0 = arith.constant 0 : i32
    %2 = arith.cmpi ne, %1, %c0_i32_0 : i32
    scf.if %2 {
      %cst_16 = arith.constant 0.000000e+00 : f32
      %24 = vector.broadcast %cst_16 : f32 to vector<8x1024xf32>
      %c0_17 = arith.constant 0 : index
      %c0_18 = arith.constant 0 : index
      %25 = vector.load %arg14[%c0_17, %c0_18] : memref<8x1024xf32, #tpu.memory_space<vmem>>, vector<8x1024xf32>
      tpu.vector_store %arg14[%c0_17, %c0_18], %24 {strides = array<i32>} : memref<8x1024xf32, #tpu.memory_space<vmem>>, vector<8x1024xf32>,
    } else {
    }
    %c0 = arith.constant 0 : index
    %c0_1 = arith.constant 0 : index
    %3 = vector.load %arg2[%c0, %c0_1] : memref<8x1024xf32, #tpu.memory_space<vmem>>, vector<8x1024xf32>
    %4 = arith.truncf %3 : vector<8x1024xf32> to vector<8x1024xbf16>
    %c0_2 = arith.constant 0 : index
    %c0_3 = arith.constant 0 : index
    %5 = vector.load %arg3[%c0_2, %c0_3] : memref<1024x512xbf16, #tpu.memory_space<vmem>>, vector<1024x512xbf16>
    %cst = arith.constant dense<0.000000e+00> : vector<8x512xf32>
    %6 = tpu.matmul %4, %5, %cst {dimension_numbers = #tpu.dot_dimension_numbers<[1], [0], [0], [1], [0, 0, 1, 1], [], []>} : vector<8x1024xbf16>, vector<1024x512xbf16>, vector<8x512xf32> -> vector<8x512xf32>
    %c0_4 = arith.constant 0 : index
    %c0_5 = arith.constant 0 : index
    %7 = vector.load %arg4[%c0_4, %c0_5] : memref<1x512xf32, #tpu.memory_space<vmem>>, vector<1x512xf32>
    %8 = vector.broadcast %7 : vector<1x512xf32> to vector<8x512xf32>
    %9 = arith.addf %6, %8 : vector<8x512xf32>
    %cst_6 = arith.constant 0.000000e+00 : f32
    %10 = vector.broadcast %cst_6 : f32 to vector<8x512xf32>
    %11 = arith.cmpf ogt, %9, %10 : vector<8x512xf32>
    %cst_7 = arith.constant 2.000000e-01 : f32
    %12 = vector.broadcast %cst_7 : f32 to vector<8x512xf32>
    %13 = arith.mulf %12, %9 : vector<8x512xf32>
    %14 = arith.select %11, %9, %13 : vector<8x512xi1>, vector<8x512xf32>
    %c0_8 = arith.constant 0 : index
    %c0_9 = arith.constant 0 : index
    %15 = vector.load %arg14[%c0_8, %c0_9] : memref<8x1024xf32, #tpu.memory_space<vmem>>, vector<8x1024xf32>
    %16 = arith.truncf %14 : vector<8x512xf32> to vector<8x512xbf16>
    %c0_10 = arith.constant 0 : index
    %c0_11 = arith.constant 0 : index
    %17 = vector.load %arg5[%c0_10, %c0_11] : memref<512x1024xbf16, #tpu.memory_space<vmem>>, vector<512x1024xbf16>
    %cst_12 = arith.constant dense<0.000000e+00> : vector<8x1024xf32>
    %18 = tpu.matmul %16, %17, %cst_12 {dimension_numbers = #tpu.dot_dimension_numbers<[1], [0], [0], [1], [0, 0, 1, 1], [], []>} : vector<8x512xbf16>, vector<512x1024xbf16>, vector<8x1024xf32> -> vector<8x1024xf32>
    %19 = arith.addf %15, %18 : vector<8x1024xf32>
    %c0_13 = arith.constant 0 : index
    %c0_14 = arith.constant 0 : index
    %20 = vector.load %arg14[%c0_13, %c0_14] : memref<8x1024xf32, #tpu.memory_space<vmem>>, vector<8x1024xf32>
    tpu.vector_store %arg14[%c0_13, %c0_14], %19 {strides = array<i32>} : memref<8x1024xf32, #tpu.memory_space<vmem>>, vector<8x1024xf32>,
    %c3_i32 = arith.constant 3 : i32
    %21 = arith.cmpi eq, %arg1, %c3_i32 : i32
    %22 = arith.extui %21 : i1 to i32
    %c0_i32_15 = arith.constant 0 : i32
    %23 = arith.cmpi ne, %22, %c0_i32_15 : i32
    scf.if %23 {
      %c0_16 = arith.constant 0 : index
      %c0_17 = arith.constant 0 : index
      %24 = vector.load %arg14[%c0_16, %c0_17] : memref<8x1024xf32, #tpu.memory_space<vmem>>, vector<8x1024xf32>
      %c0_18 = arith.constant 0 : index
      %c0_19 = arith.constant 0 : index
      %25 = vector.load %arg6[%c0_18, %c0_19] : memref<1x1024xf32, #tpu.memory_space<vmem>>, vector<1x1024xf32>
      %26 = vector.broadcast %25 : vector<1x1024xf32> to vector<8x1024xf32>
      %27 = arith.addf %24, %26 : vector<8x1024xf32>
      %cst_20 = arith.constant 0.000000e+00 : f32
      %28 = vector.broadcast %cst_20 : f32 to vector<8x1024xf32>
      %29 = arith.cmpf ogt, %27, %28 : vector<8x1024xf32>
      %cst_21 = arith.constant 2.000000e-01 : f32
      %30 = vector.broadcast %cst_21 : f32 to vector<8x1024xf32>
      %31 = arith.mulf %30, %27 : vector<8x1024xf32>
      %32 = arith.select %29, %27, %31 : vector<8x1024xi1>, vector<8x1024xf32>
      %33 = arith.truncf %32 : vector<8x1024xf32> to vector<8x1024xbf16>
      %c0_22 = arith.constant 0 : index
      %c0_23 = arith.constant 0 : index
      %34 = vector.load %arg7[%c0_22, %c0_23] : memref<1024x512xbf16, #tpu.memory_space<vmem>>, vector<1024x512xbf16>
      %cst_24 = arith.constant dense<0.000000e+00> : vector<8x512xf32>
      %35 = tpu.matmul %33, %34, %cst_24 {dimension_numbers = #tpu.dot_dimension_numbers<[1], [0], [0], [1], [0, 0, 1, 1], [], []>} : vector<8x1024xbf16>, vector<1024x512xbf16>, vector<8x512xf32> -> vector<8x512xf32>
      %c0_25 = arith.constant 0 : index
      %c0_26 = arith.constant 0 : index
      %36 = vector.load %arg8[%c0_25, %c0_26] : memref<1x512xf32, #tpu.memory_space<vmem>>, vector<1x512xf32>
      %37 = vector.broadcast %36 : vector<1x512xf32> to vector<8x512xf32>
      %38 = arith.addf %35, %37 : vector<8x512xf32>
      %cst_27 = arith.constant 0.000000e+00 : f32
      %39 = vector.broadcast %cst_27 : f32 to vector<8x512xf32>
      %40 = arith.cmpf ogt, %38, %39 : vector<8x512xf32>
      %cst_28 = arith.constant 2.000000e-01 : f32
      %41 = vector.broadcast %cst_28 : f32 to vector<8x512xf32>
      %42 = arith.mulf %41, %38 : vector<8x512xf32>
      %43 = arith.select %40, %38, %42 : vector<8x512xi1>, vector<8x512xf32>
      %44 = arith.truncf %43 : vector<8x512xf32> to vector<8x512xbf16>
      %c0_29 = arith.constant 0 : index
      %c0_30 = arith.constant 0 : index
      %45 = vector.load %arg9[%c0_29, %c0_30] : memref<512x256xbf16, #tpu.memory_space<vmem>>, vector<512x256xbf16>
      %cst_31 = arith.constant dense<0.000000e+00> : vector<8x256xf32>
      %46 = tpu.matmul %44, %45, %cst_31 {dimension_numbers = #tpu.dot_dimension_numbers<[1], [0], [0], [1], [0, 0, 1, 1], [], []>} : vector<8x512xbf16>, vector<512x256xbf16>, vector<8x256xf32> -> vector<8x256xf32>
      %c0_32 = arith.constant 0 : index
      %c0_33 = arith.constant 0 : index
      %47 = vector.load %arg10[%c0_32, %c0_33] : memref<1x256xf32, #tpu.memory_space<vmem>>, vector<1x256xf32>
      %48 = vector.broadcast %47 : vector<1x256xf32> to vector<8x256xf32>
      %49 = arith.addf %46, %48 : vector<8x256xf32>
      %cst_34 = arith.constant 0.000000e+00 : f32
      %50 = vector.broadcast %cst_34 : f32 to vector<8x256xf32>
      %51 = arith.cmpf ogt, %49, %50 : vector<8x256xf32>
      %cst_35 = arith.constant 2.000000e-01 : f32
      %52 = vector.broadcast %cst_35 : f32 to vector<8x256xf32>
      %53 = arith.mulf %52, %49 : vector<8x256xf32>
      %54 = arith.select %51, %49, %53 : vector<8x256xi1>, vector<8x256xf32>
      %55 = arith.truncf %54 : vector<8x256xf32> to vector<8x256xbf16>
      %c0_36 = arith.constant 0 : index
      %c0_37 = arith.constant 0 : index
      %56 = vector.load %arg11[%c0_36, %c0_37] : memref<256x128xbf16, #tpu.memory_space<vmem>>, vector<256x128xbf16>
      %cst_38 = arith.constant dense<0.000000e+00> : vector<8x128xf32>
      %57 = tpu.matmul %55, %56, %cst_38 {dimension_numbers = #tpu.dot_dimension_numbers<[1], [0], [0], [1], [0, 0, 1, 1], [], []>} : vector<8x256xbf16>, vector<256x128xbf16>, vector<8x128xf32> -> vector<8x128xf32>
      %c0_39 = arith.constant 0 : index
      %c0_40 = arith.constant 0 : index
      %58 = vector.load %arg12[%c0_39, %c0_40] : memref<1x128xf32, #tpu.memory_space<vmem>>, vector<1x128xf32>
      %59 = vector.broadcast %58 : vector<1x128xf32> to vector<8x128xf32>
      %60 = arith.addf %57, %59 : vector<8x128xf32>
      %61 = math.absf %60 : vector<8x128xf32>
      %cst_41 = arith.constant 0.000000e+00 : f32
      %62 = vector.broadcast %cst_41 : f32 to vector<8x128xf32>
      %63 = arith.subf %62, %61 : vector<8x128xf32>
      %64 = math.exp %63 : vector<8x128xf32>
      %cst_42 = arith.constant 1.000000e+00 : f32
      %65 = vector.broadcast %cst_42 : f32 to vector<8x128xf32>
      %66 = arith.addf %65, %64 : vector<8x128xf32>
      %cst_43 = arith.constant 1.000000e+00 : f32
      %67 = vector.broadcast %cst_43 : f32 to vector<8x128xf32>
      %68 = arith.divf %67, %66 : vector<8x128xf32>
      %cst_44 = arith.constant 0.000000e+00 : f32
      %69 = vector.broadcast %cst_44 : f32 to vector<8x128xf32>
      %70 = arith.cmpf oge, %60, %69 : vector<8x128xf32>
      %cst_45 = arith.constant 1.000000e+00 : f32
      %71 = vector.broadcast %cst_45 : f32 to vector<8x128xf32>
      %72 = arith.subf %71, %68 : vector<8x128xf32>
      %73 = arith.select %70, %68, %72 : vector<8x128xi1>, vector<8x128xf32>
      %c0_46 = arith.constant 0 : index
      %c0_47 = arith.constant 0 : index
      %74 = vector.load %arg13[%c0_46, %c0_47] : memref<8x128xf32, #tpu.memory_space<vmem>>, vector<8x128xf32>
      tpu.vector_store %arg13[%c0_46, %c0_47], %73 {strides = array<i32>} : memref<8x128xf32, #tpu.memory_space<vmem>>, vector<8x128xf32>,
    } else {
    }
    return
  }
  func.func @transform_0(%arg0: i32, %arg1: i32) -> (i32, i32) {
    %c0_i32 = arith.constant 0 : i32
    %c0_i32_0 = arith.constant 0 : i32
    return %arg0, %c0_i32 : i32, i32
  }
  func.func @transform_1(%arg0: i32, %arg1: i32) -> (i32, i32) {
    %c0_i32 = arith.constant 0 : i32
    %c0_i32_0 = arith.constant 0 : i32
    return %c0_i32, %arg1 : i32, i32
  }
  func.func @transform_2(%arg0: i32, %arg1: i32) -> (i32, i32) {
    %c0_i32 = arith.constant 0 : i32
    %c0_i32_0 = arith.constant 0 : i32
    return %c0_i32, %arg1 : i32, i32
  }
  func.func @transform_3(%arg0: i32, %arg1: i32) -> (i32, i32) {
    %c0_i32 = arith.constant 0 : i32
    %c0_i32_0 = arith.constant 0 : i32
    return %arg1, %c0_i32 : i32, i32
  }
  func.func @transform_4(%arg0: i32, %arg1: i32) -> (i32, i32) {
    %c0_i32 = arith.constant 0 : i32
    %c0_i32_0 = arith.constant 0 : i32
    %c0_i32_1 = arith.constant 0 : i32
    return %c0_i32, %c0_i32_0 : i32, i32
  }
  func.func @transform_5(%arg0: i32, %arg1: i32) -> (i32, i32) {
    %c0_i32 = arith.constant 0 : i32
    %c0_i32_0 = arith.constant 0 : i32
    %c0_i32_1 = arith.constant 0 : i32
    return %c0_i32, %c0_i32_0 : i32, i32
  }
  func.func @transform_6(%arg0: i32, %arg1: i32) -> (i32, i32) {
    %c0_i32 = arith.constant 0 : i32
    %c0_i32_0 = arith.constant 0 : i32
    %c0_i32_1 = arith.constant 0 : i32
    return %c0_i32, %c0_i32_0 : i32, i32
  }
  func.func @transform_7(%arg0: i32, %arg1: i32) -> (i32, i32) {
    %c0_i32 = arith.constant 0 : i32
    %c0_i32_0 = arith.constant 0 : i32
    %c0_i32_1 = arith.constant 0 : i32
    return %c0_i32, %c0_i32_0 : i32, i32
  }
  func.func @transform_8(%arg0: i32, %arg1: i32) -> (i32, i32) {
    %c0_i32 = arith.constant 0 : i32
    %c0_i32_0 = arith.constant 0 : i32
    %c0_i32_1 = arith.constant 0 : i32
    return %c0_i32, %c0_i32_0 : i32, i32
  }
  func.func @transform_9(%arg0: i32, %arg1: i32) -> (i32, i32) {
    %c0_i32 = arith.constant 0 : i32
    %c0_i32_0 = arith.constant 0 : i32
    %c0_i32_1 = arith.constant 0 : i32
    return %c0_i32, %c0_i32_0 : i32, i32
  }
  func.func @transform_10(%arg0: i32, %arg1: i32) -> (i32, i32) {
    %c0_i32 = arith.constant 0 : i32
    %c0_i32_0 = arith.constant 0 : i32
    %c0_i32_1 = arith.constant 0 : i32
    return %c0_i32, %c0_i32_0 : i32, i32
  }
  func.func @transform_11(%arg0: i32, %arg1: i32) -> (i32, i32) {
    %c0_i32 = arith.constant 0 : i32
    %c0_i32_0 = arith.constant 0 : i32
    return %arg0, %c0_i32 : i32, i32
  }
}

</mosaic_0001>

<llo_original>
// kernel: tpu_custom_call.1
$region0: #{tpu_custom_call.1}
  #allocation0 [shape = 'u32[]', space=smem, size = 0x4, offset = 0x4, fixed_abs, tag = 'smem constant byte address 0x4 - core index']
  #allocation1 [shape = 'u32[144,128]{1,0:T(1,128)}', space=vmem, size = 0x12000, scoped, tag = 'internal scratch']
  #allocation2 [shape = 'f32[8,1024]{1,0:T(8,128)}', space=vmem, size = 0x8000, scoped, tag = 'scratch operand']
  %s0 = inlined_call_operand.hbm [shape: f32[8,1024], index: 0, kind: input, shape index: {}]
  %s1 = inlined_call_operand.hbm [shape: bf16[1024,2048], index: 1, kind: input, shape index: {}]
  %s2 = inlined_call_operand.hbm [shape: f32[1,2048], index: 2, kind: input, shape index: {}]
  %s3 = inlined_call_operand.hbm [shape: bf16[2048,1024], index: 3, kind: input, shape index: {}]
  %s4 = inlined_call_operand.hbm [shape: f32[1,1024], index: 4, kind: input, shape index: {}]
  %s5 = inlined_call_operand.hbm [shape: bf16[1024,512], index: 5, kind: input, shape index: {}]
  %s6 = inlined_call_operand.hbm [shape: f32[1,512], index: 6, kind: input, shape index: {}]
  %s7 = inlined_call_operand.hbm [shape: bf16[512,256], index: 7, kind: input, shape index: {}]
  %s8 = inlined_call_operand.hbm [shape: f32[1,256], index: 8, kind: input, shape index: {}]
  %s9 = inlined_call_operand.hbm [shape: bf16[256,128], index: 9, kind: input, shape index: {}]
  %s10 = inlined_call_operand.hbm [shape: f32[1,128], index: 10, kind: input, shape index: {}]
  %s11 = inlined_call_operand.hbm [shape: f32[8,128], index: 11, kind: output, shape index: {}]
  %s12 = sld [smem:[#allocation0]]
  $region129: #{tpu_custom_call.1} parent=0
    _
  %s14 = ssub.s32 1, %s12
  %s15 = scalar_select 0, %s14, %s12
  $region1: #{tpu_custom_call.1} parent=0
    #allocation3 [shape = 'u8[32768]{0}', space=vmem, size = 0x8000, scoped, tag = 'input window, operand 0, single buffered']
    #allocation4 [shape = 's32[2]{0}', space=sflag, size = 0x8, scoped, tag = 'scoped memory for tpu_custom_call.1']
    #allocation5 [shape = 's32[2]{0}', space=sflag, size = 0x8, scoped, tag = 'scoped memory for tpu_custom_call.1']
    #allocation6 [shape = 'u8[2097152]{0}', space=vmem, size = 0x200000, scoped, tag = 'input window, operand 1']
    #allocation7 [shape = 's32[2]{0}', space=sflag, size = 0x8, scoped, tag = 'scoped memory for tpu_custom_call.1']
    #allocation8 [shape = 'u8[4096]{0}', space=vmem, size = 0x1000, scoped, tag = 'input window, operand 2']
    #allocation9 [shape = 'u8[2097152]{0}', space=vmem, size = 0x200000, scoped, tag = 'input window, operand 3']
    #allocation10 [shape = 's32[2]{0}', space=sflag, size = 0x8, scoped, tag = 'scoped memory for tpu_custom_call.1']
    #allocation11 [shape = 'u8[4096]{0}', space=vmem, size = 0x1000, scoped, tag = 'input window, operand 4, single buffered']
    #allocation12 [shape = 'u8[1048576]{0}', space=vmem, size = 0x100000, scoped, tag = 'input window, operand 5, single buffered']
    #allocation13 [shape = 's32[1]{0}', space=sflag, size = 0x4, scoped, tag = 'scoped memory for tpu_custom_call.1']
    #allocation14 [shape = 'u8[2048]{0}', space=vmem, size = 0x800, scoped, tag = 'input window, operand 6, single buffered']
    #allocation15 [shape = 'u8[262144]{0}', space=vmem, size = 0x40000, scoped, tag = 'input window, operand 7, single buffered']
    #allocation16 [shape = 's32[1]{0}', space=sflag, size = 0x4, scoped, tag = 'scoped memory for tpu_custom_call.1']
    #allocation17 [shape = 'u8[1024]{0}', space=vmem, size = 0x400, scoped, tag = 'input window, operand 8, single buffered']
    #allocation18 [shape = 'u8[65536]{0}', space=vmem, size = 0x10000, scoped, tag = 'input window, operand 9, single buffered']
    #allocation19 [shape = 's32[1]{0}', space=sflag, size = 0x4, scoped, tag = 'scoped memory for tpu_custom_call.1']
    #allocation20 [shape = 'u8[512]{0}', space=vmem, size = 0x400, scoped, tag = 'input window, operand 10, single buffered']
    #allocation21 [shape = 'u8[4096]{0}', space=vmem, size = 0x1000, scoped, tag = 'output window, operand 0, single buffered']
    %16 = vsyncpa [#allocation4], 0
    %17 = vsyncpa [#allocation7], 0
    %s18 = scalar_lea.sflag [#allocation7], 1
    %19 = vsyncpa %s18, 0
    %20 = vsyncpa [#allocation10], 0
    %s21 = scalar_lea.sflag [#allocation10], 1
    %22 = vsyncpa %s21, 0
    %23 = vsyncpa [#allocation13], 0
    %24 = vsyncpa [#allocation16], 0
    %25 = vsyncpa [#allocation19], 0
    %26 = vsyncpa [#allocation5], 0
    loop: start=0, step=1, limit=6
    $region2: #{tpu_custom_call.1} parent=1 // loop_pre_header
      _
    $region3: #{tpu_custom_call.1} parent=1 // loop_header
      %s28 = sphi 0, %s32
      %p29 = scmp.ge.s32.totalorder %s28, 6
      %s35 = sphi 0, %s47
      %s36 = sphi 0, %s43
      %s37 = sphi 0, %s35
      %s38 = sphi 0, %s36
      %s39 = sphi 0, %s37
      %s40 = sphi 0, %s38
      %s50 = sphi 0, %s52
      %s53 = sphi 0, %s50
      %s54 = sphi 0, %s53
      %s70 = sphi 0, %s54
      %s76 = sphi 0, %s78
      %s79 = sphi 0, %s76
      %s80 = sphi 0, %s79
      %s96 = sphi 0, %s80
      %s102 = sphi 0, %s104
      %s105 = sphi 0, %s102
      %s106 = sphi 0, %s105
      %s122 = sphi 0, %s106
      %s128 = sphi 0, %s130
      %s131 = sphi 0, %s128
      %s132 = sphi 0, %s131
      %s148 = sphi 0, %s132
      %s152 = sphi 0, %s152
      %s154 = sphi 0, %s152
      %s155 = sphi 0, %s154
      %s169 = sphi 0, %s155
      %s173 = sphi 0, %s173
      %s175 = sphi 0, %s173
      %s176 = sphi 0, %s175
      %s190 = sphi 0, %s176
      %s194 = sphi 0, %s194
      %s196 = sphi 0, %s194
      %s197 = sphi 0, %s196
      %s211 = sphi 0, %s197
      %s215 = sphi 0, %s215
      %s217 = sphi 0, %s215
      %s218 = sphi 0, %s217
      %s232 = sphi 0, %s218
      %s236 = sphi 0, %s236
      %s238 = sphi 0, %s236
      %s239 = sphi 0, %s238
      %s253 = sphi 0, %s239
      %s257 = sphi 0, %s257
      %s259 = sphi 0, %s257
      %s260 = sphi 0, %s259
      %s274 = sphi 0, %s260
      %s278 = sphi 0, %s278
      %s280 = sphi 0, %s278
      %s281 = sphi 0, %s280
      %s295 = sphi 0, %s281
      %s301 = sphi 0, %s303
      %s304 = sphi 0, %s301
      %s305 = sphi 0, %s304
      %s321 = sphi 0, %s305
    $region4: #{tpu_custom_call.1} parent=1 // loop_header_branch
      %31 = sbr.rel (%p29) target = $region8
    $region5: #{tpu_custom_call.1} parent=1 // loop_body
      %s33 = ssub.s32 %s28, 1
      %s34 = ssub.s32 %s28, 2
      %s41 = sadd.s32 1, %s36
      %p42 = scmp.ge.s32.totalorder %s41, 4
      %s43 = scalar_select %p42, 0, %s41
      %s44 = sadd.s32 1, %s35
      %s45 = scalar_select %p42, %s44, %s35
      %p46 = scmp.ge.s32.totalorder %s45, 1
      %s47 = scalar_select %p46, 0, %s45
      %s48 = ssub.s32 %s35, %s47
      %p49 = scmp.eq.s32.totalorder %s48, 0
      %s51 = sadd.s32 %s50, 1
      %s52 = scalar_select %p49, %s50, %s51
      %p55 = pneg %p49
      %p56 = scmp.eq.s32.totalorder %s28, 3
      %p57 = por %p55, %p56
      %p58 = scmp.ne.s32.totalorder %s50, %s53
      %p59 = scmp.eq.s32.totalorder %s28, 0
      %p60 = por %p58, %p59
      %p61 = scmp.ne.s32.totalorder %s50, %s53
      %p62 = scmp.eq.s32.totalorder %s33, 3
      %p63 = por %p61, %p62
      %p64 = scmp.ne.s32.totalorder %s53, %s54
      %p65 = scmp.eq.s32.totalorder %s33, 0
      %p66 = por %p64, %p65
      %p67 = scmp.ne.s32.totalorder %s53, %s54
      %p68 = scmp.eq.s32.totalorder %s34, 3
      %p69 = por %p67, %p68
      %p71 = scmp.ne.s32.totalorder %s54, %s70
      %p72 = scmp.eq.s32.totalorder %s34, 0
      %p73 = por %p71, %p72
      %s74 = ssub.s32 %s36, %s43
      %p75 = scmp.eq.s32.totalorder %s74, 0
      %s77 = sadd.s32 %s76, 1
      %s78 = scalar_select %p75, %s76, %s77
      %p81 = pneg %p75
      %p82 = scmp.eq.s32.totalorder %s28, 3
      %p83 = por %p81, %p82
      %p84 = scmp.ne.s32.totalorder %s76, %s79
      %p85 = scmp.eq.s32.totalorder %s28, 0
      %p86 = por %p84, %p85
      %p87 = scmp.ne.s32.totalorder %s76, %s79
      %p88 = scmp.eq.s32.totalorder %s33, 3
      %p89 = por %p87, %p88
      %p90 = scmp.ne.s32.totalorder %s79, %s80
      %p91 = scmp.eq.s32.totalorder %s33, 0
      %p92 = por %p90, %p91
      %p93 = scmp.ne.s32.totalorder %s79, %s80
      %p94 = scmp.eq.s32.totalorder %s34, 3
      %p95 = por %p93, %p94
      %p97 = scmp.ne.s32.totalorder %s80, %s96
      %p98 = scmp.eq.s32.totalorder %s34, 0
      %p99 = por %p97, %p98
      %s100 = ssub.s32 %s36, %s43
      %p101 = scmp.eq.s32.totalorder %s100, 0
      %s103 = sadd.s32 %s102, 1
      %s104 = scalar_select %p101, %s102, %s103
      %p107 = pneg %p101
      %p108 = scmp.eq.s32.totalorder %s28, 3
      %p109 = por %p107, %p108
      %p110 = scmp.ne.s32.totalorder %s102, %s105
      %p111 = scmp.eq.s32.totalorder %s28, 0
      %p112 = por %p110, %p111
      %p113 = scmp.ne.s32.totalorder %s102, %s105
      %p114 = scmp.eq.s32.totalorder %s33, 3
      %p115 = por %p113, %p114
      %p116 = scmp.ne.s32.totalorder %s105, %s106
      %p117 = scmp.eq.s32.totalorder %s33, 0
      %p118 = por %p116, %p117
      %p119 = scmp.ne.s32.totalorder %s105, %s106
      %p120 = scmp.eq.s32.totalorder %s34, 3
      %p121 = por %p119, %p120
      %p123 = scmp.ne.s32.totalorder %s106, %s122
      %p124 = scmp.eq.s32.totalorder %s34, 0
      %p125 = por %p123, %p124
      %s126 = ssub.s32 %s36, %s43
      %p127 = scmp.eq.s32.totalorder %s126, 0
      %s129 = sadd.s32 %s128, 1
      %s130 = scalar_select %p127, %s128, %s129
      %p133 = pneg %p127
      %p134 = scmp.eq.s32.totalorder %s28, 3
      %p135 = por %p133, %p134
      %p136 = scmp.ne.s32.totalorder %s128, %s131
      %p137 = scmp.eq.s32.totalorder %s28, 0
      %p138 = por %p136, %p137
      %p139 = scmp.ne.s32.totalorder %s128, %s131
      %p140 = scmp.eq.s32.totalorder %s33, 3
      %p141 = por %p139, %p140
      %p142 = scmp.ne.s32.totalorder %s131, %s132
      %p143 = scmp.eq.s32.totalorder %s33, 0
      %p144 = por %p142, %p143
      %p145 = scmp.ne.s32.totalorder %s131, %s132
      %p146 = scmp.eq.s32.totalorder %s34, 3
      %p147 = por %p145, %p146
      %p149 = scmp.ne.s32.totalorder %s132, %s148
      %p150 = scmp.eq.s32.totalorder %s34, 0
      %p151 = por %p149, %p150
      %s153 = sadd.s32 %s152, 1
      %p156 = scmp.eq.s32.totalorder %s28, 3
      %p157 = scmp.ne.s32.totalorder %s152, %s154
      %p158 = scmp.eq.s32.totalorder %s28, 0
      %p159 = por %p157, %p158
      %p160 = scmp.ne.s32.totalorder %s152, %s154
      %p161 = scmp.eq.s32.totalorder %s33, 3
      %p162 = por %p160, %p161
      %p163 = scmp.ne.s32.totalorder %s154, %s155
      %p164 = scmp.eq.s32.totalorder %s33, 0
      %p165 = por %p163, %p164
      %p166 = scmp.ne.s32.totalorder %s154, %s155
      %p167 = scmp.eq.s32.totalorder %s34, 3
      %p168 = por %p166, %p167
      %p170 = scmp.ne.s32.totalorder %s155, %s169
      %p171 = scmp.eq.s32.totalorder %s34, 0
      %p172 = por %p170, %p171
      %s174 = sadd.s32 %s173, 1
      %p177 = scmp.eq.s32.totalorder %s28, 3
      %p178 = scmp.ne.s32.totalorder %s173, %s175
      %p179 = scmp.eq.s32.totalorder %s28, 0
      %p180 = por %p178, %p179
      %p181 = scmp.ne.s32.totalorder %s173, %s175
      %p182 = scmp.eq.s32.totalorder %s33, 3
      %p183 = por %p181, %p182
      %p184 = scmp.ne.s32.totalorder %s175, %s176
      %p185 = scmp.eq.s32.totalorder %s33, 0
      %p186 = por %p184, %p185
      %p187 = scmp.ne.s32.totalorder %s175, %s176
      %p188 = scmp.eq.s32.totalorder %s34, 3
      %p189 = por %p187, %p188
      %p191 = scmp.ne.s32.totalorder %s176, %s190
      %p192 = scmp.eq.s32.totalorder %s34, 0
      %p193 = por %p191, %p192
      %s195 = sadd.s32 %s194, 1
      %p198 = scmp.eq.s32.totalorder %s28, 3
      %p199 = scmp.ne.s32.totalorder %s194, %s196
      %p200 = scmp.eq.s32.totalorder %s28, 0
      %p201 = por %p199, %p200
      %p202 = scmp.ne.s32.totalorder %s194, %s196
      %p203 = scmp.eq.s32.totalorder %s33, 3
      %p204 = por %p202, %p203
      %p205 = scmp.ne.s32.totalorder %s196, %s197
      %p206 = scmp.eq.s32.totalorder %s33, 0
      %p207 = por %p205, %p206
      %p208 = scmp.ne.s32.totalorder %s196, %s197
      %p209 = scmp.eq.s32.totalorder %s34, 3
      %p210 = por %p208, %p209
      %p212 = scmp.ne.s32.totalorder %s197, %s211
      %p213 = scmp.eq.s32.totalorder %s34, 0
      %p214 = por %p212, %p213
      %s216 = sadd.s32 %s215, 1
      %p219 = scmp.eq.s32.totalorder %s28, 3
      %p220 = scmp.ne.s32.totalorder %s215, %s217
      %p221 = scmp.eq.s32.totalorder %s28, 0
      %p222 = por %p220, %p221
      %p223 = scmp.ne.s32.totalorder %s215, %s217
      %p224 = scmp.eq.s32.totalorder %s33, 3
      %p225 = por %p223, %p224
      %p226 = scmp.ne.s32.totalorder %s217, %s218
      %p227 = scmp.eq.s32.totalorder %s33, 0
      %p228 = por %p226, %p227
      %p229 = scmp.ne.s32.totalorder %s217, %s218
      %p230 = scmp.eq.s32.totalorder %s34, 3
      %p231 = por %p229, %p230
      %p233 = scmp.ne.s32.totalorder %s218, %s232
      %p234 = scmp.eq.s32.totalorder %s34, 0
      %p235 = por %p233, %p234
      %s237 = sadd.s32 %s236, 1
      %p240 = scmp.eq.s32.totalorder %s28, 3
      %p241 = scmp.ne.s32.totalorder %s236, %s238
      %p242 = scmp.eq.s32.totalorder %s28, 0
      %p243 = por %p241, %p242
      %p244 = scmp.ne.s32.totalorder %s236, %s238
      %p245 = scmp.eq.s32.totalorder %s33, 3
      %p246 = por %p244, %p245
      %p247 = scmp.ne.s32.totalorder %s238, %s239
      %p248 = scmp.eq.s32.totalorder %s33, 0
      %p249 = por %p247, %p248
      %p250 = scmp.ne.s32.totalorder %s238, %s239
      %p251 = scmp.eq.s32.totalorder %s34, 3
      %p252 = por %p250, %p251
      %p254 = scmp.ne.s32.totalorder %s239, %s253
      %p255 = scmp.eq.s32.totalorder %s34, 0
      %p256 = por %p254, %p255
      %s258 = sadd.s32 %s257, 1
      %p261 = scmp.eq.s32.totalorder %s28, 3
      %p262 = scmp.ne.s32.totalorder %s257, %s259
      %p263 = scmp.eq.s32.totalorder %s28, 0
      %p264 = por %p262, %p263
      %p265 = scmp.ne.s32.totalorder %s257, %s259
      %p266 = scmp.eq.s32.totalorder %s33, 3
      %p267 = por %p265, %p266
      %p268 = scmp.ne.s32.totalorder %s259, %s260
      %p269 = scmp.eq.s32.totalorder %s33, 0
      %p270 = por %p268, %p269
      %p271 = scmp.ne.s32.totalorder %s259, %s260
      %p272 = scmp.eq.s32.totalorder %s34, 3
      %p273 = por %p271, %p272
      %p275 = scmp.ne.s32.totalorder %s260, %s274
      %p276 = scmp.eq.s32.totalorder %s34, 0
      %p277 = por %p275, %p276
      %s279 = sadd.s32 %s278, 1
      %p282 = scmp.eq.s32.totalorder %s28, 3
      %p283 = scmp.ne.s32.totalorder %s278, %s280
      %p284 = scmp.eq.s32.totalorder %s28, 0
      %p285 = por %p283, %p284
      %p286 = scmp.ne.s32.totalorder %s278, %s280
      %p287 = scmp.eq.s32.totalorder %s33, 3
      %p288 = por %p286, %p287
      %p289 = scmp.ne.s32.totalorder %s280, %s281
      %p290 = scmp.eq.s32.totalorder %s33, 0
      %p291 = por %p289, %p290
      %p292 = scmp.ne.s32.totalorder %s280, %s281
      %p293 = scmp.eq.s32.totalorder %s34, 3
      %p294 = por %p292, %p293
      %p296 = scmp.ne.s32.totalorder %s281, %s295
      %p297 = scmp.eq.s32.totalorder %s34, 0
      %p298 = por %p296, %p297
      %s299 = ssub.s32 %s35, %s47
      %p300 = scmp.eq.s32.totalorder %s299, 0
      %s302 = sadd.s32 %s301, 1
      %s303 = scalar_select %p300, %s301, %s302
      %p306 = pneg %p300
      %p307 = scmp.eq.s32.totalorder %s28, 3
      %p308 = por %p306, %p307
      %p309 = scmp.ne.s32.totalorder %s301, %s304
      %p310 = scmp.eq.s32.totalorder %s28, 0
      %p311 = por %p309, %p310
      %p312 = scmp.ne.s32.totalorder %s301, %s304
      %p313 = scmp.eq.s32.totalorder %s33, 3
      %p314 = por %p312, %p313
      %p315 = scmp.ne.s32.totalorder %s304, %s305
      %p316 = scmp.eq.s32.totalorder %s33, 0
      %p317 = por %p315, %p316
      %p318 = scmp.ne.s32.totalorder %s304, %s305
      %p319 = scmp.eq.s32.totalorder %s34, 3
      %p320 = por %p318, %p319
      %p322 = scmp.ne.s32.totalorder %s305, %s321
      %p323 = scmp.eq.s32.totalorder %s34, 0
      %p324 = por %p322, %p323
      %p325 = scmp.le.s32.totalorder 1, %s28
      %p326 = scmp.lt.s32.totalorder %s28, 5
      %p327 = pnand %p325, %p326
      %p328 = pneg %p327
      // Predicated region
      $region9: #{tpu_custom_call.1} parent=5 // pred_check
        _
      $region10: #{tpu_custom_call.1} parent=5 // pred_check_branch
        %330 = sbr.rel (%p327) target = $region12
      $region11: #{tpu_custom_call.1} parent=5 // pred_region
        %s331 = ssub.s32 %s28, 1
        // Predicated region
        $region13: #{tpu_custom_call.1} parent=11 // pred_check
          %p332 = pneg %p66
        $region14: #{tpu_custom_call.1} parent=11 // pred_check_branch
          %334 = sbr.rel (%p332) target = $region16
        $region15: #{tpu_custom_call.1} parent=11 // pred_region
          %s336 = ssub.s32 1024, 1024
          %337 = vsyncadd [#allocation4], %s336
          %s338 = smul.addr %s37, 8
          %s339 = smul.addr %s338, 128
          %s340 = scalar_lea.hbm %s0, %s339
          %s342 = sshll.u32 [#allocation3], 4
          %s343 = int_to_ptr.vmem [resolvable:$true] %s342
          %345 = dma.hbm_to_vmem [thread:$0]  %s340, 1024, %s343, [#allocation4]
        $region16: #{tpu_custom_call.1} parent=11 // pred_fallthru
          _
        // Predicated region
        $region17: #{tpu_custom_call.1} parent=11 // pred_check
          %p346 = pneg %p165
        $region18: #{tpu_custom_call.1} parent=11 // pred_check_branch
          %348 = sbr.rel (%p346) target = $region20
        $region19: #{tpu_custom_call.1} parent=11 // pred_region
          %s350 = ssub.s32 128, 128
          %351 = vsyncadd [#allocation10], %s350
          %s353 = sshll.u32 [#allocation11], 4
          %s354 = int_to_ptr.vmem [resolvable:$true] %s353
          %356 = dma.hbm_to_vmem [thread:$0]  %s4, 128, %s354, [#allocation10]
        $region20: #{tpu_custom_call.1} parent=11 // pred_fallthru
          _
        // Predicated region
        $region21: #{tpu_custom_call.1} parent=11 // pred_check
          %p357 = pneg %p186
        $region22: #{tpu_custom_call.1} parent=11 // pred_check_branch
          %359 = sbr.rel (%p357) target = $region24
        $region23: #{tpu_custom_call.1} parent=11 // pred_region
          %s361 = ssub.s32 32768, 32768
          %362 = vsyncadd [#allocation13], %s361
          %s363 = sshll.u32 [#allocation12], 4
          %s364 = int_to_ptr.vmem [resolvable:$true] %s363
          %369 = dma.hbm_to_vmem [thread:$0]  %s5, 32768, %s364, [#allocation13], 256, 256, 16
        $region24: #{tpu_custom_call.1} parent=11 // pred_fallthru
          _
        // Predicated region
        $region25: #{tpu_custom_call.1} parent=11 // pred_check
          %p370 = pneg %p207
        $region26: #{tpu_custom_call.1} parent=11 // pred_check_branch
          %372 = sbr.rel (%p370) target = $region28
        $region27: #{tpu_custom_call.1} parent=11 // pred_region
          %s374 = ssub.s32 64, 64
          %375 = vsyncadd [#allocation13], %s374
          %s377 = sshll.u32 [#allocation14], 4
          %s378 = int_to_ptr.vmem [resolvable:$true] %s377
          %380 = dma.hbm_to_vmem [thread:$0]  %s6, 64, %s378, [#allocation13]
        $region28: #{tpu_custom_call.1} parent=11 // pred_fallthru
          _
        // Predicated region
        $region29: #{tpu_custom_call.1} parent=11 // pred_check
          %p381 = pneg %p228
        $region30: #{tpu_custom_call.1} parent=11 // pred_check_branch
          %383 = sbr.rel (%p381) target = $region32
        $region31: #{tpu_custom_call.1} parent=11 // pred_region
          %s385 = ssub.s32 8192, 8192
          %386 = vsyncadd [#allocation16], %s385
          %s387 = sshll.u32 [#allocation15], 4
          %s388 = int_to_ptr.vmem [resolvable:$true] %s387
          %393 = dma.hbm_to_vmem [thread:$0]  %s7, 8192, %s388, [#allocation16], 128, 128, 8
        $region32: #{tpu_custom_call.1} parent=11 // pred_fallthru
          _
        // Predicated region
        $region33: #{tpu_custom_call.1} parent=11 // pred_check
          %p394 = pneg %p249
        $region34: #{tpu_custom_call.1} parent=11 // pred_check_branch
          %396 = sbr.rel (%p394) target = $region36
        $region35: #{tpu_custom_call.1} parent=11 // pred_region
          %s398 = ssub.s32 32, 32
          %399 = vsyncadd [#allocation16], %s398
          %s401 = sshll.u32 [#allocation17], 4
          %s402 = int_to_ptr.vmem [resolvable:$true] %s401
          %404 = dma.hbm_to_vmem [thread:$0]  %s8, 32, %s402, [#allocation16]
        $region36: #{tpu_custom_call.1} parent=11 // pred_fallthru
          _
        // Predicated region
        $region37: #{tpu_custom_call.1} parent=11 // pred_check
          %p405 = pneg %p270
        $region38: #{tpu_custom_call.1} parent=11 // pred_check_branch
          %407 = sbr.rel (%p405) target = $region40
        $region39: #{tpu_custom_call.1} parent=11 // pred_region
          %s409 = ssub.s32 2048, 2048
          %410 = vsyncadd [#allocation19], %s409
          %s411 = sshll.u32 [#allocation18], 4
          %s412 = int_to_ptr.vmem [resolvable:$true] %s411
          %417 = dma.hbm_to_vmem [thread:$0]  %s9, 2048, %s412, [#allocation19], 64, 64, 4
        $region40: #{tpu_custom_call.1} parent=11 // pred_fallthru
          _
        // Predicated region
        $region41: #{tpu_custom_call.1} parent=11 // pred_check
          %p418 = pneg %p291
        $region42: #{tpu_custom_call.1} parent=11 // pred_check_branch
          %420 = sbr.rel (%p418) target = $region44
        $region43: #{tpu_custom_call.1} parent=11 // pred_region
          %s422 = ssub.s32 16, 16
          %423 = vsyncadd [#allocation19], %s422
          %s425 = sshll.u32 [#allocation20], 4
          %s426 = int_to_ptr.vmem [resolvable:$true] %s425
          %428 = dma.hbm_to_vmem [thread:$0]  %s10, 16, %s426, [#allocation19]
        $region44: #{tpu_custom_call.1} parent=11 // pred_fallthru
          _
      $region12: #{tpu_custom_call.1} parent=5 // pred_fallthru
        _
      %p429 = scmp.lt.s32.totalorder %s28, 4
      // Predicated region
      $region45: #{tpu_custom_call.1} parent=5 // pred_check
        %p430 = pneg %p429
      $region46: #{tpu_custom_call.1} parent=5 // pred_check_branch
        %432 = sbr.rel (%p430) target = $region48
      $region47: #{tpu_custom_call.1} parent=5 // pred_region
        // Predicated region
        $region49: #{tpu_custom_call.1} parent=47 // pred_check
          %p433 = pneg %p86
        $region50: #{tpu_custom_call.1} parent=47 // pred_check_branch
          %435 = sbr.rel (%p433) target = $region52
        $region51: #{tpu_custom_call.1} parent=47 // pred_region
          %s436 = sand.u32 %s28, 1
          %s437 = scalar_lea.sflag [#allocation7], %s436
          %s438 = sand.u32 %s76, 1
          %s439 = smul.addr %s438, 2048
          %s440 = scalar_lea.vmem [#allocation6], %s439
          %s441 = smul.u32 4, %s36
          %s443 = ssub.s32 32768, 32768
          %444 = vsyncadd %s437, %s443
          %s445 = smul.addr %s441, 64
          %s446 = scalar_lea.hbm %s1, %s445
          %s447 = sshll.u32 %s440, 4
          %s448 = int_to_ptr.vmem [resolvable:$true] %s447
          %453 = dma.hbm_to_vmem [thread:$0]  %s446, 32768, %s448, %s437, 1024, 256, 16
        $region52: #{tpu_custom_call.1} parent=47 // pred_fallthru
          _
        // Predicated region
        $region53: #{tpu_custom_call.1} parent=47 // pred_check
          %p454 = pneg %p112
        $region54: #{tpu_custom_call.1} parent=47 // pred_check_branch
          %456 = sbr.rel (%p454) target = $region56
        $region55: #{tpu_custom_call.1} parent=47 // pred_region
          %s457 = sand.u32 %s28, 1
          %s458 = scalar_lea.sflag [#allocation7], %s457
          %s459 = sand.u32 %s102, 1
          %s460 = smul.addr %s459, 4
          %s461 = scalar_lea.vmem [#allocation8], %s460
          %s462 = smul.u32 4, %s36
          %s464 = ssub.s32 64, 64
          %465 = vsyncadd %s458, %s464
          %s466 = smul.addr %s462, 16
          %s467 = scalar_lea.hbm %s2, %s466
          %s469 = sshll.u32 %s461, 4
          %s470 = int_to_ptr.vmem [resolvable:$true] %s469
          %472 = dma.hbm_to_vmem [thread:$0]  %s467, 64, %s470, %s458
        $region56: #{tpu_custom_call.1} parent=47 // pred_fallthru
          _
        // Predicated region
        $region57: #{tpu_custom_call.1} parent=47 // pred_check
          %p473 = pneg %p138
        $region58: #{tpu_custom_call.1} parent=47 // pred_check_branch
          %475 = sbr.rel (%p473) target = $region60
        $region59: #{tpu_custom_call.1} parent=47 // pred_region
          %s476 = sand.u32 %s28, 1
          %s477 = scalar_lea.sflag [#allocation10], %s476
          %s478 = sand.u32 %s128, 1
          %s479 = smul.addr %s478, 2048
          %s480 = scalar_lea.vmem [#allocation9], %s479
          %s481 = smul.u32 64, %s36
          %s483 = ssub.s32 32768, 32768
          %484 = vsyncadd %s477, %s483
          %s485 = smul.addr %s481, 8
          %s486 = smul.addr %s485, 64
          %s487 = scalar_lea.hbm %s3, %s486
          %s488 = sshll.u32 %s480, 4
          %s489 = int_to_ptr.vmem [resolvable:$true] %s488
          %494 = dma.hbm_to_vmem [thread:$0]  %s487, 32768, %s489, %s477, 512, 512, 32
        $region60: #{tpu_custom_call.1} parent=47 // pred_fallthru
          _
      $region48: #{tpu_custom_call.1} parent=5 // pred_fallthru
        _
      %p495 = scmp.le.s32.totalorder 1, %s28
      %p496 = scmp.lt.s32.totalorder %s28, 5
      %p497 = pnand %p495, %p496
      %p498 = pneg %p497
      // Predicated region
      $region61: #{tpu_custom_call.1} parent=5 // pred_check
        _
      $region62: #{tpu_custom_call.1} parent=5 // pred_check_branch
        %500 = sbr.rel (%p497) target = $region64
      $region63: #{tpu_custom_call.1} parent=5 // pred_region
        %s501 = ssub.s32 %s28, 1
        // Predicated region
        $region65: #{tpu_custom_call.1} parent=63 // pred_check
          %p502 = pneg %p66
        $region66: #{tpu_custom_call.1} parent=63 // pred_check_branch
          %504 = sbr.rel (%p502) target = $region68
        $region67: #{tpu_custom_call.1} parent=63 // pred_region
          %505 = dma.done [#allocation4], 1024
        $region68: #{tpu_custom_call.1} parent=63 // pred_fallthru
          _
        %s506 = sand.u32 %s33, 1
        %s507 = scalar_lea.sflag [#allocation7], %s506
        %s508 = sand.u32 %s79, 1
        %s509 = smul.addr %s508, 2048
        %s510 = scalar_lea.vmem [#allocation6], %s509
        // Predicated region
        $region69: #{tpu_custom_call.1} parent=63 // pred_check
          %p511 = pneg %p92
        $region70: #{tpu_custom_call.1} parent=63 // pred_check_branch
          %513 = sbr.rel (%p511) target = $region72
        $region71: #{tpu_custom_call.1} parent=63 // pred_region
          %514 = dma.done %s507, 32768
        $region72: #{tpu_custom_call.1} parent=63 // pred_fallthru
          _
        %s515 = sand.u32 %s33, 1
        %s516 = scalar_lea.sflag [#allocation7], %s515
        %s517 = sand.u32 %s105, 1
        %s518 = smul.addr %s517, 4
        %s519 = scalar_lea.vmem [#allocation8], %s518
        // Predicated region
        $region73: #{tpu_custom_call.1} parent=63 // pred_check
          %p520 = pneg %p118
        $region74: #{tpu_custom_call.1} parent=63 // pred_check_branch
          %522 = sbr.rel (%p520) target = $region76
        $region75: #{tpu_custom_call.1} parent=63 // pred_region
          %523 = dma.done %s516, 64
        $region76: #{tpu_custom_call.1} parent=63 // pred_fallthru
          _
        %s524 = sand.u32 %s33, 1
        %s525 = scalar_lea.sflag [#allocation10], %s524
        %s526 = sand.u32 %s131, 1
        %s527 = smul.addr %s526, 2048
        %s528 = scalar_lea.vmem [#allocation9], %s527
        // Predicated region
        $region77: #{tpu_custom_call.1} parent=63 // pred_check
          %p529 = pneg %p144
        $region78: #{tpu_custom_call.1} parent=63 // pred_check_branch
          %531 = sbr.rel (%p529) target = $region80
        $region79: #{tpu_custom_call.1} parent=63 // pred_region
          %532 = dma.done %s525, 32768
        $region80: #{tpu_custom_call.1} parent=63 // pred_fallthru
          _
        // Predicated region
        $region81: #{tpu_custom_call.1} parent=63 // pred_check
          %p533 = pneg %p165
        $region82: #{tpu_custom_call.1} parent=63 // pred_check_branch
          %535 = sbr.rel (%p533) target = $region84
        $region83: #{tpu_custom_call.1} parent=63 // pred_region
          %536 = dma.done [#allocation10], 128
        $region84: #{tpu_custom_call.1} parent=63 // pred_fallthru
          _
        // Predicated region
        $region85: #{tpu_custom_call.1} parent=63 // pred_check
          %p537 = pneg %p186
        $region86: #{tpu_custom_call.1} parent=63 // pred_check_branch
          %539 = sbr.rel (%p537) target = $region88
        $region87: #{tpu_custom_call.1} parent=63 // pred_region
          %540 = dma.done [#allocation13], 32768
        $region88: #{tpu_custom_call.1} parent=63 // pred_fallthru
          _
        // Predicated region
        $region89: #{tpu_custom_call.1} parent=63 // pred_check
          %p541 = pneg %p207
        $region90: #{tpu_custom_call.1} parent=63 // pred_check_branch
          %543 = sbr.rel (%p541) target = $region92
        $region91: #{tpu_custom_call.1} parent=63 // pred_region
          %544 = dma.done [#allocation13], 64
        $region92: #{tpu_custom_call.1} parent=63 // pred_fallthru
          _
        // Predicated region
        $region93: #{tpu_custom_call.1} parent=63 // pred_check
          %p545 = pneg %p228
        $region94: #{tpu_custom_call.1} parent=63 // pred_check_branch
          %547 = sbr.rel (%p545) target = $region96
        $region95: #{tpu_custom_call.1} parent=63 // pred_region
          %548 = dma.done [#allocation16], 8192
        $region96: #{tpu_custom_call.1} parent=63 // pred_fallthru
          _
        // Predicated region
        $region97: #{tpu_custom_call.1} parent=63 // pred_check
          %p549 = pneg %p249
        $region98: #{tpu_custom_call.1} parent=63 // pred_check_branch
          %551 = sbr.rel (%p549) target = $region100
        $region99: #{tpu_custom_call.1} parent=63 // pred_region
          %552 = dma.done [#allocation16], 32
        $region100: #{tpu_custom_call.1} parent=63 // pred_fallthru
          _
        // Predicated region
        $region101: #{tpu_custom_call.1} parent=63 // pred_check
          %p553 = pneg %p270
        $region102: #{tpu_custom_call.1} parent=63 // pred_check_branch
          %555 = sbr.rel (%p553) target = $region104
        $region103: #{tpu_custom_call.1} parent=63 // pred_region
          %556 = dma.done [#allocation19], 2048
        $region104: #{tpu_custom_call.1} parent=63 // pred_fallthru
          _
        // Predicated region
        $region105: #{tpu_custom_call.1} parent=63 // pred_check
          %p557 = pneg %p291
        $region106: #{tpu_custom_call.1} parent=63 // pred_check_branch
          %559 = sbr.rel (%p557) target = $region108
        $region107: #{tpu_custom_call.1} parent=63 // pred_region
          %560 = dma.done [#allocation19], 16
        $region108: #{tpu_custom_call.1} parent=63 // pred_fallthru
          _
        %p561 = pneg %p66
        %p562 = pneg %p63
        %s563 = sand.u32 %s33, 1
        %s564 = scalar_lea.sflag [#allocation7], %s563
        %s565 = sand.u32 %s79, 1
        %s566 = smul.addr %s565, 2048
        %s567 = scalar_lea.vmem [#allocation6], %s566
        %p568 = pneg %p92
        %p569 = pneg %p89
        %s570 = sand.u32 %s33, 1
        %s571 = scalar_lea.sflag [#allocation7], %s570
        %s572 = sand.u32 %s105, 1
        %s573 = smul.addr %s572, 4
        %s574 = scalar_lea.vmem [#allocation8], %s573
        %p575 = pneg %p118
        %p576 = pneg %p115
        %s577 = sand.u32 %s33, 1
        %s578 = scalar_lea.sflag [#allocation10], %s577
        %s579 = sand.u32 %s131, 1
        %s580 = smul.addr %s579, 2048
        %s581 = scalar_lea.vmem [#allocation9], %s580
        %p582 = pneg %p144
        %p583 = pneg %p141
        %p584 = pneg %p165
        %p585 = pneg %p162
        %p586 = pneg %p186
        %p587 = pneg %p183
        %p588 = pneg %p207
        %p589 = pneg %p204
        %p590 = pneg %p228
        %p591 = pneg %p225
        %p592 = pneg %p249
        %p593 = pneg %p246
        %p594 = pneg %p270
        %p595 = pneg %p267
        %p596 = pneg %p291
        %p597 = pneg %p288
        %p598 = pneg %p317
        %p599 = pneg %p314
        %s600 = smul.u32 4, %s38
        %s601 = smul.u32 4, %s38
        %s602 = smul.u32 64, %s38
        %p604 = scmp.eq.s32.totalorder %s38, 0
        // Predicated region
        $region109: #{tpu_custom_call.1} parent=63 // pred_check
          %p605 = pneg %p604
        $region110: #{tpu_custom_call.1} parent=63 // pred_check_branch
          %607 = sbr.rel (%p605) target = $region112
        $region111: #{tpu_custom_call.1} parent=63 // pred_region
          %608 = vst [vmem:[#allocation2] sm:$0xff] 0.0
          %609 = vst [vmem:[#allocation2 + $0x8] sm:$0xff] 0.0
          %610 = vst [vmem:[#allocation2 + $0x10] sm:$0xff] 0.0
          %611 = vst [vmem:[#allocation2 + $0x18] sm:$0xff] 0.0
          %612 = vst [vmem:[#allocation2 + $0x20] sm:$0xff] 0.0
          %613 = vst [vmem:[#allocation2 + $0x28] sm:$0xff] 0.0
          %614 = vst [vmem:[#allocation2 + $0x30] sm:$0xff] 0.0
          %615 = vst [vmem:[#allocation2 + $0x38] sm:$0xff] 0.0
        $region112: #{tpu_custom_call.1} parent=63 // pred_fallthru
          _
        %v616 = vld [vmem:[#allocation3] sm:$0xff]
        %v617 = vld [vmem:[#allocation3 + $0x8] sm:$0xff]
        %v618 = vld [vmem:[#allocation3 + $0x10] sm:$0xff]
        %v619 = vld [vmem:[#allocation3 + $0x18] sm:$0xff]
        %v620 = vld [vmem:[#allocation3 + $0x20] sm:$0xff]
        %v621 = vld [vmem:[#allocation3 + $0x28] sm:$0xff]
        %v622 = vld [vmem:[#allocation3 + $0x30] sm:$0xff]
        %v623 = vld [vmem:[#allocation3 + $0x38] sm:$0xff]
        %v624 = vpack.c.bf16 %v616, %v616
        %v625 = vpack.c.bf16 %v617, %v617
        %v626 = vpack.c.bf16 %v618, %v618
        %v627 = vpack.c.bf16 %v619, %v619
        %v628 = vpack.c.bf16 %v620, %v620
        %v629 = vpack.c.bf16 %v621, %v621
        %v630 = vpack.c.bf16 %v622, %v622
        %v631 = vpack.c.bf16 %v623, %v623
        %v632 = vld [vmem:[%s510] sm:$0xff]
        %v633 = vld [vmem:[%s510 + $0x8] sm:$0xff]
        %v634 = vld [vmem:[%s510 + $0x10] sm:$0xff]
        %v635 = vld [vmem:[%s510 + $0x18] sm:$0xff]
        %v636 = vld [vmem:[%s510 + $0x20] sm:$0xff]
        %v637 = vld [vmem:[%s510 + $0x28] sm:$0xff]
        %v638 = vld [vmem:[%s510 + $0x30] sm:$0xff]
        %v639 = vld [vmem:[%s510 + $0x38] sm:$0xff]
        %v640 = vld [vmem:[%s510 + $0x40] sm:$0xff]
        %v641 = vld [vmem:[%s510 + $0x48] sm:$0xff]
        %v642 = vld [vmem:[%s510 + $0x50] sm:$0xff]
        %v643 = vld [vmem:[%s510 + $0x58] sm:$0xff]
        %v644 = vld [vmem:[%s510 + $0x60] sm:$0xff]
        %v645 = vld [vmem:[%s510 + $0x68] sm:$0xff]
        %v646 = vld [vmem:[%s510 + $0x70] sm:$0xff]
        %v647 = vld [vmem:[%s510 + $0x78] sm:$0xff]
        %v648 = vld [vmem:[%s510 + $0x80] sm:$0xff]
        %v649 = vld [vmem:[%s510 + $0x88] sm:$0xff]
        %v650 = vld [vmem:[%s510 + $0x90] sm:$0xff]
        %v651 = vld [vmem:[%s510 + $0x98] sm:$0xff]
        %v652 = vld [vmem:[%s510 + $0xa0] sm:$0xff]
        %v653 = vld [vmem:[%s510 + $0xa8] sm:$0xff]
        %v654 = vld [vmem:[%s510 + $0xb0] sm:$0xff]
        %v655 = vld [vmem:[%s510 + $0xb8] sm:$0xff]
        %v656 = vld [vmem:[%s510 + $0xc0] sm:$0xff]
        %v657 = vld [vmem:[%s510 + $0xc8] sm:$0xff]
        %v658 = vld [vmem:[%s510 + $0xd0] sm:$0xff]
        %v659 = vld [vmem:[%s510 + $0xd8] sm:$0xff]
        %v660 = vld [vmem:[%s510 + $0xe0] sm:$0xff]
        %v661 = vld [vmem:[%s510 + $0xe8] sm:$0xff]
        %v662 = vld [vmem:[%s510 + $0xf0] sm:$0xff]
        %v663 = vld [vmem:[%s510 + $0xf8] sm:$0xff]
        %v664 = vld [vmem:[%s510 + $0x100] sm:$0xff]
        %v665 = vld [vmem:[%s510 + $0x108] sm:$0xff]
        %v666 = vld [vmem:[%s510 + $0x110] sm:$0xff]
        %v667 = vld [vmem:[%s510 + $0x118] sm:$0xff]
        %v668 = vld [vmem:[%s510 + $0x120] sm:$0xff]
        %v669 = vld [vmem:[%s510 + $0x128] sm:$0xff]
        %v670 = vld [vmem:[%s510 + $0x130] sm:$0xff]
        %v671 = vld [vmem:[%s510 + $0x138] sm:$0xff]
        %v672 = vld [vmem:[%s510 + $0x140] sm:$0xff]
        %v673 = vld [vmem:[%s510 + $0x148] sm:$0xff]
        %v674 = vld [vmem:[%s510 + $0x150] sm:$0xff]
        %v675 = vld [vmem:[%s510 + $0x158] sm:$0xff]
        %v676 = vld [vmem:[%s510 + $0x160] sm:$0xff]
        %v677 = vld [vmem:[%s510 + $0x168] sm:$0xff]
        %v678 = vld [vmem:[%s510 + $0x170] sm:$0xff]
        %v679 = vld [vmem:[%s510 + $0x178] sm:$0xff]
        %v680 = vld [vmem:[%s510 + $0x180] sm:$0xff]
        %v681 = vld [vmem:[%s510 + $0x188] sm:$0xff]
        %v682 = vld [vmem:[%s510 + $0x190] sm:$0xff]
        %v683 = vld [vmem:[%s510 + $0x198] sm:$0xff]
        %v684 = vld [vmem:[%s510 + $0x1a0] sm:$0xff]
        %v685 = vld [vmem:[%s510 + $0x1a8] sm:$0xff]
        %v686 = vld [vmem:[%s510 + $0x1b0] sm:$0xff]
        %v687 = vld [vmem:[%s510 + $0x1b8] sm:$0xff]
        %v688 = vld [vmem:[%s510 + $0x1c0] sm:$0xff]
        %v689 = vld [vmem:[%s510 + $0x1c8] sm:$0xff]
        %v690 = vld [vmem:[%s510 + $0x1d0] sm:$0xff]
        %v691 = vld [vmem:[%s510 + $0x1d8] sm:$0xff]
        %v692 = vld [vmem:[%s510 + $0x1e0] sm:$0xff]
        %v693 = vld [vmem:[%s510 + $0x1e8] sm:$0xff]
        %v694 = vld [vmem:[%s510 + $0x1f0] sm:$0xff]
        %v695 = vld [vmem:[%s510 + $0x1f8] sm:$0xff]
        %v696 = vld [vmem:[%s510 + $0x200] sm:$0xff]
        %v697 = vld [vmem:[%s510 + $0x208] sm:$0xff]
        %v698 = vld [vmem:[%s510 + $0x210] sm:$0xff]
        %v699 = vld [vmem:[%s510 + $0x218] sm:$0xff]
        %v700 = vld [vmem:[%s510 + $0x220] sm:$0xff]
        %v701 = vld [vmem:[%s510 + $0x228] sm:$0xff]
        %v702 = vld [vmem:[%s510 + $0x230] sm:$0xff]
        %v703 = vld [vmem:[%s510 + $0x238] sm:$0xff]
        %v704 = vld [vmem:[%s510 + $0x240] sm:$0xff]
        %v705 = vld [vmem:[%s510 + $0x248] sm:$0xff]
        %v706 = vld [vmem:[%s510 + $0x250] sm:$0xff]
        %v707 = vld [vmem:[%s510 + $0x258] sm:$0xff]
        %v708 = vld [vmem:[%s510 + $0x260] sm:$0xff]
        %v709 = vld [vmem:[%s510 + $0x268] sm:$0xff]
        %v710 = vld [vmem:[%s510 + $0x270] sm:$0xff]
        %v711 = vld [vmem:[%s510 + $0x278] sm:$0xff]
        %v712 = vld [vmem:[%s510 + $0x280] sm:$0xff]
        %v713 = vld [vmem:[%s510 + $0x288] sm:$0xff]
        %v714 = vld [vmem:[%s510 + $0x290] sm:$0xff]
        %v715 = vld [vmem:[%s510 + $0x298] sm:$0xff]
        %v716 = vld [vmem:[%s510 + $0x2a0] sm:$0xff]
        %v717 = vld [vmem:[%s510 + $0x2a8] sm:$0xff]
        %v718 = vld [vmem:[%s510 + $0x2b0] sm:$0xff]
        %v719 = vld [vmem:[%s510 + $0x2b8] sm:$0xff]
        %v720 = vld [vmem:[%s510 + $0x2c0] sm:$0xff]
        %v721 = vld [vmem:[%s510 + $0x2c8] sm:$0xff]
        %v722 = vld [vmem:[%s510 + $0x2d0] sm:$0xff]
        %v723 = vld [vmem:[%s510 + $0x2d8] sm:$0xff]
        %v724 = vld [vmem:[%s510 + $0x2e0] sm:$0xff]
        %v725 = vld [vmem:[%s510 + $0x2e8] sm:$0xff]
        %v726 = vld [vmem:[%s510 + $0x2f0] sm:$0xff]
        %v727 = vld [vmem:[%s510 + $0x2f8] sm:$0xff]
        %v728 = vld [vmem:[%s510 + $0x300] sm:$0xff]
        %v729 = vld [vmem:[%s510 + $0x308] sm:$0xff]
        %v730 = vld [vmem:[%s510 + $0x310] sm:$0xff]
        %v731 = vld [vmem:[%s510 + $0x318] sm:$0xff]
        %v732 = vld [vmem:[%s510 + $0x320] sm:$0xff]
        %v733 = vld [vmem:[%s510 + $0x328] sm:$0xff]
        %v734 = vld [vmem:[%s510 + $0x330] sm:$0xff]
        %v735 = vld [vmem:[%s510 + $0x338] sm:$0xff]
        %v736 = vld [vmem:[%s510 + $0x340] sm:$0xff]
        %v737 = vld [vmem:[%s510 + $0x348] sm:$0xff]
        %v738 = vld [vmem:[%s510 + $0x350] sm:$0xff]
        %v739 = vld [vmem:[%s510 + $0x358] sm:$0xff]
        %v740 = vld [vmem:[%s510 + $0x360] sm:$0xff]
        %v741 = vld [vmem:[%s510 + $0x368] sm:$0xff]
        %v742 = vld [vmem:[%s510 + $0x370] sm:$0xff]
        %v743 = vld [vmem:[%s510 + $0x378] sm:$0xff]
        %v744 = vld [vmem:[%s510 + $0x380] sm:$0xff]
        %v745 = vld [vmem:[%s510 + $0x388] sm:$0xff]
        %v746 = vld [vmem:[%s510 + $0x390] sm:$0xff]
        %v747 = vld [vmem:[%s510 + $0x398] sm:$0xff]
        %v748 = vld [vmem:[%s510 + $0x3a0] sm:$0xff]
        %v749 = vld [vmem:[%s510 + $0x3a8] sm:$0xff]
        %v750 = vld [vmem:[%s510 + $0x3b0] sm:$0xff]
        %v751 = vld [vmem:[%s510 + $0x3b8] sm:$0xff]
        %v752 = vld [vmem:[%s510 + $0x3c0] sm:$0xff]
        %v753 = vld [vmem:[%s510 + $0x3c8] sm:$0xff]
        %v754 = vld [vmem:[%s510 + $0x3d0] sm:$0xff]
        %v755 = vld [vmem:[%s510 + $0x3d8] sm:$0xff]
        %v756 = vld [vmem:[%s510 + $0x3e0] sm:$0xff]
        %v757 = vld [vmem:[%s510 + $0x3e8] sm:$0xff]
        %v758 = vld [vmem:[%s510 + $0x3f0] sm:$0xff]
        %v759 = vld [vmem:[%s510 + $0x3f8] sm:$0xff]
        %v760 = vld [vmem:[%s510 + $0x400] sm:$0xff]
        %v761 = vld [vmem:[%s510 + $0x408] sm:$0xff]
        %v762 = vld [vmem:[%s510 + $0x410] sm:$0xff]
        %v763 = vld [vmem:[%s510 + $0x418] sm:$0xff]
        %v764 = vld [vmem:[%s510 + $0x420] sm:$0xff]
        %v765 = vld [vmem:[%s510 + $0x428] sm:$0xff]
        %v766 = vld [vmem:[%s510 + $0x430] sm:$0xff]
        %v767 = vld [vmem:[%s510 + $0x438] sm:$0xff]
        %v768 = vld [vmem:[%s510 + $0x440] sm:$0xff]
        %v769 = vld [vmem:[%s510 + $0x448] sm:$0xff]
        %v770 = vld [vmem:[%s510 + $0x450] sm:$0xff]
        %v771 = vld [vmem:[%s510 + $0x458] sm:$0xff]
        %v772 = vld [vmem:[%s510 + $0x460] sm:$0xff]
        %v773 = vld [vmem:[%s510 + $0x468] sm:$0xff]
        %v774 = vld [vmem:[%s510 + $0x470] sm:$0xff]
        %v775 = vld [vmem:[%s510 + $0x478] sm:$0xff]
        %v776 = vld [vmem:[%s510 + $0x480] sm:$0xff]
        %v777 = vld [vmem:[%s510 + $0x488] sm:$0xff]
        %v778 = vld [vmem:[%s510 + $0x490] sm:$0xff]
        %v779 = vld [vmem:[%s510 + $0x498] sm:$0xff]
        %v780 = vld [vmem:[%s510 + $0x4a0] sm:$0xff]
        %v781 = vld [vmem:[%s510 + $0x4a8] sm:$0xff]
        %v782 = vld [vmem:[%s510 + $0x4b0] sm:$0xff]
        %v783 = vld [vmem:[%s510 + $0x4b8] sm:$0xff]
        %v784 = vld [vmem:[%s510 + $0x4c0] sm:$0xff]
        %v785 = vld [vmem:[%s510 + $0x4c8] sm:$0xff]
        %v786 = vld [vmem:[%s510 + $0x4d0] sm:$0xff]
        %v787 = vld [vmem:[%s510 + $0x4d8] sm:$0xff]
        %v788 = vld [vmem:[%s510 + $0x4e0] sm:$0xff]
        %v789 = vld [vmem:[%s510 + $0x4e8] sm:$0xff]
        %v790 = vld [vmem:[%s510 + $0x4f0] sm:$0xff]
        %v791 = vld [vmem:[%s510 + $0x4f8] sm:$0xff]
        %v792 = vld [vmem:[%s510 + $0x500] sm:$0xff]
        %v793 = vld [vmem:[%s510 + $0x508] sm:$0xff]
        %v794 = vld [vmem:[%s510 + $0x510] sm:$0xff]
        %v795 = vld [vmem:[%s510 + $0x518] sm:$0xff]
        %v796 = vld [vmem:[%s510 + $0x520] sm:$0xff]
        %v797 = vld [vmem:[%s510 + $0x528] sm:$0xff]
        %v798 = vld [vmem:[%s510 + $0x530] sm:$0xff]
        %v799 = vld [vmem:[%s510 + $0x538] sm:$0xff]
        %v800 = vld [vmem:[%s510 + $0x540] sm:$0xff]
        %v801 = vld [vmem:[%s510 + $0x548] sm:$0xff]
        %v802 = vld [vmem:[%s510 + $0x550] sm:$0xff]
        %v803 = vld [vmem:[%s510 + $0x558] sm:$0xff]
        %v804 = vld [vmem:[%s510 + $0x560] sm:$0xff]
        %v805 = vld [vmem:[%s510 + $0x568] sm:$0xff]
        %v806 = vld [vmem:[%s510 + $0x570] sm:$0xff]
        %v807 = vld [vmem:[%s510 + $0x578] sm:$0xff]
        %v808 = vld [vmem:[%s510 + $0x580] sm:$0xff]
        %v809 = vld [vmem:[%s510 + $0x588] sm:$0xff]
        %v810 = vld [vmem:[%s510 + $0x590] sm:$0xff]
        %v811 = vld [vmem:[%s510 + $0x598] sm:$0xff]
        %v812 = vld [vmem:[%s510 + $0x5a0] sm:$0xff]
        %v813 = vld [vmem:[%s510 + $0x5a8] sm:$0xff]
        %v814 = vld [vmem:[%s510 + $0x5b0] sm:$0xff]
        %v815 = vld [vmem:[%s510 + $0x5b8] sm:$0xff]
        %v816 = vld [vmem:[%s510 + $0x5c0] sm:$0xff]
        %v817 = vld [vmem:[%s510 + $0x5c8] sm:$0xff]
        %v818 = vld [vmem:[%s510 + $0x5d0] sm:$0xff]
        %v819 = vld [vmem:[%s510 + $0x5d8] sm:$0xff]
        %v820 = vld [vmem:[%s510 + $0x5e0] sm:$0xff]
        %v821 = vld [vmem:[%s510 + $0x5e8] sm:$0xff]
        %v822 = vld [vmem:[%s510 + $0x5f0] sm:$0xff]
        %v823 = vld [vmem:[%s510 + $0x5f8] sm:$0xff]
        %v824 = vld [vmem:[%s510 + $0x600] sm:$0xff]
        %v825 = vld [vmem:[%s510 + $0x608] sm:$0xff]
        %v826 = vld [vmem:[%s510 + $0x610] sm:$0xff]
        %v827 = vld [vmem:[%s510 + $0x618] sm:$0xff]
        %v828 = vld [vmem:[%s510 + $0x620] sm:$0xff]
        %v829 = vld [vmem:[%s510 + $0x628] sm:$0xff]
        %v830 = vld [vmem:[%s510 + $0x630] sm:$0xff]
        %v831 = vld [vmem:[%s510 + $0x638] sm:$0xff]
        %v832 = vld [vmem:[%s510 + $0x640] sm:$0xff]
        %v833 = vld [vmem:[%s510 + $0x648] sm:$0xff]
        %v834 = vld [vmem:[%s510 + $0x650] sm:$0xff]
        %v835 = vld [vmem:[%s510 + $0x658] sm:$0xff]
        %v836 = vld [vmem:[%s510 + $0x660] sm:$0xff]
        %v837 = vld [vmem:[%s510 + $0x668] sm:$0xff]
        %v838 = vld [vmem:[%s510 + $0x670] sm:$0xff]
        %v839 = vld [vmem:[%s510 + $0x678] sm:$0xff]
        %v840 = vld [vmem:[%s510 + $0x680] sm:$0xff]
        %v841 = vld [vmem:[%s510 + $0x688] sm:$0xff]
        %v842 = vld [vmem:[%s510 + $0x690] sm:$0xff]
        %v843 = vld [vmem:[%s510 + $0x698] sm:$0xff]
        %v844 = vld [vmem:[%s510 + $0x6a0] sm:$0xff]
        %v845 = vld [vmem:[%s510 + $0x6a8] sm:$0xff]
        %v846 = vld [vmem:[%s510 + $0x6b0] sm:$0xff]
        %v847 = vld [vmem:[%s510 + $0x6b8] sm:$0xff]
        %v848 = vld [vmem:[%s510 + $0x6c0] sm:$0xff]
        %v849 = vld [vmem:[%s510 + $0x6c8] sm:$0xff]
        %v850 = vld [vmem:[%s510 + $0x6d0] sm:$0xff]
        %v851 = vld [vmem:[%s510 + $0x6d8] sm:$0xff]
        %v852 = vld [vmem:[%s510 + $0x6e0] sm:$0xff]
        %v853 = vld [vmem:[%s510 + $0x6e8] sm:$0xff]
        %v854 = vld [vmem:[%s510 + $0x6f0] sm:$0xff]
        %v855 = vld [vmem:[%s510 + $0x6f8] sm:$0xff]
        %v856 = vld [vmem:[%s510 + $0x700] sm:$0xff]
        %v857 = vld [vmem:[%s510 + $0x708] sm:$0xff]
        %v858 = vld [vmem:[%s510 + $0x710] sm:$0xff]
        %v859 = vld [vmem:[%s510 + $0x718] sm:$0xff]
        %v860 = vld [vmem:[%s510 + $0x720] sm:$0xff]
        %v861 = vld [vmem:[%s510 + $0x728] sm:$0xff]
        %v862 = vld [vmem:[%s510 + $0x730] sm:$0xff]
        %v863 = vld [vmem:[%s510 + $0x738] sm:$0xff]
        %v864 = vld [vmem:[%s510 + $0x740] sm:$0xff]
        %v865 = vld [vmem:[%s510 + $0x748] sm:$0xff]
        %v866 = vld [vmem:[%s510 + $0x750] sm:$0xff]
        %v867 = vld [vmem:[%s510 + $0x758] sm:$0xff]
        %v868 = vld [vmem:[%s510 + $0x760] sm:$0xff]
        %v869 = vld [vmem:[%s510 + $0x768] sm:$0xff]
        %v870 = vld [vmem:[%s510 + $0x770] sm:$0xff]
        %v871 = vld [vmem:[%s510 + $0x778] sm:$0xff]
        %v872 = vld [vmem:[%s510 + $0x780] sm:$0xff]
        %v873 = vld [vmem:[%s510 + $0x788] sm:$0xff]
        %v874 = vld [vmem:[%s510 + $0x790] sm:$0xff]
        %v875 = vld [vmem:[%s510 + $0x798] sm:$0xff]
        %v876 = vld [vmem:[%s510 + $0x7a0] sm:$0xff]
        %v877 = vld [vmem:[%s510 + $0x7a8] sm:$0xff]
        %v878 = vld [vmem:[%s510 + $0x7b0] sm:$0xff]
        %v879 = vld [vmem:[%s510 + $0x7b8] sm:$0xff]
        %v880 = vld [vmem:[%s510 + $0x7c0] sm:$0xff]
        %v881 = vld [vmem:[%s510 + $0x7c8] sm:$0xff]
        %v882 = vld [vmem:[%s510 + $0x7d0] sm:$0xff]
        %v883 = vld [vmem:[%s510 + $0x7d8] sm:$0xff]
        %v884 = vld [vmem:[%s510 + $0x7e0] sm:$0xff]
        %v885 = vld [vmem:[%s510 + $0x7e8] sm:$0xff]
        %v886 = vld [vmem:[%s510 + $0x7f0] sm:$0xff]
        %v887 = vld [vmem:[%s510 + $0x7f8] sm:$0xff]
        %v888 = vld [vmem:[%s519] sm:$0xf]
        %v890 = vlaneseq
        %v891 = vshrl.u32 %v890, 7
        %v892 = vsub.s32 0, %v891
        %v893 = vrot.slane %v888, %v892
        %v894 = vlaneseq
        %v895 = vshrl.u32 %v894, 7
        %v896 = vsub.s32 1, %v895
        %v897 = vrot.slane %v888, %v896
        %v898 = vlaneseq
        %v899 = vshrl.u32 %v898, 7
        %v900 = vsub.s32 2, %v899
        %v901 = vrot.slane %v888, %v900
        %v902 = vlaneseq
        %v903 = vshrl.u32 %v902, 7
        %v904 = vsub.s32 3, %v903
        %v905 = vrot.slane %v888, %v904
        %v1166 = vunpack.c.l.b16 %v632
        %v1167 = vunpack.c.h.b16 %v632
        %v1168 = vunpack.c.l.b16 %v633
        %v1169 = vunpack.c.h.b16 %v633
        %v1170 = vunpack.c.l.b16 %v634
        %v1171 = vunpack.c.h.b16 %v634
        %v1172 = vunpack.c.l.b16 %v635
        %v1173 = vunpack.c.h.b16 %v635
        %v1174 = vunpack.c.l.b16 %v636
        %v1175 = vunpack.c.h.b16 %v636
        %v1176 = vunpack.c.l.b16 %v637
        %v1177 = vunpack.c.h.b16 %v637
        %v1178 = vunpack.c.l.b16 %v638
        %v1179 = vunpack.c.h.b16 %v638
        %v1180 = vunpack.c.l.b16 %v639
        %v1181 = vunpack.c.h.b16 %v639
        %v1182 = vunpack.c.l.b16 %v640
        %v1183 = vunpack.c.h.b16 %v640
        %v1184 = vunpack.c.l.b16 %v641
        %v1185 = vunpack.c.h.b16 %v641
        %v1186 = vunpack.c.l.b16 %v642
        %v1187 = vunpack.c.h.b16 %v642
        %v1188 = vunpack.c.l.b16 %v643
        %v1189 = vunpack.c.h.b16 %v643
        %v1190 = vunpack.c.l.b16 %v644
        %v1191 = vunpack.c.h.b16 %v644
        %v1192 = vunpack.c.l.b16 %v645
        %v1193 = vunpack.c.h.b16 %v645
        %v1194 = vunpack.c.l.b16 %v646
        %v1195 = vunpack.c.h.b16 %v646
        %v1196 = vunpack.c.l.b16 %v647
        %v1197 = vunpack.c.h.b16 %v647
        %v1198 = vunpack.c.l.b16 %v648
        %v1199 = vunpack.c.h.b16 %v648
        %v1200 = vunpack.c.l.b16 %v649
        %v1201 = vunpack.c.h.b16 %v649
        %v1202 = vunpack.c.l.b16 %v650
        %v1203 = vunpack.c.h.b16 %v650
        %v1204 = vunpack.c.l.b16 %v651
        %v1205 = vunpack.c.h.b16 %v651
        %v1206 = vunpack.c.l.b16 %v652
        %v1207 = vunpack.c.h.b16 %v652
        %v1208 = vunpack.c.l.b16 %v653
        %v1209 = vunpack.c.h.b16 %v653
        %v1210 = vunpack.c.l.b16 %v654
        %v1211 = vunpack.c.h.b16 %v654
        %v1212 = vunpack.c.l.b16 %v655
        %v1213 = vunpack.c.h.b16 %v655
        %v1214 = vunpack.c.l.b16 %v656
        %v1215 = vunpack.c.h.b16 %v656
        %v1216 = vunpack.c.l.b16 %v657
        %v1217 = vunpack.c.h.b16 %v657
        %v1218 = vunpack.c.l.b16 %v658
        %v1219 = vunpack.c.h.b16 %v658
        %v1220 = vunpack.c.l.b16 %v659
        %v1221 = vunpack.c.h.b16 %v659
        %v1222 = vunpack.c.l.b16 %v660
        %v1223 = vunpack.c.h.b16 %v660
        %v1224 = vunpack.c.l.b16 %v661
        %v1225 = vunpack.c.h.b16 %v661
        %v1226 = vunpack.c.l.b16 %v662
        %v1227 = vunpack.c.h.b16 %v662
        %v1228 = vunpack.c.l.b16 %v663
        %v1229 = vunpack.c.h.b16 %v663
        %v1230 = vunpack.c.l.b16 %v664
        %v1231 = vunpack.c.h.b16 %v664
        %v1232 = vunpack.c.l.b16 %v665
        %v1233 = vunpack.c.h.b16 %v665
        %v1234 = vunpack.c.l.b16 %v666
        %v1235 = vunpack.c.h.b16 %v666
        %v1236 = vunpack.c.l.b16 %v667
        %v1237 = vunpack.c.h.b16 %v667
        %v1238 = vunpack.c.l.b16 %v668
        %v1239 = vunpack.c.h.b16 %v668
        %v1240 = vunpack.c.l.b16 %v669
        %v1241 = vunpack.c.h.b16 %v669
        %v1242 = vunpack.c.l.b16 %v670
        %v1243 = vunpack.c.h.b16 %v670
        %v1244 = vunpack.c.l.b16 %v671
        %v1245 = vunpack.c.h.b16 %v671
        %v1246 = vunpack.c.l.b16 %v672
        %v1247 = vunpack.c.h.b16 %v672
        %v1248 = vunpack.c.l.b16 %v673
        %v1249 = vunpack.c.h.b16 %v673
        %v1250 = vunpack.c.l.b16 %v674
        %v1251 = vunpack.c.h.b16 %v674
        %v1252 = vunpack.c.l.b16 %v675
        %v1253 = vunpack.c.h.b16 %v675
        %v1254 = vunpack.c.l.b16 %v676
        %v1255 = vunpack.c.h.b16 %v676
        %v1256 = vunpack.c.l.b16 %v677
        %v1257 = vunpack.c.h.b16 %v677
        %v1258 = vunpack.c.l.b16 %v678
        %v1259 = vunpack.c.h.b16 %v678
        %v1260 = vunpack.c.l.b16 %v679
        %v1261 = vunpack.c.h.b16 %v679
        %v1262 = vunpack.c.l.b16 %v680
        %v1263 = vunpack.c.h.b16 %v680
        %v1264 = vunpack.c.l.b16 %v681
        %v1265 = vunpack.c.h.b16 %v681
        %v1266 = vunpack.c.l.b16 %v682
        %v1267 = vunpack.c.h.b16 %v682
        %v1268 = vunpack.c.l.b16 %v683
        %v1269 = vunpack.c.h.b16 %v683
        %v1270 = vunpack.c.l.b16 %v684
        %v1271 = vunpack.c.h.b16 %v684
        %v1272 = vunpack.c.l.b16 %v685
        %v1273 = vunpack.c.h.b16 %v685
        %v1274 = vunpack.c.l.b16 %v686
        %v1275 = vunpack.c.h.b16 %v686
        %v1276 = vunpack.c.l.b16 %v687
        %v1277 = vunpack.c.h.b16 %v687
        %v1278 = vunpack.c.l.b16 %v688
        %v1279 = vunpack.c.h.b16 %v688
        %v1280 = vunpack.c.l.b16 %v689
        %v1281 = vunpack.c.h.b16 %v689
        %v1282 = vunpack.c.l.b16 %v690
        %v1283 = vunpack.c.h.b16 %v690
        %v1284 = vunpack.c.l.b16 %v691
        %v1285 = vunpack.c.h.b16 %v691
        %v1286 = vunpack.c.l.b16 %v692
        %v1287 = vunpack.c.h.b16 %v692
        %v1288 = vunpack.c.l.b16 %v693
        %v1289 = vunpack.c.h.b16 %v693
        %v1290 = vunpack.c.l.b16 %v694
        %v1291 = vunpack.c.h.b16 %v694
        %v1292 = vunpack.c.l.b16 %v695
        %v1293 = vunpack.c.h.b16 %v695
        %v1294 = vunpack.c.l.b16 %v696
        %v1295 = vunpack.c.h.b16 %v696
        %v1296 = vunpack.c.l.b16 %v697
        %v1297 = vunpack.c.h.b16 %v697
        %v1298 = vunpack.c.l.b16 %v698
        %v1299 = vunpack.c.h.b16 %v698
        %v1300 = vunpack.c.l.b16 %v699
        %v1301 = vunpack.c.h.b16 %v699
        %v1302 = vunpack.c.l.b16 %v700
        %v1303 = vunpack.c.h.b16 %v700
        %v1304 = vunpack.c.l.b16 %v701
        %v1305 = vunpack.c.h.b16 %v701
        %v1306 = vunpack.c.l.b16 %v702
        %v1307 = vunpack.c.h.b16 %v702
        %v1308 = vunpack.c.l.b16 %v703
        %v1309 = vunpack.c.h.b16 %v703
        %v1310 = vunpack.c.l.b16 %v704
        %v1311 = vunpack.c.h.b16 %v704
        %v1312 = vunpack.c.l.b16 %v705
        %v1313 = vunpack.c.h.b16 %v705
        %v1314 = vunpack.c.l.b16 %v706
        %v1315 = vunpack.c.h.b16 %v706
        %v1316 = vunpack.c.l.b16 %v707
        %v1317 = vunpack.c.h.b16 %v707
        %v1318 = vunpack.c.l.b16 %v708
        %v1319 = vunpack.c.h.b16 %v708
        %v1320 = vunpack.c.l.b16 %v709
        %v1321 = vunpack.c.h.b16 %v709
        %v1322 = vunpack.c.l.b16 %v710
        %v1323 = vunpack.c.h.b16 %v710
        %v1324 = vunpack.c.l.b16 %v711
        %v1325 = vunpack.c.h.b16 %v711
        %v1326 = vunpack.c.l.b16 %v712
        %v1327 = vunpack.c.h.b16 %v712
        %v1328 = vunpack.c.l.b16 %v713
        %v1329 = vunpack.c.h.b16 %v713
        %v1330 = vunpack.c.l.b16 %v714
        %v1331 = vunpack.c.h.b16 %v714
        %v1332 = vunpack.c.l.b16 %v715
        %v1333 = vunpack.c.h.b16 %v715
        %v1334 = vunpack.c.l.b16 %v716
        %v1335 = vunpack.c.h.b16 %v716
        %v1336 = vunpack.c.l.b16 %v717
        %v1337 = vunpack.c.h.b16 %v717
        %v1338 = vunpack.c.l.b16 %v718
        %v1339 = vunpack.c.h.b16 %v718
        %v1340 = vunpack.c.l.b16 %v719
        %v1341 = vunpack.c.h.b16 %v719
        %v1342 = vunpack.c.l.b16 %v720
        %v1343 = vunpack.c.h.b16 %v720
        %v1344 = vunpack.c.l.b16 %v721
        %v1345 = vunpack.c.h.b16 %v721
        %v1346 = vunpack.c.l.b16 %v722
        %v1347 = vunpack.c.h.b16 %v722
        %v1348 = vunpack.c.l.b16 %v723
        %v1349 = vunpack.c.h.b16 %v723
        %v1350 = vunpack.c.l.b16 %v724
        %v1351 = vunpack.c.h.b16 %v724
        %v1352 = vunpack.c.l.b16 %v725
        %v1353 = vunpack.c.h.b16 %v725
        %v1354 = vunpack.c.l.b16 %v726
        %v1355 = vunpack.c.h.b16 %v726
        %v1356 = vunpack.c.l.b16 %v727
        %v1357 = vunpack.c.h.b16 %v727
        %v1358 = vunpack.c.l.b16 %v728
        %v1359 = vunpack.c.h.b16 %v728
        %v1360 = vunpack.c.l.b16 %v729
        %v1361 = vunpack.c.h.b16 %v729
        %v1362 = vunpack.c.l.b16 %v730
        %v1363 = vunpack.c.h.b16 %v730
        %v1364 = vunpack.c.l.b16 %v731
        %v1365 = vunpack.c.h.b16 %v731
        %v1366 = vunpack.c.l.b16 %v732
        %v1367 = vunpack.c.h.b16 %v732
        %v1368 = vunpack.c.l.b16 %v733
        %v1369 = vunpack.c.h.b16 %v733
        %v1370 = vunpack.c.l.b16 %v734
        %v1371 = vunpack.c.h.b16 %v734
        %v1372 = vunpack.c.l.b16 %v735
        %v1373 = vunpack.c.h.b16 %v735
        %v1374 = vunpack.c.l.b16 %v736
        %v1375 = vunpack.c.h.b16 %v736
        %v1376 = vunpack.c.l.b16 %v737
        %v1377 = vunpack.c.h.b16 %v737
        %v1378 = vunpack.c.l.b16 %v738
        %v1379 = vunpack.c.h.b16 %v738
        %v1380 = vunpack.c.l.b16 %v739
        %v1381 = vunpack.c.h.b16 %v739
        %v1382 = vunpack.c.l.b16 %v740
        %v1383 = vunpack.c.h.b16 %v740
        %v1384 = vunpack.c.l.b16 %v741
        %v1385 = vunpack.c.h.b16 %v741
        %v1386 = vunpack.c.l.b16 %v742
        %v1387 = vunpack.c.h.b16 %v742
        %v1388 = vunpack.c.l.b16 %v743
        %v1389 = vunpack.c.h.b16 %v743
        %v1390 = vunpack.c.l.b16 %v744
        %v1391 = vunpack.c.h.b16 %v744
        %v1392 = vunpack.c.l.b16 %v745
        %v1393 = vunpack.c.h.b16 %v745
        %v1394 = vunpack.c.l.b16 %v746
        %v1395 = vunpack.c.h.b16 %v746
        %v1396 = vunpack.c.l.b16 %v747
        %v1397 = vunpack.c.h.b16 %v747
        %v1398 = vunpack.c.l.b16 %v748
        %v1399 = vunpack.c.h.b16 %v748
        %v1400 = vunpack.c.l.b16 %v749
        %v1401 = vunpack.c.h.b16 %v749
        %v1402 = vunpack.c.l.b16 %v750
        %v1403 = vunpack.c.h.b16 %v750
        %v1404 = vunpack.c.l.b16 %v751
        %v1405 = vunpack.c.h.b16 %v751
        %v1406 = vunpack.c.l.b16 %v752
        %v1407 = vunpack.c.h.b16 %v752
        %v1408 = vunpack.c.l.b16 %v753
        %v1409 = vunpack.c.h.b16 %v753
        %v1410 = vunpack.c.l.b16 %v754
        %v1411 = vunpack.c.h.b16 %v754
        %v1412 = vunpack.c.l.b16 %v755
        %v1413 = vunpack.c.h.b16 %v755
        %v1414 = vunpack.c.l.b16 %v756
        %v1415 = vunpack.c.h.b16 %v756
        %v1416 = vunpack.c.l.b16 %v757
        %v1417 = vunpack.c.h.b16 %v757
        %v1418 = vunpack.c.l.b16 %v758
        %v1419 = vunpack.c.h.b16 %v758
        %v1420 = vunpack.c.l.b16 %v759
        %v1421 = vunpack.c.h.b16 %v759
        %v1422 = vunpack.c.l.b16 %v760
        %v1423 = vunpack.c.h.b16 %v760
        %v1424 = vunpack.c.l.b16 %v761
        %v1425 = vunpack.c.h.b16 %v761
        %v1426 = vunpack.c.l.b16 %v762
        %v1427 = vunpack.c.h.b16 %v762
        %v1428 = vunpack.c.l.b16 %v763
        %v1429 = vunpack.c.h.b16 %v763
        %v1430 = vunpack.c.l.b16 %v764
        %v1431 = vunpack.c.h.b16 %v764
        %v1432 = vunpack.c.l.b16 %v765
        %v1433 = vunpack.c.h.b16 %v765
        %v1434 = vunpack.c.l.b16 %v766
        %v1435 = vunpack.c.h.b16 %v766
        %v1436 = vunpack.c.l.b16 %v767
        %v1437 = vunpack.c.h.b16 %v767
        %v1438 = vunpack.c.l.b16 %v768
        %v1439 = vunpack.c.h.b16 %v768
        %v1440 = vunpack.c.l.b16 %v769
        %v1441 = vunpack.c.h.b16 %v769
        %v1442 = vunpack.c.l.b16 %v770
        %v1443 = vunpack.c.h.b16 %v770
        %v1444 = vunpack.c.l.b16 %v771
        %v1445 = vunpack.c.h.b16 %v771
        %v1446 = vunpack.c.l.b16 %v772
        %v1447 = vunpack.c.h.b16 %v772
        %v1448 = vunpack.c.l.b16 %v773
        %v1449 = vunpack.c.h.b16 %v773
        %v1450 = vunpack.c.l.b16 %v774
        %v1451 = vunpack.c.h.b16 %v774
        %v1452 = vunpack.c.l.b16 %v775
        %v1453 = vunpack.c.h.b16 %v775
        %v1454 = vunpack.c.l.b16 %v776
        %v1455 = vunpack.c.h.b16 %v776
        %v1456 = vunpack.c.l.b16 %v777
        %v1457 = vunpack.c.h.b16 %v777
        %v1458 = vunpack.c.l.b16 %v778
        %v1459 = vunpack.c.h.b16 %v778
        %v1460 = vunpack.c.l.b16 %v779
        %v1461 = vunpack.c.h.b16 %v779
        %v1462 = vunpack.c.l.b16 %v780
        %v1463 = vunpack.c.h.b16 %v780
        %v1464 = vunpack.c.l.b16 %v781
        %v1465 = vunpack.c.h.b16 %v781
        %v1466 = vunpack.c.l.b16 %v782
        %v1467 = vunpack.c.h.b16 %v782
        %v1468 = vunpack.c.l.b16 %v783
        %v1469 = vunpack.c.h.b16 %v783
        %v1470 = vunpack.c.l.b16 %v784
        %v1471 = vunpack.c.h.b16 %v784
        %v1472 = vunpack.c.l.b16 %v785
        %v1473 = vunpack.c.h.b16 %v785
        %v1474 = vunpack.c.l.b16 %v786
        %v1475 = vunpack.c.h.b16 %v786
        %v1476 = vunpack.c.l.b16 %v787
        %v1477 = vunpack.c.h.b16 %v787
        %v1478 = vunpack.c.l.b16 %v788
        %v1479 = vunpack.c.h.b16 %v788
        %v1480 = vunpack.c.l.b16 %v789
        %v1481 = vunpack.c.h.b16 %v789
        %v1482 = vunpack.c.l.b16 %v790
        %v1483 = vunpack.c.h.b16 %v790
        %v1484 = vunpack.c.l.b16 %v791
        %v1485 = vunpack.c.h.b16 %v791
        %v1486 = vunpack.c.l.b16 %v792
        %v1487 = vunpack.c.h.b16 %v792
        %v1488 = vunpack.c.l.b16 %v793
        %v1489 = vunpack.c.h.b16 %v793
        %v1490 = vunpack.c.l.b16 %v794
        %v1491 = vunpack.c.h.b16 %v794
        %v1492 = vunpack.c.l.b16 %v795
        %v1493 = vunpack.c.h.b16 %v795
        %v1494 = vunpack.c.l.b16 %v796
        %v1495 = vunpack.c.h.b16 %v796
        %v1496 = vunpack.c.l.b16 %v797
        %v1497 = vunpack.c.h.b16 %v797
        %v1498 = vunpack.c.l.b16 %v798
        %v1499 = vunpack.c.h.b16 %v798
        %v1500 = vunpack.c.l.b16 %v799
        %v1501 = vunpack.c.h.b16 %v799
        %v1502 = vunpack.c.l.b16 %v800
        %v1503 = vunpack.c.h.b16 %v800
        %v1504 = vunpack.c.l.b16 %v801
        %v1505 = vunpack.c.h.b16 %v801
        %v1506 = vunpack.c.l.b16 %v802
        %v1507 = vunpack.c.h.b16 %v802
        %v1508 = vunpack.c.l.b16 %v803
        %v1509 = vunpack.c.h.b16 %v803
        %v1510 = vunpack.c.l.b16 %v804
        %v1511 = vunpack.c.h.b16 %v804
        %v1512 = vunpack.c.l.b16 %v805
        %v1513 = vunpack.c.h.b16 %v805
        %v1514 = vunpack.c.l.b16 %v806
        %v1515 = vunpack.c.h.b16 %v806
        %v1516 = vunpack.c.l.b16 %v807
        %v1517 = vunpack.c.h.b16 %v807
        %v1518 = vunpack.c.l.b16 %v808
        %v1519 = vunpack.c.h.b16 %v808
        %v1520 = vunpack.c.l.b16 %v809
        %v1521 = vunpack.c.h.b16 %v809
        %v1522 = vunpack.c.l.b16 %v810
        %v1523 = vunpack.c.h.b16 %v810
        %v1524 = vunpack.c.l.b16 %v811
        %v1525 = vunpack.c.h.b16 %v811
        %v1526 = vunpack.c.l.b16 %v812
        %v1527 = vunpack.c.h.b16 %v812
        %v1528 = vunpack.c.l.b16 %v813
        %v1529 = vunpack.c.h.b16 %v813
        %v1530 = vunpack.c.l.b16 %v814
        %v1531 = vunpack.c.h.b16 %v814
        %v1532 = vunpack.c.l.b16 %v815
        %v1533 = vunpack.c.h.b16 %v815
        %v1534 = vunpack.c.l.b16 %v816
        %v1535 = vunpack.c.h.b16 %v816
        %v1536 = vunpack.c.l.b16 %v817
        %v1537 = vunpack.c.h.b16 %v817
        %v1538 = vunpack.c.l.b16 %v818
        %v1539 = vunpack.c.h.b16 %v818
        %v1540 = vunpack.c.l.b16 %v819
        %v1541 = vunpack.c.h.b16 %v819
        %v1542 = vunpack.c.l.b16 %v820
        %v1543 = vunpack.c.h.b16 %v820
        %v1544 = vunpack.c.l.b16 %v821
        %v1545 = vunpack.c.h.b16 %v821
        %v1546 = vunpack.c.l.b16 %v822
        %v1547 = vunpack.c.h.b16 %v822
        %v1548 = vunpack.c.l.b16 %v823
        %v1549 = vunpack.c.h.b16 %v823
        %v1550 = vunpack.c.l.b16 %v824
        %v1551 = vunpack.c.h.b16 %v824
        %v1552 = vunpack.c.l.b16 %v825
        %v1553 = vunpack.c.h.b16 %v825
        %v1554 = vunpack.c.l.b16 %v826
        %v1555 = vunpack.c.h.b16 %v826
        %v1556 = vunpack.c.l.b16 %v827
        %v1557 = vunpack.c.h.b16 %v827
        %v1558 = vunpack.c.l.b16 %v828
        %v1559 = vunpack.c.h.b16 %v828
        %v1560 = vunpack.c.l.b16 %v829
        %v1561 = vunpack.c.h.b16 %v829
        %v1562 = vunpack.c.l.b16 %v830
        %v1563 = vunpack.c.h.b16 %v830
        %v1564 = vunpack.c.l.b16 %v831
        %v1565 = vunpack.c.h.b16 %v831
        %v1566 = vunpack.c.l.b16 %v832
        %v1567 = vunpack.c.h.b16 %v832
        %v1568 = vunpack.c.l.b16 %v833
        %v1569 = vunpack.c.h.b16 %v833
        %v1570 = vunpack.c.l.b16 %v834
        %v1571 = vunpack.c.h.b16 %v834
        %v1572 = vunpack.c.l.b16 %v835
        %v1573 = vunpack.c.h.b16 %v835
        %v1574 = vunpack.c.l.b16 %v836
        %v1575 = vunpack.c.h.b16 %v836
        %v1576 = vunpack.c.l.b16 %v837
        %v1577 = vunpack.c.h.b16 %v837
        %v1578 = vunpack.c.l.b16 %v838
        %v1579 = vunpack.c.h.b16 %v838
        %v1580 = vunpack.c.l.b16 %v839
        %v1581 = vunpack.c.h.b16 %v839
        %v1582 = vunpack.c.l.b16 %v840
        %v1583 = vunpack.c.h.b16 %v840
        %v1584 = vunpack.c.l.b16 %v841
        %v1585 = vunpack.c.h.b16 %v841
        %v1586 = vunpack.c.l.b16 %v842
        %v1587 = vunpack.c.h.b16 %v842
        %v1588 = vunpack.c.l.b16 %v843
        %v1589 = vunpack.c.h.b16 %v843
        %v1590 = vunpack.c.l.b16 %v844
        %v1591 = vunpack.c.h.b16 %v844
        %v1592 = vunpack.c.l.b16 %v845
        %v1593 = vunpack.c.h.b16 %v845
        %v1594 = vunpack.c.l.b16 %v846
        %v1595 = vunpack.c.h.b16 %v846
        %v1596 = vunpack.c.l.b16 %v847
        %v1597 = vunpack.c.h.b16 %v847
        %v1598 = vunpack.c.l.b16 %v848
        %v1599 = vunpack.c.h.b16 %v848
        %v1600 = vunpack.c.l.b16 %v849
        %v1601 = vunpack.c.h.b16 %v849
        %v1602 = vunpack.c.l.b16 %v850
        %v1603 = vunpack.c.h.b16 %v850
        %v1604 = vunpack.c.l.b16 %v851
        %v1605 = vunpack.c.h.b16 %v851
        %v1606 = vunpack.c.l.b16 %v852
        %v1607 = vunpack.c.h.b16 %v852
        %v1608 = vunpack.c.l.b16 %v853
        %v1609 = vunpack.c.h.b16 %v853
        %v1610 = vunpack.c.l.b16 %v854
        %v1611 = vunpack.c.h.b16 %v854
        %v1612 = vunpack.c.l.b16 %v855
        %v1613 = vunpack.c.h.b16 %v855
        %v1614 = vunpack.c.l.b16 %v856
        %v1615 = vunpack.c.h.b16 %v856
        %v1616 = vunpack.c.l.b16 %v857
        %v1617 = vunpack.c.h.b16 %v857
        %v1618 = vunpack.c.l.b16 %v858
        %v1619 = vunpack.c.h.b16 %v858
        %v1620 = vunpack.c.l.b16 %v859
        %v1621 = vunpack.c.h.b16 %v859
        %v1622 = vunpack.c.l.b16 %v860
        %v1623 = vunpack.c.h.b16 %v860
        %v1624 = vunpack.c.l.b16 %v861
        %v1625 = vunpack.c.h.b16 %v861
        %v1626 = vunpack.c.l.b16 %v862
        %v1627 = vunpack.c.h.b16 %v862
        %v1628 = vunpack.c.l.b16 %v863
        %v1629 = vunpack.c.h.b16 %v863
        %v1630 = vunpack.c.l.b16 %v864
        %v1631 = vunpack.c.h.b16 %v864
        %v1632 = vunpack.c.l.b16 %v865
        %v1633 = vunpack.c.h.b16 %v865
        %v1634 = vunpack.c.l.b16 %v866
        %v1635 = vunpack.c.h.b16 %v866
        %v1636 = vunpack.c.l.b16 %v867
        %v1637 = vunpack.c.h.b16 %v867
        %v1638 = vunpack.c.l.b16 %v868
        %v1639 = vunpack.c.h.b16 %v868
        %v1640 = vunpack.c.l.b16 %v869
        %v1641 = vunpack.c.h.b16 %v869
        %v1642 = vunpack.c.l.b16 %v870
        %v1643 = vunpack.c.h.b16 %v870
        %v1644 = vunpack.c.l.b16 %v871
        %v1645 = vunpack.c.h.b16 %v871
        %v1646 = vunpack.c.l.b16 %v872
        %v1647 = vunpack.c.h.b16 %v872
        %v1648 = vunpack.c.l.b16 %v873
        %v1649 = vunpack.c.h.b16 %v873
        %v1650 = vunpack.c.l.b16 %v874
        %v1651 = vunpack.c.h.b16 %v874
        %v1652 = vunpack.c.l.b16 %v875
        %v1653 = vunpack.c.h.b16 %v875
        %v1654 = vunpack.c.l.b16 %v876
        %v1655 = vunpack.c.h.b16 %v876
        %v1656 = vunpack.c.l.b16 %v877
        %v1657 = vunpack.c.h.b16 %v877
        %v1658 = vunpack.c.l.b16 %v878
        %v1659 = vunpack.c.h.b16 %v878
        %v1660 = vunpack.c.l.b16 %v879
        %v1661 = vunpack.c.h.b16 %v879
        %v1662 = vunpack.c.l.b16 %v880
        %v1663 = vunpack.c.h.b16 %v880
        %v1664 = vunpack.c.l.b16 %v881
        %v1665 = vunpack.c.h.b16 %v881
        %v1666 = vunpack.c.l.b16 %v882
        %v1667 = vunpack.c.h.b16 %v882
        %v1668 = vunpack.c.l.b16 %v883
        %v1669 = vunpack.c.h.b16 %v883
        %v1670 = vunpack.c.l.b16 %v884
        %v1671 = vunpack.c.h.b16 %v884
        %v1672 = vunpack.c.l.b16 %v885
        %v1673 = vunpack.c.h.b16 %v885
        %v1674 = vunpack.c.l.b16 %v886
        %v1675 = vunpack.c.h.b16 %v886
        %v1676 = vunpack.c.l.b16 %v887
        %v1677 = vunpack.c.h.b16 %v887
        %v1678 = vpack.c.b16 %v1170, %v1166
        %v1679 = vpack.c.b16 %v1171, %v1167
        %v1680 = vpack.c.b16 %v1172, %v1168
        %v1681 = vpack.c.b16 %v1173, %v1169
        %v1682 = vpack.c.b16 %v1178, %v1174
        %v1683 = vpack.c.b16 %v1179, %v1175
        %v1684 = vpack.c.b16 %v1180, %v1176
        %v1685 = vpack.c.b16 %v1181, %v1177
        %v1686 = vpack.c.b16 %v1186, %v1182
        %v1687 = vpack.c.b16 %v1187, %v1183
        %v1688 = vpack.c.b16 %v1188, %v1184
        %v1689 = vpack.c.b16 %v1189, %v1185
        %v1690 = vpack.c.b16 %v1194, %v1190
        %v1691 = vpack.c.b16 %v1195, %v1191
        %v1692 = vpack.c.b16 %v1196, %v1192
        %v1693 = vpack.c.b16 %v1197, %v1193
        %v1694 = vpack.c.b16 %v1202, %v1198
        %v1695 = vpack.c.b16 %v1203, %v1199
        %v1696 = vpack.c.b16 %v1204, %v1200
        %v1697 = vpack.c.b16 %v1205, %v1201
        %v1698 = vpack.c.b16 %v1210, %v1206
        %v1699 = vpack.c.b16 %v1211, %v1207
        %v1700 = vpack.c.b16 %v1212, %v1208
        %v1701 = vpack.c.b16 %v1213, %v1209
        %v1702 = vpack.c.b16 %v1218, %v1214
        %v1703 = vpack.c.b16 %v1219, %v1215
        %v1704 = vpack.c.b16 %v1220, %v1216
        %v1705 = vpack.c.b16 %v1221, %v1217
        %v1706 = vpack.c.b16 %v1226, %v1222
        %v1707 = vpack.c.b16 %v1227, %v1223
        %v1708 = vpack.c.b16 %v1228, %v1224
        %v1709 = vpack.c.b16 %v1229, %v1225
        %v1710 = vpack.c.b16 %v1234, %v1230
        %v1711 = vpack.c.b16 %v1235, %v1231
        %v1712 = vpack.c.b16 %v1236, %v1232
        %v1713 = vpack.c.b16 %v1237, %v1233
        %v1714 = vpack.c.b16 %v1242, %v1238
        %v1715 = vpack.c.b16 %v1243, %v1239
        %v1716 = vpack.c.b16 %v1244, %v1240
        %v1717 = vpack.c.b16 %v1245, %v1241
        %v1718 = vpack.c.b16 %v1250, %v1246
        %v1719 = vpack.c.b16 %v1251, %v1247
        %v1720 = vpack.c.b16 %v1252, %v1248
        %v1721 = vpack.c.b16 %v1253, %v1249
        %v1722 = vpack.c.b16 %v1258, %v1254
        %v1723 = vpack.c.b16 %v1259, %v1255
        %v1724 = vpack.c.b16 %v1260, %v1256
        %v1725 = vpack.c.b16 %v1261, %v1257
        %v1726 = vpack.c.b16 %v1266, %v1262
        %v1727 = vpack.c.b16 %v1267, %v1263
        %v1728 = vpack.c.b16 %v1268, %v1264
        %v1729 = vpack.c.b16 %v1269, %v1265
        %v1730 = vpack.c.b16 %v1274, %v1270
        %v1731 = vpack.c.b16 %v1275, %v1271
        %v1732 = vpack.c.b16 %v1276, %v1272
        %v1733 = vpack.c.b16 %v1277, %v1273
        %v1734 = vpack.c.b16 %v1282, %v1278
        %v1735 = vpack.c.b16 %v1283, %v1279
        %v1736 = vpack.c.b16 %v1284, %v1280
        %v1737 = vpack.c.b16 %v1285, %v1281
        %v1738 = vpack.c.b16 %v1290, %v1286
        %v1739 = vpack.c.b16 %v1291, %v1287
        %v1740 = vpack.c.b16 %v1292, %v1288
        %v1741 = vpack.c.b16 %v1293, %v1289
        %v1742 = vpack.c.b16 %v1298, %v1294
        %v1743 = vpack.c.b16 %v1299, %v1295
        %v1744 = vpack.c.b16 %v1300, %v1296
        %v1745 = vpack.c.b16 %v1301, %v1297
        %v1746 = vpack.c.b16 %v1306, %v1302
        %v1747 = vpack.c.b16 %v1307, %v1303
        %v1748 = vpack.c.b16 %v1308, %v1304
        %v1749 = vpack.c.b16 %v1309, %v1305
        %v1750 = vpack.c.b16 %v1314, %v1310
        %v1751 = vpack.c.b16 %v1315, %v1311
        %v1752 = vpack.c.b16 %v1316, %v1312
        %v1753 = vpack.c.b16 %v1317, %v1313
        %v1754 = vpack.c.b16 %v1322, %v1318
        %v1755 = vpack.c.b16 %v1323, %v1319
        %v1756 = vpack.c.b16 %v1324, %v1320
        %v1757 = vpack.c.b16 %v1325, %v1321
        %v1758 = vpack.c.b16 %v1330, %v1326
        %v1759 = vpack.c.b16 %v1331, %v1327
        %v1760 = vpack.c.b16 %v1332, %v1328
        %v1761 = vpack.c.b16 %v1333, %v1329
        %v1762 = vpack.c.b16 %v1338, %v1334
        %v1763 = vpack.c.b16 %v1339, %v1335
        %v1764 = vpack.c.b16 %v1340, %v1336
        %v1765 = vpack.c.b16 %v1341, %v1337
        %v1766 = vpack.c.b16 %v1346, %v1342
        %v1767 = vpack.c.b16 %v1347, %v1343
        %v1768 = vpack.c.b16 %v1348, %v1344
        %v1769 = vpack.c.b16 %v1349, %v1345
        %v1770 = vpack.c.b16 %v1354, %v1350
        %v1771 = vpack.c.b16 %v1355, %v1351
        %v1772 = vpack.c.b16 %v1356, %v1352
        %v1773 = vpack.c.b16 %v1357, %v1353
        %v1774 = vpack.c.b16 %v1362, %v1358
        %v1775 = vpack.c.b16 %v1363, %v1359
        %v1776 = vpack.c.b16 %v1364, %v1360
        %v1777 = vpack.c.b16 %v1365, %v1361
        %v1778 = vpack.c.b16 %v1370, %v1366
        %v1779 = vpack.c.b16 %v1371, %v1367
        %v1780 = vpack.c.b16 %v1372, %v1368
        %v1781 = vpack.c.b16 %v1373, %v1369
        %v1782 = vpack.c.b16 %v1378, %v1374
        %v1783 = vpack.c.b16 %v1379, %v1375
        %v1784 = vpack.c.b16 %v1380, %v1376
        %v1785 = vpack.c.b16 %v1381, %v1377
        %v1786 = vpack.c.b16 %v1386, %v1382
        %v1787 = vpack.c.b16 %v1387, %v1383
        %v1788 = vpack.c.b16 %v1388, %v1384
        %v1789 = vpack.c.b16 %v1389, %v1385
        %v1790 = vpack.c.b16 %v1394, %v1390
        %v1791 = vpack.c.b16 %v1395, %v1391
        %v1792 = vpack.c.b16 %v1396, %v1392
        %v1793 = vpack.c.b16 %v1397, %v1393
        %v1794 = vpack.c.b16 %v1402, %v1398
        %v1795 = vpack.c.b16 %v1403, %v1399
        %v1796 = vpack.c.b16 %v1404, %v1400
        %v1797 = vpack.c.b16 %v1405, %v1401
        %v1798 = vpack.c.b16 %v1410, %v1406
        %v1799 = vpack.c.b16 %v1411, %v1407
        %v1800 = vpack.c.b16 %v1412, %v1408
        %v1801 = vpack.c.b16 %v1413, %v1409
        %v1802 = vpack.c.b16 %v1418, %v1414
        %v1803 = vpack.c.b16 %v1419, %v1415
        %v1804 = vpack.c.b16 %v1420, %v1416
        %v1805 = vpack.c.b16 %v1421, %v1417
        %v1806 = vpack.c.b16 %v1426, %v1422
        %v1807 = vpack.c.b16 %v1427, %v1423
        %v1808 = vpack.c.b16 %v1428, %v1424
        %v1809 = vpack.c.b16 %v1429, %v1425
        %v1810 = vpack.c.b16 %v1434, %v1430
        %v1811 = vpack.c.b16 %v1435, %v1431
        %v1812 = vpack.c.b16 %v1436, %v1432
        %v1813 = vpack.c.b16 %v1437, %v1433
        %v1814 = vpack.c.b16 %v1442, %v1438
        %v1815 = vpack.c.b16 %v1443, %v1439
        %v1816 = vpack.c.b16 %v1444, %v1440
        %v1817 = vpack.c.b16 %v1445, %v1441
        %v1818 = vpack.c.b16 %v1450, %v1446
        %v1819 = vpack.c.b16 %v1451, %v1447
        %v1820 = vpack.c.b16 %v1452, %v1448
        %v1821 = vpack.c.b16 %v1453, %v1449
        %v1822 = vpack.c.b16 %v1458, %v1454
        %v1823 = vpack.c.b16 %v1459, %v1455
        %v1824 = vpack.c.b16 %v1460, %v1456
        %v1825 = vpack.c.b16 %v1461, %v1457
        %v1826 = vpack.c.b16 %v1466, %v1462
        %v1827 = vpack.c.b16 %v1467, %v1463
        %v1828 = vpack.c.b16 %v1468, %v1464
        %v1829 = vpack.c.b16 %v1469, %v1465
        %v1830 = vpack.c.b16 %v1474, %v1470
        %v1831 = vpack.c.b16 %v1475, %v1471
        %v1832 = vpack.c.b16 %v1476, %v1472
        %v1833 = vpack.c.b16 %v1477, %v1473
        %v1834 = vpack.c.b16 %v1482, %v1478
        %v1835 = vpack.c.b16 %v1483, %v1479
        %v1836 = vpack.c.b16 %v1484, %v1480
        %v1837 = vpack.c.b16 %v1485, %v1481
        %v1838 = vpack.c.b16 %v1490, %v1486
        %v1839 = vpack.c.b16 %v1491, %v1487
        %v1840 = vpack.c.b16 %v1492, %v1488
        %v1841 = vpack.c.b16 %v1493, %v1489
        %v1842 = vpack.c.b16 %v1498, %v1494
        %v1843 = vpack.c.b16 %v1499, %v1495
        %v1844 = vpack.c.b16 %v1500, %v1496
        %v1845 = vpack.c.b16 %v1501, %v1497
        %v1846 = vpack.c.b16 %v1506, %v1502
        %v1847 = vpack.c.b16 %v1507, %v1503
        %v1848 = vpack.c.b16 %v1508, %v1504
        %v1849 = vpack.c.b16 %v1509, %v1505
        %v1850 = vpack.c.b16 %v1514, %v1510
        %v1851 = vpack.c.b16 %v1515, %v1511
        %v1852 = vpack.c.b16 %v1516, %v1512
        %v1853 = vpack.c.b16 %v1517, %v1513
        %v1854 = vpack.c.b16 %v1522, %v1518
        %v1855 = vpack.c.b16 %v1523, %v1519
        %v1856 = vpack.c.b16 %v1524, %v1520
        %v1857 = vpack.c.b16 %v1525, %v1521
        %v1858 = vpack.c.b16 %v1530, %v1526
        %v1859 = vpack.c.b16 %v1531, %v1527
        %v1860 = vpack.c.b16 %v1532, %v1528
        %v1861 = vpack.c.b16 %v1533, %v1529
        %v1862 = vpack.c.b16 %v1538, %v1534
        %v1863 = vpack.c.b16 %v1539, %v1535
        %v1864 = vpack.c.b16 %v1540, %v1536
        %v1865 = vpack.c.b16 %v1541, %v1537
        %v1866 = vpack.c.b16 %v1546, %v1542
        %v1867 = vpack.c.b16 %v1547, %v1543
        %v1868 = vpack.c.b16 %v1548, %v1544
        %v1869 = vpack.c.b16 %v1549, %v1545
        %v1870 = vpack.c.b16 %v1554, %v1550
        %v1871 = vpack.c.b16 %v1555, %v1551
        %v1872 = vpack.c.b16 %v1556, %v1552
        %v1873 = vpack.c.b16 %v1557, %v1553
        %v1874 = vpack.c.b16 %v1562, %v1558
        %v1875 = vpack.c.b16 %v1563, %v1559
        %v1876 = vpack.c.b16 %v1564, %v1560
        %v1877 = vpack.c.b16 %v1565, %v1561
        %v1878 = vpack.c.b16 %v1570, %v1566
        %v1879 = vpack.c.b16 %v1571, %v1567
        %v1880 = vpack.c.b16 %v1572, %v1568
        %v1881 = vpack.c.b16 %v1573, %v1569
        %v1882 = vpack.c.b16 %v1578, %v1574
        %v1883 = vpack.c.b16 %v1579, %v1575
        %v1884 = vpack.c.b16 %v1580, %v1576
        %v1885 = vpack.c.b16 %v1581, %v1577
        %v1886 = vpack.c.b16 %v1586, %v1582
        %v1887 = vpack.c.b16 %v1587, %v1583
        %v1888 = vpack.c.b16 %v1588, %v1584
        %v1889 = vpack.c.b16 %v1589, %v1585
        %v1890 = vpack.c.b16 %v1594, %v1590
        %v1891 = vpack.c.b16 %v1595, %v1591
        %v1892 = vpack.c.b16 %v1596, %v1592
        %v1893 = vpack.c.b16 %v1597, %v1593
        %v1894 = vpack.c.b16 %v1602, %v1598
        %v1895 = vpack.c.b16 %v1603, %v1599
        %v1896 = vpack.c.b16 %v1604, %v1600
        %v1897 = vpack.c.b16 %v1605, %v1601
        %v1898 = vpack.c.b16 %v1610, %v1606
        %v1899 = vpack.c.b16 %v1611, %v1607
        %v1900 = vpack.c.b16 %v1612, %v1608
        %v1901 = vpack.c.b16 %v1613, %v1609
        %v1902 = vpack.c.b16 %v1618, %v1614
        %v1903 = vpack.c.b16 %v1619, %v1615
        %v1904 = vpack.c.b16 %v1620, %v1616
        %v1905 = vpack.c.b16 %v1621, %v1617
        %v1906 = vpack.c.b16 %v1626, %v1622
        %v1907 = vpack.c.b16 %v1627, %v1623
        %v1908 = vpack.c.b16 %v1628, %v1624
        %v1909 = vpack.c.b16 %v1629, %v1625
        %v1910 = vpack.c.b16 %v1634, %v1630
        %v1911 = vpack.c.b16 %v1635, %v1631
        %v1912 = vpack.c.b16 %v1636, %v1632
        %v1913 = vpack.c.b16 %v1637, %v1633
        %v1914 = vpack.c.b16 %v1642, %v1638
        %v1915 = vpack.c.b16 %v1643, %v1639
        %v1916 = vpack.c.b16 %v1644, %v1640
        %v1917 = vpack.c.b16 %v1645, %v1641
        %v1918 = vpack.c.b16 %v1650, %v1646
        %v1919 = vpack.c.b16 %v1651, %v1647
        %v1920 = vpack.c.b16 %v1652, %v1648
        %v1921 = vpack.c.b16 %v1653, %v1649
        %v1922 = vpack.c.b16 %v1658, %v1654
        %v1923 = vpack.c.b16 %v1659, %v1655
        %v1924 = vpack.c.b16 %v1660, %v1656
        %v1925 = vpack.c.b16 %v1661, %v1657
        %v1926 = vpack.c.b16 %v1666, %v1662
        %v1927 = vpack.c.b16 %v1667, %v1663
        %v1928 = vpack.c.b16 %v1668, %v1664
        %v1929 = vpack.c.b16 %v1669, %v1665
        %v1930 = vpack.c.b16 %v1674, %v1670
        %v1931 = vpack.c.b16 %v1675, %v1671
        %v1932 = vpack.c.b16 %v1676, %v1672
        %v1933 = vpack.c.b16 %v1677, %v1673
        %2190 = vmatprep.subr.bf16.mxu0 %v1679
        %2191 = vmatpush1.bf16.msra.mxu0 %v1678
        %2192 = vmatprep.subr.bf16.mxu0 %v1683
        %2193 = vmatpush1.bf16.msra.mxu0 %v1682
        %2194 = vmatprep.subr.bf16.mxu0 %v1687
        %2195 = vmatpush1.bf16.msra.mxu0 %v1686
        %2196 = vmatprep.subr.bf16.mxu0 %v1691
        %2197 = vmatpush1.bf16.msra.mxu0 %v1690
        %2198 = vmatprep.subr.bf16.mxu0 %v1695
        %2199 = vmatpush1.bf16.msra.mxu0 %v1694
        %2200 = vmatprep.subr.bf16.mxu0 %v1699
        %2201 = vmatpush1.bf16.msra.mxu0 %v1698
        %2202 = vmatprep.subr.bf16.mxu0 %v1703
        %2203 = vmatpush1.bf16.msra.mxu0 %v1702
        %2204 = vmatprep.subr.bf16.mxu0 %v1707
        %2205 = vmatpush1.bf16.msra.mxu0 %v1706
        %2206 = vmatprep.subr.bf16.mxu0 %v1711
        %2207 = vmatpush1.bf16.msra.mxu0 %v1710
        %2208 = vmatprep.subr.bf16.mxu0 %v1715
        %2209 = vmatpush1.bf16.msra.mxu0 %v1714
        %2210 = vmatprep.subr.bf16.mxu0 %v1719
        %2211 = vmatpush1.bf16.msra.mxu0 %v1718
        %2212 = vmatprep.subr.bf16.mxu0 %v1723
        %2213 = vmatpush1.bf16.msra.mxu0 %v1722
        %2214 = vmatprep.subr.bf16.mxu0 %v1727
        %2215 = vmatpush1.bf16.msra.mxu0 %v1726
        %2216 = vmatprep.subr.bf16.mxu0 %v1731
        %2217 = vmatpush1.bf16.msra.mxu0 %v1730
        %2218 = vmatprep.subr.bf16.mxu0 %v1735
        %2219 = vmatpush1.bf16.msra.mxu0 %v1734
        %2220 = vmatprep.subr.bf16.mxu0 %v1739
        %2221 = vmatpush1.bf16.msra.mxu0 %v1738
        %2222 = vmatprep.mubr.bf16.mxu0 %v625
        %2223 = vmatmul.mubr.bf16.gmra.mrb[0].mxu0 %v624
        %v2224 = vpop.f32.mrb[0].mxu0
        %v2225 = vadd.f32 %v893, %v2224
        %v2226 = vpop.f32.mrb[0].mxu0
        %v2227 = vadd.f32 %v897, %v2226
        %v2228 = vpop.f32.mrb[0].mxu0
        %v2229 = vpop.f32.mrb[0].mxu0
        %2230 = vdwg.mxu0
        %2231 = vmatprep.subr.bf16.mxu0 %v1743
        %2232 = vmatpush1.bf16.msra.mxu0 %v1742
        %2233 = vmatprep.subr.bf16.mxu0 %v1747
        %2234 = vmatpush1.bf16.msra.mxu0 %v1746
        %2235 = vmatprep.subr.bf16.mxu0 %v1751
        %2236 = vmatpush1.bf16.msra.mxu0 %v1750
        %2237 = vmatprep.subr.bf16.mxu0 %v1755
        %2238 = vmatpush1.bf16.msra.mxu0 %v1754
        %2239 = vmatprep.subr.bf16.mxu0 %v1759
        %2240 = vmatpush1.bf16.msra.mxu0 %v1758
        %2241 = vmatprep.subr.bf16.mxu0 %v1763
        %2242 = vmatpush1.bf16.msra.mxu0 %v1762
        %2243 = vmatprep.subr.bf16.mxu0 %v1767
        %2244 = vmatpush1.bf16.msra.mxu0 %v1766
        %2245 = vmatprep.subr.bf16.mxu0 %v1771
        %2246 = vmatpush1.bf16.msra.mxu0 %v1770
        %2247 = vmatprep.subr.bf16.mxu0 %v1775
        %2248 = vmatpush1.bf16.msra.mxu0 %v1774
        %2249 = vmatprep.subr.bf16.mxu0 %v1779
        %2250 = vmatpush1.bf16.msra.mxu0 %v1778
        %2251 = vmatprep.subr.bf16.mxu0 %v1783
        %2252 = vmatpush1.bf16.msra.mxu0 %v1782
        %2253 = vmatprep.subr.bf16.mxu0 %v1787
        %2254 = vmatpush1.bf16.msra.mxu0 %v1786
        %2255 = vmatprep.subr.bf16.mxu0 %v1791
        %2256 = vmatpush1.bf16.msra.mxu0 %v1790
        %2257 = vmatprep.subr.bf16.mxu0 %v1795
        %2258 = vmatpush1.bf16.msra.mxu0 %v1794
        %2259 = vmatprep.subr.bf16.mxu0 %v1799
        %2260 = vmatpush1.bf16.msra.mxu0 %v1798
        %2261 = vmatprep.subr.bf16.mxu0 %v1803
        %2262 = vmatpush1.bf16.msra.mxu0 %v1802
        %2263 = vmatprep.mubr.bf16.mxu0 %v627
        %2264 = vmatmul.mubr.bf16.gmra.mrb[0].mxu0 %v626
        %v2265 = vpop.f32.mrb[0].mxu0
        %v2266 = vadd.f32 %v2225, %v2265
        %v2267 = vpop.f32.mrb[0].mxu0
        %v2268 = vadd.f32 %v2227, %v2267
        %v2269 = vpop.f32.mrb[0].mxu0
        %v2270 = vpop.f32.mrb[0].mxu0
        %2271 = vdwg.mxu0
        %2272 = vmatprep.subr.bf16.mxu0 %v1807
        %2273 = vmatpush1.bf16.msra.mxu0 %v1806
        %2274 = vmatprep.subr.bf16.mxu0 %v1811
        %2275 = vmatpush1.bf16.msra.mxu0 %v1810
        %2276 = vmatprep.subr.bf16.mxu0 %v1815
        %2277 = vmatpush1.bf16.msra.mxu0 %v1814
        %2278 = vmatprep.subr.bf16.mxu0 %v1819
        %2279 = vmatpush1.bf16.msra.mxu0 %v1818
        %2280 = vmatprep.subr.bf16.mxu0 %v1823
        %2281 = vmatpush1.bf16.msra.mxu0 %v1822
        %2282 = vmatprep.subr.bf16.mxu0 %v1827
        %2283 = vmatpush1.bf16.msra.mxu0 %v1826
        %2284 = vmatprep.subr.bf16.mxu0 %v1831
        %2285 = vmatpush1.bf16.msra.mxu0 %v1830
        %2286 = vmatprep.subr.bf16.mxu0 %v1835
        %2287 = vmatpush1.bf16.msra.mxu0 %v1834
        %2288 = vmatprep.subr.bf16.mxu0 %v1839
        %2289 = vmatpush1.bf16.msra.mxu0 %v1838
        %2290 = vmatprep.subr.bf16.mxu0 %v1843
        %2291 = vmatpush1.bf16.msra.mxu0 %v1842
        %2292 = vmatprep.subr.bf16.mxu0 %v1847
        %2293 = vmatpush1.bf16.msra.mxu0 %v1846
        %2294 = vmatprep.subr.bf16.mxu0 %v1851
        %2295 = vmatpush1.bf16.msra.mxu0 %v1850
        %2296 = vmatprep.subr.bf16.mxu0 %v1855
        %2297 = vmatpush1.bf16.msra.mxu0 %v1854
        %2298 = vmatprep.subr.bf16.mxu0 %v1859
        %2299 = vmatpush1.bf16.msra.mxu0 %v1858
        %2300 = vmatprep.subr.bf16.mxu0 %v1863
        %2301 = vmatpush1.bf16.msra.mxu0 %v1862
        %2302 = vmatprep.subr.bf16.mxu0 %v1867
        %2303 = vmatpush1.bf16.msra.mxu0 %v1866
        %2304 = vmatprep.mubr.bf16.mxu0 %v629
        %2305 = vmatmul.mubr.bf16.gmra.mrb[0].mxu0 %v628
        %v2306 = vpop.f32.mrb[0].mxu0
        %v2307 = vadd.f32 %v2266, %v2306
        %v2308 = vpop.f32.mrb[0].mxu0
        %v2309 = vadd.f32 %v2268, %v2308
        %v2310 = vpop.f32.mrb[0].mxu0
        %v2311 = vpop.f32.mrb[0].mxu0
        %2312 = vdwg.mxu0
        %2313 = vmatprep.subr.bf16.mxu0 %v1871
        %2314 = vmatpush1.bf16.msra.mxu0 %v1870
        %2315 = vmatprep.subr.bf16.mxu0 %v1875
        %2316 = vmatpush1.bf16.msra.mxu0 %v1874
        %2317 = vmatprep.subr.bf16.mxu0 %v1879
        %2318 = vmatpush1.bf16.msra.mxu0 %v1878
        %2319 = vmatprep.subr.bf16.mxu0 %v1883
        %2320 = vmatpush1.bf16.msra.mxu0 %v1882
        %2321 = vmatprep.subr.bf16.mxu0 %v1887
        %2322 = vmatpush1.bf16.msra.mxu0 %v1886
        %2323 = vmatprep.subr.bf16.mxu0 %v1891
        %2324 = vmatpush1.bf16.msra.mxu0 %v1890
        %2325 = vmatprep.subr.bf16.mxu0 %v1895
        %2326 = vmatpush1.bf16.msra.mxu0 %v1894
        %2327 = vmatprep.subr.bf16.mxu0 %v1899
        %2328 = vmatpush1.bf16.msra.mxu0 %v1898
        %2329 = vmatprep.subr.bf16.mxu0 %v1903
        %2330 = vmatpush1.bf16.msra.mxu0 %v1902
        %2331 = vmatprep.subr.bf16.mxu0 %v1907
        %2332 = vmatpush1.bf16.msra.mxu0 %v1906
        %2333 = vmatprep.subr.bf16.mxu0 %v1911
        %2334 = vmatpush1.bf16.msra.mxu0 %v1910
        %2335 = vmatprep.subr.bf16.mxu0 %v1915
        %2336 = vmatpush1.bf16.msra.mxu0 %v1914
        %2337 = vmatprep.subr.bf16.mxu0 %v1919
        %2338 = vmatpush1.bf16.msra.mxu0 %v1918
        %2339 = vmatprep.subr.bf16.mxu0 %v1923
        %2340 = vmatpush1.bf16.msra.mxu0 %v1922
        %2341 = vmatprep.subr.bf16.mxu0 %v1927
        %2342 = vmatpush1.bf16.msra.mxu0 %v1926
        %2343 = vmatprep.subr.bf16.mxu0 %v1931
        %2344 = vmatpush1.bf16.msra.mxu0 %v1930
        %2345 = vmatprep.mubr.bf16.mxu0 %v631
        %2346 = vmatmul.mubr.bf16.gmra.mrb[0].mxu0 %v630
        %v2347 = vpop.f32.mrb[0].mxu0
        %v2348 = vadd.f32 %v2307, %v2347
        %v2349 = vpop.f32.mrb[0].mxu0
        %v2350 = vadd.f32 %v2309, %v2349
        %v2351 = vpop.f32.mrb[0].mxu0
        %v2352 = vpop.f32.mrb[0].mxu0
        %2353 = vdwg.mxu0
        %2354 = vmatprep.subr.bf16.mxu0 %v1681
        %2355 = vmatpush1.bf16.msra.mxu0 %v1680
        %2356 = vmatprep.subr.bf16.mxu0 %v1685
        %2357 = vmatpush1.bf16.msra.mxu0 %v1684
        %2358 = vmatprep.subr.bf16.mxu0 %v1689
        %2359 = vmatpush1.bf16.msra.mxu0 %v1688
        %2360 = vmatprep.subr.bf16.mxu0 %v1693
        %2361 = vmatpush1.bf16.msra.mxu0 %v1692
        %2362 = vmatprep.subr.bf16.mxu0 %v1697
        %2363 = vmatpush1.bf16.msra.mxu0 %v1696
        %2364 = vmatprep.subr.bf16.mxu0 %v1701
        %2365 = vmatpush1.bf16.msra.mxu0 %v1700
        %2366 = vmatprep.subr.bf16.mxu0 %v1705
        %2367 = vmatpush1.bf16.msra.mxu0 %v1704
        %2368 = vmatprep.subr.bf16.mxu0 %v1709
        %2369 = vmatpush1.bf16.msra.mxu0 %v1708
        %2370 = vmatprep.subr.bf16.mxu0 %v1713
        %2371 = vmatpush1.bf16.msra.mxu0 %v1712
        %2372 = vmatprep.subr.bf16.mxu0 %v1717
        %2373 = vmatpush1.bf16.msra.mxu0 %v1716
        %2374 = vmatprep.subr.bf16.mxu0 %v1721
        %2375 = vmatpush1.bf16.msra.mxu0 %v1720
        %2376 = vmatprep.subr.bf16.mxu0 %v1725
        %2377 = vmatpush1.bf16.msra.mxu0 %v1724
        %2378 = vmatprep.subr.bf16.mxu0 %v1729
        %2379 = vmatpush1.bf16.msra.mxu0 %v1728
        %2380 = vmatprep.subr.bf16.mxu0 %v1733
        %2381 = vmatpush1.bf16.msra.mxu0 %v1732
        %2382 = vmatprep.subr.bf16.mxu0 %v1737
        %2383 = vmatpush1.bf16.msra.mxu0 %v1736
        %2384 = vmatprep.subr.bf16.mxu0 %v1741
        %2385 = vmatpush1.bf16.msra.mxu0 %v1740
        %2386 = vmatprep.mubr.bf16.mxu0 %v625
        %2387 = vmatmul.mubr.bf16.gmra.mrb[0].mxu0 %v624
        %v2388 = vpop.f32.mrb[0].mxu0
        %v2389 = vadd.f32 %v901, %v2388
        %v2390 = vpop.f32.mrb[0].mxu0
        %v2391 = vadd.f32 %v905, %v2390
        %v2392 = vpop.f32.mrb[0].mxu0
        %v2393 = vpop.f32.mrb[0].mxu0
        %2394 = vdwg.mxu0
        %2395 = vmatprep.subr.bf16.mxu0 %v1745
        %2396 = vmatpush1.bf16.msra.mxu0 %v1744
        %2397 = vmatprep.subr.bf16.mxu0 %v1749
        %2398 = vmatpush1.bf16.msra.mxu0 %v1748
        %2399 = vmatprep.subr.bf16.mxu0 %v1753
        %2400 = vmatpush1.bf16.msra.mxu0 %v1752
        %2401 = vmatprep.subr.bf16.mxu0 %v1757
        %2402 = vmatpush1.bf16.msra.mxu0 %v1756
        %2403 = vmatprep.subr.bf16.mxu0 %v1761
        %2404 = vmatpush1.bf16.msra.mxu0 %v1760
        %2405 = vmatprep.subr.bf16.mxu0 %v1765
        %2406 = vmatpush1.bf16.msra.mxu0 %v1764
        %2407 = vmatprep.subr.bf16.mxu0 %v1769
        %2408 = vmatpush1.bf16.msra.mxu0 %v1768
        %2409 = vmatprep.subr.bf16.mxu0 %v1773
        %2410 = vmatpush1.bf16.msra.mxu0 %v1772
        %2411 = vmatprep.subr.bf16.mxu0 %v1777
        %2412 = vmatpush1.bf16.msra.mxu0 %v1776
        %2413 = vmatprep.subr.bf16.mxu0 %v1781
        %2414 = vmatpush1.bf16.msra.mxu0 %v1780
        %2415 = vmatprep.subr.bf16.mxu0 %v1785
        %2416 = vmatpush1.bf16.msra.mxu0 %v1784
        %2417 = vmatprep.subr.bf16.mxu0 %v1789
        %2418 = vmatpush1.bf16.msra.mxu0 %v1788
        %2419 = vmatprep.subr.bf16.mxu0 %v1793
        %2420 = vmatpush1.bf16.msra.mxu0 %v1792
        %2421 = vmatprep.subr.bf16.mxu0 %v1797
        %2422 = vmatpush1.bf16.msra.mxu0 %v1796
        %2423 = vmatprep.subr.bf16.mxu0 %v1801
        %2424 = vmatpush1.bf16.msra.mxu0 %v1800
        %2425 = vmatprep.subr.bf16.mxu0 %v1805
        %2426 = vmatpush1.bf16.msra.mxu0 %v1804
        %2427 = vmatprep.mubr.bf16.mxu0 %v627
        %2428 = vmatmul.mubr.bf16.gmra.mrb[0].mxu0 %v626
        %v2429 = vpop.f32.mrb[0].mxu0
        %v2430 = vadd.f32 %v2389, %v2429
        %v2431 = vpop.f32.mrb[0].mxu0
        %v2432 = vadd.f32 %v2391, %v2431
        %v2433 = vpop.f32.mrb[0].mxu0
        %v2434 = vpop.f32.mrb[0].mxu0
        %2435 = vdwg.mxu0
        %2436 = vmatprep.subr.bf16.mxu0 %v1809
        %2437 = vmatpush1.bf16.msra.mxu0 %v1808
        %2438 = vmatprep.subr.bf16.mxu0 %v1813
        %2439 = vmatpush1.bf16.msra.mxu0 %v1812
        %2440 = vmatprep.subr.bf16.mxu0 %v1817
        %2441 = vmatpush1.bf16.msra.mxu0 %v1816
        %2442 = vmatprep.subr.bf16.mxu0 %v1821
        %2443 = vmatpush1.bf16.msra.mxu0 %v1820
        %2444 = vmatprep.subr.bf16.mxu0 %v1825
        %2445 = vmatpush1.bf16.msra.mxu0 %v1824
        %2446 = vmatprep.subr.bf16.mxu0 %v1829
        %2447 = vmatpush1.bf16.msra.mxu0 %v1828
        %2448 = vmatprep.subr.bf16.mxu0 %v1833
        %2449 = vmatpush1.bf16.msra.mxu0 %v1832
        %2450 = vmatprep.subr.bf16.mxu0 %v1837
        %2451 = vmatpush1.bf16.msra.mxu0 %v1836
        %2452 = vmatprep.subr.bf16.mxu0 %v1841
        %2453 = vmatpush1.bf16.msra.mxu0 %v1840
        %2454 = vmatprep.subr.bf16.mxu0 %v1845
        %2455 = vmatpush1.bf16.msra.mxu0 %v1844
        %2456 = vmatprep.subr.bf16.mxu0 %v1849
        %2457 = vmatpush1.bf16.msra.mxu0 %v1848
        %2458 = vmatprep.subr.bf16.mxu0 %v1853
        %2459 = vmatpush1.bf16.msra.mxu0 %v1852
        %2460 = vmatprep.subr.bf16.mxu0 %v1857
        %2461 = vmatpush1.bf16.msra.mxu0 %v1856
        %2462 = vmatprep.subr.bf16.mxu0 %v1861
        %2463 = vmatpush1.bf16.msra.mxu0 %v1860
        %2464 = vmatprep.subr.bf16.mxu0 %v1865
        %2465 = vmatpush1.bf16.msra.mxu0 %v1864
        %2466 = vmatprep.subr.bf16.mxu0 %v1869
        %2467 = vmatpush1.bf16.msra.mxu0 %v1868
        %2468 = vmatprep.mubr.bf16.mxu0 %v629
        %2469 = vmatmul.mubr.bf16.gmra.mrb[0].mxu0 %v628
        %v2470 = vpop.f32.mrb[0].mxu0
        %v2471 = vadd.f32 %v2430, %v2470
        %v2472 = vpop.f32.mrb[0].mxu0
        %v2473 = vadd.f32 %v2432, %v2472
        %v2474 = vpop.f32.mrb[0].mxu0
        %v2475 = vpop.f32.mrb[0].mxu0
        %2476 = vdwg.mxu0
        %2477 = vmatprep.subr.bf16.mxu0 %v1873
        %2478 = vmatpush1.bf16.msra.mxu0 %v1872
        %2479 = vmatprep.subr.bf16.mxu0 %v1877
        %2480 = vmatpush1.bf16.msra.mxu0 %v1876
        %2481 = vmatprep.subr.bf16.mxu0 %v1881
        %2482 = vmatpush1.bf16.msra.mxu0 %v1880
        %2483 = vmatprep.subr.bf16.mxu0 %v1885
        %2484 = vmatpush1.bf16.msra.mxu0 %v1884
        %2485 = vmatprep.subr.bf16.mxu0 %v1889
        %2486 = vmatpush1.bf16.msra.mxu0 %v1888
        %2487 = vmatprep.subr.bf16.mxu0 %v1893
        %2488 = vmatpush1.bf16.msra.mxu0 %v1892
        %2489 = vmatprep.subr.bf16.mxu0 %v1897
        %2490 = vmatpush1.bf16.msra.mxu0 %v1896
        %2491 = vmatprep.subr.bf16.mxu0 %v1901
        %2492 = vmatpush1.bf16.msra.mxu0 %v1900
        %2493 = vmatprep.subr.bf16.mxu0 %v1905
        %2494 = vmatpush1.bf16.msra.mxu0 %v1904
        %2495 = vmatprep.subr.bf16.mxu0 %v1909
        %2496 = vmatpush1.bf16.msra.mxu0 %v1908
        %2497 = vmatprep.subr.bf16.mxu0 %v1913
        %2498 = vmatpush1.bf16.msra.mxu0 %v1912
        %2499 = vmatprep.subr.bf16.mxu0 %v1917
        %2500 = vmatpush1.bf16.msra.mxu0 %v1916
        %2501 = vmatprep.subr.bf16.mxu0 %v1921
        %2502 = vmatpush1.bf16.msra.mxu0 %v1920
        %2503 = vmatprep.subr.bf16.mxu0 %v1925
        %2504 = vmatpush1.bf16.msra.mxu0 %v1924
        %2505 = vmatprep.subr.bf16.mxu0 %v1929
        %2506 = vmatpush1.bf16.msra.mxu0 %v1928
        %2507 = vmatprep.subr.bf16.mxu0 %v1933
        %2508 = vmatpush1.bf16.msra.mxu0 %v1932
        %2509 = vmatprep.mubr.bf16.mxu0 %v631
        %2510 = vmatmul.mubr.bf16.gmra.mrb[0].mxu0 %v630
        %v2511 = vpop.f32.mrb[0].mxu0
        %v2512 = vadd.f32 %v2471, %v2511
        %v2513 = vpop.f32.mrb[0].mxu0
        %v2514 = vadd.f32 %v2473, %v2513
        %v2515 = vpop.f32.mrb[0].mxu0
        %v2516 = vpop.f32.mrb[0].mxu0
        %2517 = vdwg.mxu0
        %vm2518 = vcmp.gt.f32.partialorder %v2348, 0.0
        %vm2519 = vcmp.gt.f32.partialorder %v2350, 0.0
        %vm2520 = vcmp.gt.f32.partialorder %v2512, 0.0
        %vm2521 = vcmp.gt.f32.partialorder %v2514, 0.0
        %v2522 = vmul.f32 %v2348, 0.2
        %v2523 = vmul.f32 %v2350, 0.2
        %v2524 = vmul.f32 %v2512, 0.2
        %v2525 = vmul.f32 %v2514, 0.2
        %v2526 = vsel %vm2518, %v2348, %v2522
        %v2527 = vsel %vm2519, %v2350, %v2523
        %v2528 = vsel %vm2520, %v2512, %v2524
        %v2529 = vsel %vm2521, %v2514, %v2525
        %v2530 = vld [vmem:[#allocation2] sm:$0xff]
        %v2531 = vld [vmem:[#allocation2 + $0x8] sm:$0xff]
        %v2532 = vld [vmem:[#allocation2 + $0x10] sm:$0xff]
        %v2533 = vld [vmem:[#allocation2 + $0x18] sm:$0xff]
        %v2534 = vld [vmem:[#allocation2 + $0x20] sm:$0xff]
        %v2535 = vld [vmem:[#allocation2 + $0x28] sm:$0xff]
        %v2536 = vld [vmem:[#allocation2 + $0x30] sm:$0xff]
        %v2537 = vld [vmem:[#allocation2 + $0x38] sm:$0xff]
        %v2538 = vpack.c.bf16 %v2526, %v2526
        %v2539 = vpack.c.bf16 %v2527, %v2527
        %v2540 = vpack.c.bf16 %v2528, %v2528
        %v2541 = vpack.c.bf16 %v2529, %v2529
        %v2542 = vld [vmem:[%s528] sm:$0xff]
        %v2543 = vld [vmem:[%s528 + $0x8] sm:$0xff]
        %v2544 = vld [vmem:[%s528 + $0x10] sm:$0xff]
        %v2545 = vld [vmem:[%s528 + $0x18] sm:$0xff]
        %v2546 = vld [vmem:[%s528 + $0x20] sm:$0xff]
        %v2547 = vld [vmem:[%s528 + $0x28] sm:$0xff]
        %v2548 = vld [vmem:[%s528 + $0x30] sm:$0xff]
        %v2549 = vld [vmem:[%s528 + $0x38] sm:$0xff]
        %v2550 = vld [vmem:[%s528 + $0x40] sm:$0xff]
        %v2551 = vld [vmem:[%s528 + $0x48] sm:$0xff]
        %v2552 = vld [vmem:[%s528 + $0x50] sm:$0xff]
        %v2553 = vld [vmem:[%s528 + $0x58] sm:$0xff]
        %v2554 = vld [vmem:[%s528 + $0x60] sm:$0xff]
        %v2555 = vld [vmem:[%s528 + $0x68] sm:$0xff]
        %v2556 = vld [vmem:[%s528 + $0x70] sm:$0xff]
        %v2557 = vld [vmem:[%s528 + $0x78] sm:$0xff]
        %v2558 = vld [vmem:[%s528 + $0x80] sm:$0xff]
        %v2559 = vld [vmem:[%s528 + $0x88] sm:$0xff]
        %v2560 = vld [vmem:[%s528 + $0x90] sm:$0xff]
        %v2561 = vld [vmem:[%s528 + $0x98] sm:$0xff]
        %v2562 = vld [vmem:[%s528 + $0xa0] sm:$0xff]
        %v2563 = vld [vmem:[%s528 + $0xa8] sm:$0xff]
        %v2564 = vld [vmem:[%s528 + $0xb0] sm:$0xff]
        %v2565 = vld [vmem:[%s528 + $0xb8] sm:$0xff]
        %v2566 = vld [vmem:[%s528 + $0xc0] sm:$0xff]
        %v2567 = vld [vmem:[%s528 + $0xc8] sm:$0xff]
        %v2568 = vld [vmem:[%s528 + $0xd0] sm:$0xff]
        %v2569 = vld [vmem:[%s528 + $0xd8] sm:$0xff]
        %v2570 = vld [vmem:[%s528 + $0xe0] sm:$0xff]
        %v2571 = vld [vmem:[%s528 + $0xe8] sm:$0xff]
        %v2572 = vld [vmem:[%s528 + $0xf0] sm:$0xff]
        %v2573 = vld [vmem:[%s528 + $0xf8] sm:$0xff]
        %v2574 = vld [vmem:[%s528 + $0x100] sm:$0xff]
        %v2575 = vld [vmem:[%s528 + $0x108] sm:$0xff]
        %v2576 = vld [vmem:[%s528 + $0x110] sm:$0xff]
        %v2577 = vld [vmem:[%s528 + $0x118] sm:$0xff]
        %v2578 = vld [vmem:[%s528 + $0x120] sm:$0xff]
        %v2579 = vld [vmem:[%s528 + $0x128] sm:$0xff]
        %v2580 = vld [vmem:[%s528 + $0x130] sm:$0xff]
        %v2581 = vld [vmem:[%s528 + $0x138] sm:$0xff]
        %v2582 = vld [vmem:[%s528 + $0x140] sm:$0xff]
        %v2583 = vld [vmem:[%s528 + $0x148] sm:$0xff]
        %v2584 = vld [vmem:[%s528 + $0x150] sm:$0xff]
        %v2585 = vld [vmem:[%s528 + $0x158] sm:$0xff]
        %v2586 = vld [vmem:[%s528 + $0x160] sm:$0xff]
        %v2587 = vld [vmem:[%s528 + $0x168] sm:$0xff]
        %v2588 = vld [vmem:[%s528 + $0x170] sm:$0xff]
        %v2589 = vld [vmem:[%s528 + $0x178] sm:$0xff]
        %v2590 = vld [vmem:[%s528 + $0x180] sm:$0xff]
        %v2591 = vld [vmem:[%s528 + $0x188] sm:$0xff]
        %v2592 = vld [vmem:[%s528 + $0x190] sm:$0xff]
        %v2593 = vld [vmem:[%s528 + $0x198] sm:$0xff]
        %v2594 = vld [vmem:[%s528 + $0x1a0] sm:$0xff]
        %v2595 = vld [vmem:[%s528 + $0x1a8] sm:$0xff]
        %v2596 = vld [vmem:[%s528 + $0x1b0] sm:$0xff]
        %v2597 = vld [vmem:[%s528 + $0x1b8] sm:$0xff]
        %v2598 = vld [vmem:[%s528 + $0x1c0] sm:$0xff]
        %v2599 = vld [vmem:[%s528 + $0x1c8] sm:$0xff]
        %v2600 = vld [vmem:[%s528 + $0x1d0] sm:$0xff]
        %v2601 = vld [vmem:[%s528 + $0x1d8] sm:$0xff]
        %v2602 = vld [vmem:[%s528 + $0x1e0] sm:$0xff]
        %v2603 = vld [vmem:[%s528 + $0x1e8] sm:$0xff]
        %v2604 = vld [vmem:[%s528 + $0x1f0] sm:$0xff]
        %v2605 = vld [vmem:[%s528 + $0x1f8] sm:$0xff]
        %v2606 = vld [vmem:[%s528 + $0x200] sm:$0xff]
        %v2607 = vld [vmem:[%s528 + $0x208] sm:$0xff]
        %v2608 = vld [vmem:[%s528 + $0x210] sm:$0xff]
        %v2609 = vld [vmem:[%s528 + $0x218] sm:$0xff]
        %v2610 = vld [vmem:[%s528 + $0x220] sm:$0xff]
        %v2611 = vld [vmem:[%s528 + $0x228] sm:$0xff]
        %v2612 = vld [vmem:[%s528 + $0x230] sm:$0xff]
        %v2613 = vld [vmem:[%s528 + $0x238] sm:$0xff]
        %v2614 = vld [vmem:[%s528 + $0x240] sm:$0xff]
        %v2615 = vld [vmem:[%s528 + $0x248] sm:$0xff]
        %v2616 = vld [vmem:[%s528 + $0x250] sm:$0xff]
        %v2617 = vld [vmem:[%s528 + $0x258] sm:$0xff]
        %v2618 = vld [vmem:[%s528 + $0x260] sm:$0xff]
        %v2619 = vld [vmem:[%s528 + $0x268] sm:$0xff]
        %v2620 = vld [vmem:[%s528 + $0x270] sm:$0xff]
        %v2621 = vld [vmem:[%s528 + $0x278] sm:$0xff]
        %v2622 = vld [vmem:[%s528 + $0x280] sm:$0xff]
        %v2623 = vld [vmem:[%s528 + $0x288] sm:$0xff]
        %v2624 = vld [vmem:[%s528 + $0x290] sm:$0xff]
        %v2625 = vld [vmem:[%s528 + $0x298] sm:$0xff]
        %v2626 = vld [vmem:[%s528 + $0x2a0] sm:$0xff]
        %v2627 = vld [vmem:[%s528 + $0x2a8] sm:$0xff]
        %v2628 = vld [vmem:[%s528 + $0x2b0] sm:$0xff]
        %v2629 = vld [vmem:[%s528 + $0x2b8] sm:$0xff]
        %v2630 = vld [vmem:[%s528 + $0x2c0] sm:$0xff]
        %v2631 = vld [vmem:[%s528 + $0x2c8] sm:$0xff]
        %v2632 = vld [vmem:[%s528 + $0x2d0] sm:$0xff]
        %v2633 = vld [vmem:[%s528 + $0x2d8] sm:$0xff]
        %v2634 = vld [vmem:[%s528 + $0x2e0] sm:$0xff]
        %v2635 = vld [vmem:[%s528 + $0x2e8] sm:$0xff]
        %v2636 = vld [vmem:[%s528 + $0x2f0] sm:$0xff]
        %v2637 = vld [vmem:[%s528 + $0x2f8] sm:$0xff]
        %v2638 = vld [vmem:[%s528 + $0x300] sm:$0xff]
        %v2639 = vld [vmem:[%s528 + $0x308] sm:$0xff]
        %v2640 = vld [vmem:[%s528 + $0x310] sm:$0xff]
        %v2641 = vld [vmem:[%s528 + $0x318] sm:$0xff]
        %v2642 = vld [vmem:[%s528 + $0x320] sm:$0xff]
        %v2643 = vld [vmem:[%s528 + $0x328] sm:$0xff]
        %v2644 = vld [vmem:[%s528 + $0x330] sm:$0xff]
        %v2645 = vld [vmem:[%s528 + $0x338] sm:$0xff]
        %v2646 = vld [vmem:[%s528 + $0x340] sm:$0xff]
        %v2647 = vld [vmem:[%s528 + $0x348] sm:$0xff]
        %v2648 = vld [vmem:[%s528 + $0x350] sm:$0xff]
        %v2649 = vld [vmem:[%s528 + $0x358] sm:$0xff]
        %v2650 = vld [vmem:[%s528 + $0x360] sm:$0xff]
        %v2651 = vld [vmem:[%s528 + $0x368] sm:$0xff]
        %v2652 = vld [vmem:[%s528 + $0x370] sm:$0xff]
        %v2653 = vld [vmem:[%s528 + $0x378] sm:$0xff]
        %v2654 = vld [vmem:[%s528 + $0x380] sm:$0xff]
        %v2655 = vld [vmem:[%s528 + $0x388] sm:$0xff]
        %v2656 = vld [vmem:[%s528 + $0x390] sm:$0xff]
        %v2657 = vld [vmem:[%s528 + $0x398] sm:$0xff]
        %v2658 = vld [vmem:[%s528 + $0x3a0] sm:$0xff]
        %v2659 = vld [vmem:[%s528 + $0x3a8] sm:$0xff]
        %v2660 = vld [vmem:[%s528 + $0x3b0] sm:$0xff]
        %v2661 = vld [vmem:[%s528 + $0x3b8] sm:$0xff]
        %v2662 = vld [vmem:[%s528 + $0x3c0] sm:$0xff]
        %v2663 = vld [vmem:[%s528 + $0x3c8] sm:$0xff]
        %v2664 = vld [vmem:[%s528 + $0x3d0] sm:$0xff]
        %v2665 = vld [vmem:[%s528 + $0x3d8] sm:$0xff]
        %v2666 = vld [vmem:[%s528 + $0x3e0] sm:$0xff]
        %v2667 = vld [vmem:[%s528 + $0x3e8] sm:$0xff]
        %v2668 = vld [vmem:[%s528 + $0x3f0] sm:$0xff]
        %v2669 = vld [vmem:[%s528 + $0x3f8] sm:$0xff]
        %v2670 = vld [vmem:[%s528 + $0x400] sm:$0xff]
        %v2671 = vld [vmem:[%s528 + $0x408] sm:$0xff]
        %v2672 = vld [vmem:[%s528 + $0x410] sm:$0xff]
        %v2673 = vld [vmem:[%s528 + $0x418] sm:$0xff]
        %v2674 = vld [vmem:[%s528 + $0x420] sm:$0xff]
        %v2675 = vld [vmem:[%s528 + $0x428] sm:$0xff]
        %v2676 = vld [vmem:[%s528 + $0x430] sm:$0xff]
        %v2677 = vld [vmem:[%s528 + $0x438] sm:$0xff]
        %v2678 = vld [vmem:[%s528 + $0x440] sm:$0xff]
        %v2679 = vld [vmem:[%s528 + $0x448] sm:$0xff]
        %v2680 = vld [vmem:[%s528 + $0x450] sm:$0xff]
        %v2681 = vld [vmem:[%s528 + $0x458] sm:$0xff]
        %v2682 = vld [vmem:[%s528 + $0x460] sm:$0xff]
        %v2683 = vld [vmem:[%s528 + $0x468] sm:$0xff]
        %v2684 = vld [vmem:[%s528 + $0x470] sm:$0xff]
        %v2685 = vld [vmem:[%s528 + $0x478] sm:$0xff]
        %v2686 = vld [vmem:[%s528 + $0x480] sm:$0xff]
        %v2687 = vld [vmem:[%s528 + $0x488] sm:$0xff]
        %v2688 = vld [vmem:[%s528 + $0x490] sm:$0xff]
        %v2689 = vld [vmem:[%s528 + $0x498] sm:$0xff]
        %v2690 = vld [vmem:[%s528 + $0x4a0] sm:$0xff]
        %v2691 = vld [vmem:[%s528 + $0x4a8] sm:$0xff]
        %v2692 = vld [vmem:[%s528 + $0x4b0] sm:$0xff]
        %v2693 = vld [vmem:[%s528 + $0x4b8] sm:$0xff]
        %v2694 = vld [vmem:[%s528 + $0x4c0] sm:$0xff]
        %v2695 = vld [vmem:[%s528 + $0x4c8] sm:$0xff]
        %v2696 = vld [vmem:[%s528 + $0x4d0] sm:$0xff]
        %v2697 = vld [vmem:[%s528 + $0x4d8] sm:$0xff]
        %v2698 = vld [vmem:[%s528 + $0x4e0] sm:$0xff]
        %v2699 = vld [vmem:[%s528 + $0x4e8] sm:$0xff]
        %v2700 = vld [vmem:[%s528 + $0x4f0] sm:$0xff]
        %v2701 = vld [vmem:[%s528 + $0x4f8] sm:$0xff]
        %v2702 = vld [vmem:[%s528 + $0x500] sm:$0xff]
        %v2703 = vld [vmem:[%s528 + $0x508] sm:$0xff]
        %v2704 = vld [vmem:[%s528 + $0x510] sm:$0xff]
        %v2705 = vld [vmem:[%s528 + $0x518] sm:$0xff]
        %v2706 = vld [vmem:[%s528 + $0x520] sm:$0xff]
        %v2707 = vld [vmem:[%s528 + $0x528] sm:$0xff]
        %v2708 = vld [vmem:[%s528 + $0x530] sm:$0xff]
        %v2709 = vld [vmem:[%s528 + $0x538] sm:$0xff]
        %v2710 = vld [vmem:[%s528 + $0x540] sm:$0xff]
        %v2711 = vld [vmem:[%s528 + $0x548] sm:$0xff]
        %v2712 = vld [vmem:[%s528 + $0x550] sm:$0xff]
        %v2713 = vld [vmem:[%s528 + $0x558] sm:$0xff]
        %v2714 = vld [vmem:[%s528 + $0x560] sm:$0xff]
        %v2715 = vld [vmem:[%s528 + $0x568] sm:$0xff]
        %v2716 = vld [vmem:[%s528 + $0x570] sm:$0xff]
        %v2717 = vld [vmem:[%s528 + $0x578] sm:$0xff]
        %v2718 = vld [vmem:[%s528 + $0x580] sm:$0xff]
        %v2719 = vld [vmem:[%s528 + $0x588] sm:$0xff]
        %v2720 = vld [vmem:[%s528 + $0x590] sm:$0xff]
        %v2721 = vld [vmem:[%s528 + $0x598] sm:$0xff]
        %v2722 = vld [vmem:[%s528 + $0x5a0] sm:$0xff]
        %v2723 = vld [vmem:[%s528 + $0x5a8] sm:$0xff]
        %v2724 = vld [vmem:[%s528 + $0x5b0] sm:$0xff]
        %v2725 = vld [vmem:[%s528 + $0x5b8] sm:$0xff]
        %v2726 = vld [vmem:[%s528 + $0x5c0] sm:$0xff]
        %v2727 = vld [vmem:[%s528 + $0x5c8] sm:$0xff]
        %v2728 = vld [vmem:[%s528 + $0x5d0] sm:$0xff]
        %v2729 = vld [vmem:[%s528 + $0x5d8] sm:$0xff]
        %v2730 = vld [vmem:[%s528 + $0x5e0] sm:$0xff]
        %v2731 = vld [vmem:[%s528 + $0x5e8] sm:$0xff]
        %v2732 = vld [vmem:[%s528 + $0x5f0] sm:$0xff]
        %v2733 = vld [vmem:[%s528 + $0x5f8] sm:$0xff]
        %v2734 = vld [vmem:[%s528 + $0x600] sm:$0xff]
        %v2735 = vld [vmem:[%s528 + $0x608] sm:$0xff]
        %v2736 = vld [vmem:[%s528 + $0x610] sm:$0xff]
        %v2737 = vld [vmem:[%s528 + $0x618] sm:$0xff]
        %v2738 = vld [vmem:[%s528 + $0x620] sm:$0xff]
        %v2739 = vld [vmem:[%s528 + $0x628] sm:$0xff]
        %v2740 = vld [vmem:[%s528 + $0x630] sm:$0xff]
        %v2741 = vld [vmem:[%s528 + $0x638] sm:$0xff]
        %v2742 = vld [vmem:[%s528 + $0x640] sm:$0xff]
        %v2743 = vld [vmem:[%s528 + $0x648] sm:$0xff]
        %v2744 = vld [vmem:[%s528 + $0x650] sm:$0xff]
        %v2745 = vld [vmem:[%s528 + $0x658] sm:$0xff]
        %v2746 = vld [vmem:[%s528 + $0x660] sm:$0xff]
        %v2747 = vld [vmem:[%s528 + $0x668] sm:$0xff]
        %v2748 = vld [vmem:[%s528 + $0x670] sm:$0xff]
        %v2749 = vld [vmem:[%s528 + $0x678] sm:$0xff]
        %v2750 = vld [vmem:[%s528 + $0x680] sm:$0xff]
        %v2751 = vld [vmem:[%s528 + $0x688] sm:$0xff]
        %v2752 = vld [vmem:[%s528 + $0x690] sm:$0xff]
        %v2753 = vld [vmem:[%s528 + $0x698] sm:$0xff]
        %v2754 = vld [vmem:[%s528 + $0x6a0] sm:$0xff]
        %v2755 = vld [vmem:[%s528 + $0x6a8] sm:$0xff]
        %v2756 = vld [vmem:[%s528 + $0x6b0] sm:$0xff]
        %v2757 = vld [vmem:[%s528 + $0x6b8] sm:$0xff]
        %v2758 = vld [vmem:[%s528 + $0x6c0] sm:$0xff]
        %v2759 = vld [vmem:[%s528 + $0x6c8] sm:$0xff]
        %v2760 = vld [vmem:[%s528 + $0x6d0] sm:$0xff]
        %v2761 = vld [vmem:[%s528 + $0x6d8] sm:$0xff]
        %v2762 = vld [vmem:[%s528 + $0x6e0] sm:$0xff]
        %v2763 = vld [vmem:[%s528 + $0x6e8] sm:$0xff]
        %v2764 = vld [vmem:[%s528 + $0x6f0] sm:$0xff]
        %v2765 = vld [vmem:[%s528 + $0x6f8] sm:$0xff]
        %v2766 = vld [vmem:[%s528 + $0x700] sm:$0xff]
        %v2767 = vld [vmem:[%s528 + $0x708] sm:$0xff]
        %v2768 = vld [vmem:[%s528 + $0x710] sm:$0xff]
        %v2769 = vld [vmem:[%s528 + $0x718] sm:$0xff]
        %v2770 = vld [vmem:[%s528 + $0x720] sm:$0xff]
        %v2771 = vld [vmem:[%s528 + $0x728] sm:$0xff]
        %v2772 = vld [vmem:[%s528 + $0x730] sm:$0xff]
        %v2773 = vld [vmem:[%s528 + $0x738] sm:$0xff]
        %v2774 = vld [vmem:[%s528 + $0x740] sm:$0xff]
        %v2775 = vld [vmem:[%s528 + $0x748] sm:$0xff]
        %v2776 = vld [vmem:[%s528 + $0x750] sm:$0xff]
        %v2777 = vld [vmem:[%s528 + $0x758] sm:$0xff]
        %v2778 = vld [vmem:[%s528 + $0x760] sm:$0xff]
        %v2779 = vld [vmem:[%s528 + $0x768] sm:$0xff]
        %v2780 = vld [vmem:[%s528 + $0x770] sm:$0xff]
        %v2781 = vld [vmem:[%s528 + $0x778] sm:$0xff]
        %v2782 = vld [vmem:[%s528 + $0x780] sm:$0xff]
        %v2783 = vld [vmem:[%s528 + $0x788] sm:$0xff]
        %v2784 = vld [vmem:[%s528 + $0x790] sm:$0xff]
        %v2785 = vld [vmem:[%s528 + $0x798] sm:$0xff]
        %v2786 = vld [vmem:[%s528 + $0x7a0] sm:$0xff]
        %v2787 = vld [vmem:[%s528 + $0x7a8] sm:$0xff]
        %v2788 = vld [vmem:[%s528 + $0x7b0] sm:$0xff]
        %v2789 = vld [vmem:[%s528 + $0x7b8] sm:$0xff]
        %v2790 = vld [vmem:[%s528 + $0x7c0] sm:$0xff]
        %v2791 = vld [vmem:[%s528 + $0x7c8] sm:$0xff]
        %v2792 = vld [vmem:[%s528 + $0x7d0] sm:$0xff]
        %v2793 = vld [vmem:[%s528 + $0x7d8] sm:$0xff]
        %v2794 = vld [vmem:[%s528 + $0x7e0] sm:$0xff]
        %v2795 = vld [vmem:[%s528 + $0x7e8] sm:$0xff]
        %v2796 = vld [vmem:[%s528 + $0x7f0] sm:$0xff]
        %v2797 = vld [vmem:[%s528 + $0x7f8] sm:$0xff]
        %v3054 = vunpack.c.l.b16 %v2542
        %v3055 = vunpack.c.h.b16 %v2542
        %v3056 = vunpack.c.l.b16 %v2543
        %v3057 = vunpack.c.h.b16 %v2543
        %v3058 = vunpack.c.l.b16 %v2544
        %v3059 = vunpack.c.h.b16 %v2544
        %v3060 = vunpack.c.l.b16 %v2545
        %v3061 = vunpack.c.h.b16 %v2545
        %v3062 = vunpack.c.l.b16 %v2546
        %v3063 = vunpack.c.h.b16 %v2546
        %v3064 = vunpack.c.l.b16 %v2547
        %v3065 = vunpack.c.h.b16 %v2547
        %v3066 = vunpack.c.l.b16 %v2548
        %v3067 = vunpack.c.h.b16 %v2548
        %v3068 = vunpack.c.l.b16 %v2549
        %v3069 = vunpack.c.h.b16 %v2549
        %v3070 = vunpack.c.l.b16 %v2550
        %v3071 = vunpack.c.h.b16 %v2550
        %v3072 = vunpack.c.l.b16 %v2551
        %v3073 = vunpack.c.h.b16 %v2551
        %v3074 = vunpack.c.l.b16 %v2552
        %v3075 = vunpack.c.h.b16 %v2552
        %v3076 = vunpack.c.l.b16 %v2553
        %v3077 = vunpack.c.h.b16 %v2553
        %v3078 = vunpack.c.l.b16 %v2554
        %v3079 = vunpack.c.h.b16 %v2554
        %v3080 = vunpack.c.l.b16 %v2555
        %v3081 = vunpack.c.h.b16 %v2555
        %v3082 = vunpack.c.l.b16 %v2556
        %v3083 = vunpack.c.h.b16 %v2556
        %v3084 = vunpack.c.l.b16 %v2557
        %v3085 = vunpack.c.h.b16 %v2557
        %v3086 = vunpack.c.l.b16 %v2558
        %v3087 = vunpack.c.h.b16 %v2558
        %v3088 = vunpack.c.l.b16 %v2559
        %v3089 = vunpack.c.h.b16 %v2559
        %v3090 = vunpack.c.l.b16 %v2560
        %v3091 = vunpack.c.h.b16 %v2560
        %v3092 = vunpack.c.l.b16 %v2561
        %v3093 = vunpack.c.h.b16 %v2561
        %v3094 = vunpack.c.l.b16 %v2562
        %v3095 = vunpack.c.h.b16 %v2562
        %v3096 = vunpack.c.l.b16 %v2563
        %v3097 = vunpack.c.h.b16 %v2563
        %v3098 = vunpack.c.l.b16 %v2564
        %v3099 = vunpack.c.h.b16 %v2564
        %v3100 = vunpack.c.l.b16 %v2565
        %v3101 = vunpack.c.h.b16 %v2565
        %v3102 = vunpack.c.l.b16 %v2566
        %v3103 = vunpack.c.h.b16 %v2566
        %v3104 = vunpack.c.l.b16 %v2567
        %v3105 = vunpack.c.h.b16 %v2567
        %v3106 = vunpack.c.l.b16 %v2568
        %v3107 = vunpack.c.h.b16 %v2568
        %v3108 = vunpack.c.l.b16 %v2569
        %v3109 = vunpack.c.h.b16 %v2569
        %v3110 = vunpack.c.l.b16 %v2570
        %v3111 = vunpack.c.h.b16 %v2570
        %v3112 = vunpack.c.l.b16 %v2571
        %v3113 = vunpack.c.h.b16 %v2571
        %v3114 = vunpack.c.l.b16 %v2572
        %v3115 = vunpack.c.h.b16 %v2572
        %v3116 = vunpack.c.l.b16 %v2573
        %v3117 = vunpack.c.h.b16 %v2573
        %v3118 = vunpack.c.l.b16 %v2574
        %v3119 = vunpack.c.h.b16 %v2574
        %v3120 = vunpack.c.l.b16 %v2575
        %v3121 = vunpack.c.h.b16 %v2575
        %v3122 = vunpack.c.l.b16 %v2576
        %v3123 = vunpack.c.h.b16 %v2576
        %v3124 = vunpack.c.l.b16 %v2577
        %v3125 = vunpack.c.h.b16 %v2577
        %v3126 = vunpack.c.l.b16 %v2578
        %v3127 = vunpack.c.h.b16 %v2578
        %v3128 = vunpack.c.l.b16 %v2579
        %v3129 = vunpack.c.h.b16 %v2579
        %v3130 = vunpack.c.l.b16 %v2580
        %v3131 = vunpack.c.h.b16 %v2580
        %v3132 = vunpack.c.l.b16 %v2581
        %v3133 = vunpack.c.h.b16 %v2581
        %v3134 = vunpack.c.l.b16 %v2582
        %v3135 = vunpack.c.h.b16 %v2582
        %v3136 = vunpack.c.l.b16 %v2583
        %v3137 = vunpack.c.h.b16 %v2583
        %v3138 = vunpack.c.l.b16 %v2584
        %v3139 = vunpack.c.h.b16 %v2584
        %v3140 = vunpack.c.l.b16 %v2585
        %v3141 = vunpack.c.h.b16 %v2585
        %v3142 = vunpack.c.l.b16 %v2586
        %v3143 = vunpack.c.h.b16 %v2586
        %v3144 = vunpack.c.l.b16 %v2587
        %v3145 = vunpack.c.h.b16 %v2587
        %v3146 = vunpack.c.l.b16 %v2588
        %v3147 = vunpack.c.h.b16 %v2588
        %v3148 = vunpack.c.l.b16 %v2589
        %v3149 = vunpack.c.h.b16 %v2589
        %v3150 = vunpack.c.l.b16 %v2590
        %v3151 = vunpack.c.h.b16 %v2590
        %v3152 = vunpack.c.l.b16 %v2591
        %v3153 = vunpack.c.h.b16 %v2591
        %v3154 = vunpack.c.l.b16 %v2592
        %v3155 = vunpack.c.h.b16 %v2592
        %v3156 = vunpack.c.l.b16 %v2593
        %v3157 = vunpack.c.h.b16 %v2593
        %v3158 = vunpack.c.l.b16 %v2594
        %v3159 = vunpack.c.h.b16 %v2594
        %v3160 = vunpack.c.l.b16 %v2595
        %v3161 = vunpack.c.h.b16 %v2595
        %v3162 = vunpack.c.l.b16 %v2596
        %v3163 = vunpack.c.h.b16 %v2596
        %v3164 = vunpack.c.l.b16 %v2597
        %v3165 = vunpack.c.h.b16 %v2597
        %v3166 = vunpack.c.l.b16 %v2598
        %v3167 = vunpack.c.h.b16 %v2598
        %v3168 = vunpack.c.l.b16 %v2599
        %v3169 = vunpack.c.h.b16 %v2599
        %v3170 = vunpack.c.l.b16 %v2600
        %v3171 = vunpack.c.h.b16 %v2600
        %v3172 = vunpack.c.l.b16 %v2601
        %v3173 = vunpack.c.h.b16 %v2601
        %v3174 = vunpack.c.l.b16 %v2602
        %v3175 = vunpack.c.h.b16 %v2602
        %v3176 = vunpack.c.l.b16 %v2603
        %v3177 = vunpack.c.h.b16 %v2603
        %v3178 = vunpack.c.l.b16 %v2604
        %v3179 = vunpack.c.h.b16 %v2604
        %v3180 = vunpack.c.l.b16 %v2605
        %v3181 = vunpack.c.h.b16 %v2605
        %v3182 = vunpack.c.l.b16 %v2606
        %v3183 = vunpack.c.h.b16 %v2606
        %v3184 = vunpack.c.l.b16 %v2607
        %v3185 = vunpack.c.h.b16 %v2607
        %v3186 = vunpack.c.l.b16 %v2608
        %v3187 = vunpack.c.h.b16 %v2608
        %v3188 = vunpack.c.l.b16 %v2609
        %v3189 = vunpack.c.h.b16 %v2609
        %v3190 = vunpack.c.l.b16 %v2610
        %v3191 = vunpack.c.h.b16 %v2610
        %v3192 = vunpack.c.l.b16 %v2611
        %v3193 = vunpack.c.h.b16 %v2611
        %v3194 = vunpack.c.l.b16 %v2612
        %v3195 = vunpack.c.h.b16 %v2612
        %v3196 = vunpack.c.l.b16 %v2613
        %v3197 = vunpack.c.h.b16 %v2613
        %v3198 = vunpack.c.l.b16 %v2614
        %v3199 = vunpack.c.h.b16 %v2614
        %v3200 = vunpack.c.l.b16 %v2615
        %v3201 = vunpack.c.h.b16 %v2615
        %v3202 = vunpack.c.l.b16 %v2616
        %v3203 = vunpack.c.h.b16 %v2616
        %v3204 = vunpack.c.l.b16 %v2617
        %v3205 = vunpack.c.h.b16 %v2617
        %v3206 = vunpack.c.l.b16 %v2618
        %v3207 = vunpack.c.h.b16 %v2618
        %v3208 = vunpack.c.l.b16 %v2619
        %v3209 = vunpack.c.h.b16 %v2619
        %v3210 = vunpack.c.l.b16 %v2620
        %v3211 = vunpack.c.h.b16 %v2620
        %v3212 = vunpack.c.l.b16 %v2621
        %v3213 = vunpack.c.h.b16 %v2621
        %v3214 = vunpack.c.l.b16 %v2622
        %v3215 = vunpack.c.h.b16 %v2622
        %v3216 = vunpack.c.l.b16 %v2623
        %v3217 = vunpack.c.h.b16 %v2623
        %v3218 = vunpack.c.l.b16 %v2624
        %v3219 = vunpack.c.h.b16 %v2624
        %v3220 = vunpack.c.l.b16 %v2625
        %v3221 = vunpack.c.h.b16 %v2625
        %v3222 = vunpack.c.l.b16 %v2626
        %v3223 = vunpack.c.h.b16 %v2626
        %v3224 = vunpack.c.l.b16 %v2627
        %v3225 = vunpack.c.h.b16 %v2627
        %v3226 = vunpack.c.l.b16 %v2628
        %v3227 = vunpack.c.h.b16 %v2628
        %v3228 = vunpack.c.l.b16 %v2629
        %v3229 = vunpack.c.h.b16 %v2629
        %v3230 = vunpack.c.l.b16 %v2630
        %v3231 = vunpack.c.h.b16 %v2630
        %v3232 = vunpack.c.l.b16 %v2631
        %v3233 = vunpack.c.h.b16 %v2631
        %v3234 = vunpack.c.l.b16 %v2632
        %v3235 = vunpack.c.h.b16 %v2632
        %v3236 = vunpack.c.l.b16 %v2633
        %v3237 = vunpack.c.h.b16 %v2633
        %v3238 = vunpack.c.l.b16 %v2634
        %v3239 = vunpack.c.h.b16 %v2634
        %v3240 = vunpack.c.l.b16 %v2635
        %v3241 = vunpack.c.h.b16 %v2635
        %v3242 = vunpack.c.l.b16 %v2636
        %v3243 = vunpack.c.h.b16 %v2636
        %v3244 = vunpack.c.l.b16 %v2637
        %v3245 = vunpack.c.h.b16 %v2637
        %v3246 = vunpack.c.l.b16 %v2638
        %v3247 = vunpack.c.h.b16 %v2638
        %v3248 = vunpack.c.l.b16 %v2639
        %v3249 = vunpack.c.h.b16 %v2639
        %v3250 = vunpack.c.l.b16 %v2640
        %v3251 = vunpack.c.h.b16 %v2640
        %v3252 = vunpack.c.l.b16 %v2641
        %v3253 = vunpack.c.h.b16 %v2641
        %v3254 = vunpack.c.l.b16 %v2642
        %v3255 = vunpack.c.h.b16 %v2642
        %v3256 = vunpack.c.l.b16 %v2643
        %v3257 = vunpack.c.h.b16 %v2643
        %v3258 = vunpack.c.l.b16 %v2644
        %v3259 = vunpack.c.h.b16 %v2644
        %v3260 = vunpack.c.l.b16 %v2645
        %v3261 = vunpack.c.h.b16 %v2645
        %v3262 = vunpack.c.l.b16 %v2646
        %v3263 = vunpack.c.h.b16 %v2646
        %v3264 = vunpack.c.l.b16 %v2647
        %v3265 = vunpack.c.h.b16 %v2647
        %v3266 = vunpack.c.l.b16 %v2648
        %v3267 = vunpack.c.h.b16 %v2648
        %v3268 = vunpack.c.l.b16 %v2649
        %v3269 = vunpack.c.h.b16 %v2649
        %v3270 = vunpack.c.l.b16 %v2650
        %v3271 = vunpack.c.h.b16 %v2650
        %v3272 = vunpack.c.l.b16 %v2651
        %v3273 = vunpack.c.h.b16 %v2651
        %v3274 = vunpack.c.l.b16 %v2652
        %v3275 = vunpack.c.h.b16 %v2652
        %v3276 = vunpack.c.l.b16 %v2653
        %v3277 = vunpack.c.h.b16 %v2653
        %v3278 = vunpack.c.l.b16 %v2654
        %v3279 = vunpack.c.h.b16 %v2654
        %v3280 = vunpack.c.l.b16 %v2655
        %v3281 = vunpack.c.h.b16 %v2655
        %v3282 = vunpack.c.l.b16 %v2656
        %v3283 = vunpack.c.h.b16 %v2656
        %v3284 = vunpack.c.l.b16 %v2657
        %v3285 = vunpack.c.h.b16 %v2657
        %v3286 = vunpack.c.l.b16 %v2658
        %v3287 = vunpack.c.h.b16 %v2658
        %v3288 = vunpack.c.l.b16 %v2659
        %v3289 = vunpack.c.h.b16 %v2659
        %v3290 = vunpack.c.l.b16 %v2660
        %v3291 = vunpack.c.h.b16 %v2660
        %v3292 = vunpack.c.l.b16 %v2661
        %v3293 = vunpack.c.h.b16 %v2661
        %v3294 = vunpack.c.l.b16 %v2662
        %v3295 = vunpack.c.h.b16 %v2662
        %v3296 = vunpack.c.l.b16 %v2663
        %v3297 = vunpack.c.h.b16 %v2663
        %v3298 = vunpack.c.l.b16 %v2664
        %v3299 = vunpack.c.h.b16 %v2664
        %v3300 = vunpack.c.l.b16 %v2665
        %v3301 = vunpack.c.h.b16 %v2665
        %v3302 = vunpack.c.l.b16 %v2666
        %v3303 = vunpack.c.h.b16 %v2666
        %v3304 = vunpack.c.l.b16 %v2667
        %v3305 = vunpack.c.h.b16 %v2667
        %v3306 = vunpack.c.l.b16 %v2668
        %v3307 = vunpack.c.h.b16 %v2668
        %v3308 = vunpack.c.l.b16 %v2669
        %v3309 = vunpack.c.h.b16 %v2669
        %v3310 = vunpack.c.l.b16 %v2670
        %v3311 = vunpack.c.h.b16 %v2670
        %v3312 = vunpack.c.l.b16 %v2671
        %v3313 = vunpack.c.h.b16 %v2671
        %v3314 = vunpack.c.l.b16 %v2672
        %v3315 = vunpack.c.h.b16 %v2672
        %v3316 = vunpack.c.l.b16 %v2673
        %v3317 = vunpack.c.h.b16 %v2673
        %v3318 = vunpack.c.l.b16 %v2674
        %v3319 = vunpack.c.h.b16 %v2674
        %v3320 = vunpack.c.l.b16 %v2675
        %v3321 = vunpack.c.h.b16 %v2675
        %v3322 = vunpack.c.l.b16 %v2676
        %v3323 = vunpack.c.h.b16 %v2676
        %v3324 = vunpack.c.l.b16 %v2677
        %v3325 = vunpack.c.h.b16 %v2677
        %v3326 = vunpack.c.l.b16 %v2678
        %v3327 = vunpack.c.h.b16 %v2678
        %v3328 = vunpack.c.l.b16 %v2679
        %v3329 = vunpack.c.h.b16 %v2679
        %v3330 = vunpack.c.l.b16 %v2680
        %v3331 = vunpack.c.h.b16 %v2680
        %v3332 = vunpack.c.l.b16 %v2681
        %v3333 = vunpack.c.h.b16 %v2681
        %v3334 = vunpack.c.l.b16 %v2682
        %v3335 = vunpack.c.h.b16 %v2682
        %v3336 = vunpack.c.l.b16 %v2683
        %v3337 = vunpack.c.h.b16 %v2683
        %v3338 = vunpack.c.l.b16 %v2684
        %v3339 = vunpack.c.h.b16 %v2684
        %v3340 = vunpack.c.l.b16 %v2685
        %v3341 = vunpack.c.h.b16 %v2685
        %v3342 = vunpack.c.l.b16 %v2686
        %v3343 = vunpack.c.h.b16 %v2686
        %v3344 = vunpack.c.l.b16 %v2687
        %v3345 = vunpack.c.h.b16 %v2687
        %v3346 = vunpack.c.l.b16 %v2688
        %v3347 = vunpack.c.h.b16 %v2688
        %v3348 = vunpack.c.l.b16 %v2689
        %v3349 = vunpack.c.h.b16 %v2689
        %v3350 = vunpack.c.l.b16 %v2690
        %v3351 = vunpack.c.h.b16 %v2690
        %v3352 = vunpack.c.l.b16 %v2691
        %v3353 = vunpack.c.h.b16 %v2691
        %v3354 = vunpack.c.l.b16 %v2692
        %v3355 = vunpack.c.h.b16 %v2692
        %v3356 = vunpack.c.l.b16 %v2693
        %v3357 = vunpack.c.h.b16 %v2693
        %v3358 = vunpack.c.l.b16 %v2694
        %v3359 = vunpack.c.h.b16 %v2694
        %v3360 = vunpack.c.l.b16 %v2695
        %v3361 = vunpack.c.h.b16 %v2695
        %v3362 = vunpack.c.l.b16 %v2696
        %v3363 = vunpack.c.h.b16 %v2696
        %v3364 = vunpack.c.l.b16 %v2697
        %v3365 = vunpack.c.h.b16 %v2697
        %v3366 = vunpack.c.l.b16 %v2698
        %v3367 = vunpack.c.h.b16 %v2698
        %v3368 = vunpack.c.l.b16 %v2699
        %v3369 = vunpack.c.h.b16 %v2699
        %v3370 = vunpack.c.l.b16 %v2700
        %v3371 = vunpack.c.h.b16 %v2700
        %v3372 = vunpack.c.l.b16 %v2701
        %v3373 = vunpack.c.h.b16 %v2701
        %v3374 = vunpack.c.l.b16 %v2702
        %v3375 = vunpack.c.h.b16 %v2702
        %v3376 = vunpack.c.l.b16 %v2703
        %v3377 = vunpack.c.h.b16 %v2703
        %v3378 = vunpack.c.l.b16 %v2704
        %v3379 = vunpack.c.h.b16 %v2704
        %v3380 = vunpack.c.l.b16 %v2705
        %v3381 = vunpack.c.h.b16 %v2705
        %v3382 = vunpack.c.l.b16 %v2706
        %v3383 = vunpack.c.h.b16 %v2706
        %v3384 = vunpack.c.l.b16 %v2707
        %v3385 = vunpack.c.h.b16 %v2707
        %v3386 = vunpack.c.l.b16 %v2708
        %v3387 = vunpack.c.h.b16 %v2708
        %v3388 = vunpack.c.l.b16 %v2709
        %v3389 = vunpack.c.h.b16 %v2709
        %v3390 = vunpack.c.l.b16 %v2710
        %v3391 = vunpack.c.h.b16 %v2710
        %v3392 = vunpack.c.l.b16 %v2711
        %v3393 = vunpack.c.h.b16 %v2711
        %v3394 = vunpack.c.l.b16 %v2712
        %v3395 = vunpack.c.h.b16 %v2712
        %v3396 = vunpack.c.l.b16 %v2713
        %v3397 = vunpack.c.h.b16 %v2713
        %v3398 = vunpack.c.l.b16 %v2714
        %v3399 = vunpack.c.h.b16 %v2714
        %v3400 = vunpack.c.l.b16 %v2715
        %v3401 = vunpack.c.h.b16 %v2715
        %v3402 = vunpack.c.l.b16 %v2716
        %v3403 = vunpack.c.h.b16 %v2716
        %v3404 = vunpack.c.l.b16 %v2717
        %v3405 = vunpack.c.h.b16 %v2717
        %v3406 = vunpack.c.l.b16 %v2718
        %v3407 = vunpack.c.h.b16 %v2718
        %v3408 = vunpack.c.l.b16 %v2719
        %v3409 = vunpack.c.h.b16 %v2719
        %v3410 = vunpack.c.l.b16 %v2720
        %v3411 = vunpack.c.h.b16 %v2720
        %v3412 = vunpack.c.l.b16 %v2721
        %v3413 = vunpack.c.h.b16 %v2721
        %v3414 = vunpack.c.l.b16 %v2722
        %v3415 = vunpack.c.h.b16 %v2722
        %v3416 = vunpack.c.l.b16 %v2723
        %v3417 = vunpack.c.h.b16 %v2723
        %v3418 = vunpack.c.l.b16 %v2724
        %v3419 = vunpack.c.h.b16 %v2724
        %v3420 = vunpack.c.l.b16 %v2725
        %v3421 = vunpack.c.h.b16 %v2725
        %v3422 = vunpack.c.l.b16 %v2726
        %v3423 = vunpack.c.h.b16 %v2726
        %v3424 = vunpack.c.l.b16 %v2727
        %v3425 = vunpack.c.h.b16 %v2727
        %v3426 = vunpack.c.l.b16 %v2728
        %v3427 = vunpack.c.h.b16 %v2728
        %v3428 = vunpack.c.l.b16 %v2729
        %v3429 = vunpack.c.h.b16 %v2729
        %v3430 = vunpack.c.l.b16 %v2730
        %v3431 = vunpack.c.h.b16 %v2730
        %v3432 = vunpack.c.l.b16 %v2731
        %v3433 = vunpack.c.h.b16 %v2731
        %v3434 = vunpack.c.l.b16 %v2732
        %v3435 = vunpack.c.h.b16 %v2732
        %v3436 = vunpack.c.l.b16 %v2733
        %v3437 = vunpack.c.h.b16 %v2733
        %v3438 = vunpack.c.l.b16 %v2734
        %v3439 = vunpack.c.h.b16 %v2734
        %v3440 = vunpack.c.l.b16 %v2735
        %v3441 = vunpack.c.h.b16 %v2735
        %v3442 = vunpack.c.l.b16 %v2736
        %v3443 = vunpack.c.h.b16 %v2736
        %v3444 = vunpack.c.l.b16 %v2737
        %v3445 = vunpack.c.h.b16 %v2737
        %v3446 = vunpack.c.l.b16 %v2738
        %v3447 = vunpack.c.h.b16 %v2738
        %v3448 = vunpack.c.l.b16 %v2739
        %v3449 = vunpack.c.h.b16 %v2739
        %v3450 = vunpack.c.l.b16 %v2740
        %v3451 = vunpack.c.h.b16 %v2740
        %v3452 = vunpack.c.l.b16 %v2741
        %v3453 = vunpack.c.h.b16 %v2741
        %v3454 = vunpack.c.l.b16 %v2742
        %v3455 = vunpack.c.h.b16 %v2742
        %v3456 = vunpack.c.l.b16 %v2743
        %v3457 = vunpack.c.h.b16 %v2743
        %v3458 = vunpack.c.l.b16 %v2744
        %v3459 = vunpack.c.h.b16 %v2744
        %v3460 = vunpack.c.l.b16 %v2745
        %v3461 = vunpack.c.h.b16 %v2745
        %v3462 = vunpack.c.l.b16 %v2746
        %v3463 = vunpack.c.h.b16 %v2746
        %v3464 = vunpack.c.l.b16 %v2747
        %v3465 = vunpack.c.h.b16 %v2747
        %v3466 = vunpack.c.l.b16 %v2748
        %v3467 = vunpack.c.h.b16 %v2748
        %v3468 = vunpack.c.l.b16 %v2749
        %v3469 = vunpack.c.h.b16 %v2749
        %v3470 = vunpack.c.l.b16 %v2750
        %v3471 = vunpack.c.h.b16 %v2750
        %v3472 = vunpack.c.l.b16 %v2751
        %v3473 = vunpack.c.h.b16 %v2751
        %v3474 = vunpack.c.l.b16 %v2752
        %v3475 = vunpack.c.h.b16 %v2752
        %v3476 = vunpack.c.l.b16 %v2753
        %v3477 = vunpack.c.h.b16 %v2753
        %v3478 = vunpack.c.l.b16 %v2754
        %v3479 = vunpack.c.h.b16 %v2754
        %v3480 = vunpack.c.l.b16 %v2755
        %v3481 = vunpack.c.h.b16 %v2755
        %v3482 = vunpack.c.l.b16 %v2756
        %v3483 = vunpack.c.h.b16 %v2756
        %v3484 = vunpack.c.l.b16 %v2757
        %v3485 = vunpack.c.h.b16 %v2757
        %v3486 = vunpack.c.l.b16 %v2758
        %v3487 = vunpack.c.h.b16 %v2758
        %v3488 = vunpack.c.l.b16 %v2759
        %v3489 = vunpack.c.h.b16 %v2759
        %v3490 = vunpack.c.l.b16 %v2760
        %v3491 = vunpack.c.h.b16 %v2760
        %v3492 = vunpack.c.l.b16 %v2761
        %v3493 = vunpack.c.h.b16 %v2761
        %v3494 = vunpack.c.l.b16 %v2762
        %v3495 = vunpack.c.h.b16 %v2762
        %v3496 = vunpack.c.l.b16 %v2763
        %v3497 = vunpack.c.h.b16 %v2763
        %v3498 = vunpack.c.l.b16 %v2764
        %v3499 = vunpack.c.h.b16 %v2764
        %v3500 = vunpack.c.l.b16 %v2765
        %v3501 = vunpack.c.h.b16 %v2765
        %v3502 = vunpack.c.l.b16 %v2766
        %v3503 = vunpack.c.h.b16 %v2766
        %v3504 = vunpack.c.l.b16 %v2767
        %v3505 = vunpack.c.h.b16 %v2767
        %v3506 = vunpack.c.l.b16 %v2768
        %v3507 = vunpack.c.h.b16 %v2768
        %v3508 = vunpack.c.l.b16 %v2769
        %v3509 = vunpack.c.h.b16 %v2769
        %v3510 = vunpack.c.l.b16 %v2770
        %v3511 = vunpack.c.h.b16 %v2770
        %v3512 = vunpack.c.l.b16 %v2771
        %v3513 = vunpack.c.h.b16 %v2771
        %v3514 = vunpack.c.l.b16 %v2772
        %v3515 = vunpack.c.h.b16 %v2772
        %v3516 = vunpack.c.l.b16 %v2773
        %v3517 = vunpack.c.h.b16 %v2773
        %v3518 = vunpack.c.l.b16 %v2774
        %v3519 = vunpack.c.h.b16 %v2774
        %v3520 = vunpack.c.l.b16 %v2775
        %v3521 = vunpack.c.h.b16 %v2775
        %v3522 = vunpack.c.l.b16 %v2776
        %v3523 = vunpack.c.h.b16 %v2776
        %v3524 = vunpack.c.l.b16 %v2777
        %v3525 = vunpack.c.h.b16 %v2777
        %v3526 = vunpack.c.l.b16 %v2778
        %v3527 = vunpack.c.h.b16 %v2778
        %v3528 = vunpack.c.l.b16 %v2779
        %v3529 = vunpack.c.h.b16 %v2779
        %v3530 = vunpack.c.l.b16 %v2780
        %v3531 = vunpack.c.h.b16 %v2780
        %v3532 = vunpack.c.l.b16 %v2781
        %v3533 = vunpack.c.h.b16 %v2781
        %v3534 = vunpack.c.l.b16 %v2782
        %v3535 = vunpack.c.h.b16 %v2782
        %v3536 = vunpack.c.l.b16 %v2783
        %v3537 = vunpack.c.h.b16 %v2783
        %v3538 = vunpack.c.l.b16 %v2784
        %v3539 = vunpack.c.h.b16 %v2784
        %v3540 = vunpack.c.l.b16 %v2785
        %v3541 = vunpack.c.h.b16 %v2785
        %v3542 = vunpack.c.l.b16 %v2786
        %v3543 = vunpack.c.h.b16 %v2786
        %v3544 = vunpack.c.l.b16 %v2787
        %v3545 = vunpack.c.h.b16 %v2787
        %v3546 = vunpack.c.l.b16 %v2788
        %v3547 = vunpack.c.h.b16 %v2788
        %v3548 = vunpack.c.l.b16 %v2789
        %v3549 = vunpack.c.h.b16 %v2789
        %v3550 = vunpack.c.l.b16 %v2790
        %v3551 = vunpack.c.h.b16 %v2790
        %v3552 = vunpack.c.l.b16 %v2791
        %v3553 = vunpack.c.h.b16 %v2791
        %v3554 = vunpack.c.l.b16 %v2792
        %v3555 = vunpack.c.h.b16 %v2792
        %v3556 = vunpack.c.l.b16 %v2793
        %v3557 = vunpack.c.h.b16 %v2793
        %v3558 = vunpack.c.l.b16 %v2794
        %v3559 = vunpack.c.h.b16 %v2794
        %v3560 = vunpack.c.l.b16 %v2795
        %v3561 = vunpack.c.h.b16 %v2795
        %v3562 = vunpack.c.l.b16 %v2796
        %v3563 = vunpack.c.h.b16 %v2796
        %v3564 = vunpack.c.l.b16 %v2797
        %v3565 = vunpack.c.h.b16 %v2797
        %v3566 = vpack.c.b16 %v3062, %v3054
        %v3567 = vpack.c.b16 %v3063, %v3055
        %v3568 = vpack.c.b16 %v3064, %v3056
        %v3569 = vpack.c.b16 %v3065, %v3057
        %v3570 = vpack.c.b16 %v3066, %v3058
        %v3571 = vpack.c.b16 %v3067, %v3059
        %v3572 = vpack.c.b16 %v3068, %v3060
        %v3573 = vpack.c.b16 %v3069, %v3061
        %v3574 = vpack.c.b16 %v3078, %v3070
        %v3575 = vpack.c.b16 %v3079, %v3071
        %v3576 = vpack.c.b16 %v3080, %v3072
        %v3577 = vpack.c.b16 %v3081, %v3073
        %v3578 = vpack.c.b16 %v3082, %v3074
        %v3579 = vpack.c.b16 %v3083, %v3075
        %v3580 = vpack.c.b16 %v3084, %v3076
        %v3581 = vpack.c.b16 %v3085, %v3077
        %v3582 = vpack.c.b16 %v3094, %v3086
        %v3583 = vpack.c.b16 %v3095, %v3087
        %v3584 = vpack.c.b16 %v3096, %v3088
        %v3585 = vpack.c.b16 %v3097, %v3089
        %v3586 = vpack.c.b16 %v3098, %v3090
        %v3587 = vpack.c.b16 %v3099, %v3091
        %v3588 = vpack.c.b16 %v3100, %v3092
        %v3589 = vpack.c.b16 %v3101, %v3093
        %v3590 = vpack.c.b16 %v3110, %v3102
        %v3591 = vpack.c.b16 %v3111, %v3103
        %v3592 = vpack.c.b16 %v3112, %v3104
        %v3593 = vpack.c.b16 %v3113, %v3105
        %v3594 = vpack.c.b16 %v3114, %v3106
        %v3595 = vpack.c.b16 %v3115, %v3107
        %v3596 = vpack.c.b16 %v3116, %v3108
        %v3597 = vpack.c.b16 %v3117, %v3109
        %v3598 = vpack.c.b16 %v3126, %v3118
        %v3599 = vpack.c.b16 %v3127, %v3119
        %v3600 = vpack.c.b16 %v3128, %v3120
        %v3601 = vpack.c.b16 %v3129, %v3121
        %v3602 = vpack.c.b16 %v3130, %v3122
        %v3603 = vpack.c.b16 %v3131, %v3123
        %v3604 = vpack.c.b16 %v3132, %v3124
        %v3605 = vpack.c.b16 %v3133, %v3125
        %v3606 = vpack.c.b16 %v3142, %v3134
        %v3607 = vpack.c.b16 %v3143, %v3135
        %v3608 = vpack.c.b16 %v3144, %v3136
        %v3609 = vpack.c.b16 %v3145, %v3137
        %v3610 = vpack.c.b16 %v3146, %v3138
        %v3611 = vpack.c.b16 %v3147, %v3139
        %v3612 = vpack.c.b16 %v3148, %v3140
        %v3613 = vpack.c.b16 %v3149, %v3141
        %v3614 = vpack.c.b16 %v3158, %v3150
        %v3615 = vpack.c.b16 %v3159, %v3151
        %v3616 = vpack.c.b16 %v3160, %v3152
        %v3617 = vpack.c.b16 %v3161, %v3153
        %v3618 = vpack.c.b16 %v3162, %v3154
        %v3619 = vpack.c.b16 %v3163, %v3155
        %v3620 = vpack.c.b16 %v3164, %v3156
        %v3621 = vpack.c.b16 %v3165, %v3157
        %v3622 = vpack.c.b16 %v3174, %v3166
        %v3623 = vpack.c.b16 %v3175, %v3167
        %v3624 = vpack.c.b16 %v3176, %v3168
        %v3625 = vpack.c.b16 %v3177, %v3169
        %v3626 = vpack.c.b16 %v3178, %v3170
        %v3627 = vpack.c.b16 %v3179, %v3171
        %v3628 = vpack.c.b16 %v3180, %v3172
        %v3629 = vpack.c.b16 %v3181, %v3173
        %v3630 = vpack.c.b16 %v3190, %v3182
        %v3631 = vpack.c.b16 %v3191, %v3183
        %v3632 = vpack.c.b16 %v3192, %v3184
        %v3633 = vpack.c.b16 %v3193, %v3185
        %v3634 = vpack.c.b16 %v3194, %v3186
        %v3635 = vpack.c.b16 %v3195, %v3187
        %v3636 = vpack.c.b16 %v3196, %v3188
        %v3637 = vpack.c.b16 %v3197, %v3189
        %v3638 = vpack.c.b16 %v3206, %v3198
        %v3639 = vpack.c.b16 %v3207, %v3199
        %v3640 = vpack.c.b16 %v3208, %v3200
        %v3641 = vpack.c.b16 %v3209, %v3201
        %v3642 = vpack.c.b16 %v3210, %v3202
        %v3643 = vpack.c.b16 %v3211, %v3203
        %v3644 = vpack.c.b16 %v3212, %v3204
        %v3645 = vpack.c.b16 %v3213, %v3205
        %v3646 = vpack.c.b16 %v3222, %v3214
        %v3647 = vpack.c.b16 %v3223, %v3215
        %v3648 = vpack.c.b16 %v3224, %v3216
        %v3649 = vpack.c.b16 %v3225, %v3217
        %v3650 = vpack.c.b16 %v3226, %v3218
        %v3651 = vpack.c.b16 %v3227, %v3219
        %v3652 = vpack.c.b16 %v3228, %v3220
        %v3653 = vpack.c.b16 %v3229, %v3221
        %v3654 = vpack.c.b16 %v3238, %v3230
        %v3655 = vpack.c.b16 %v3239, %v3231
        %v3656 = vpack.c.b16 %v3240, %v3232
        %v3657 = vpack.c.b16 %v3241, %v3233
        %v3658 = vpack.c.b16 %v3242, %v3234
        %v3659 = vpack.c.b16 %v3243, %v3235
        %v3660 = vpack.c.b16 %v3244, %v3236
        %v3661 = vpack.c.b16 %v3245, %v3237
        %v3662 = vpack.c.b16 %v3254, %v3246
        %v3663 = vpack.c.b16 %v3255, %v3247
        %v3664 = vpack.c.b16 %v3256, %v3248
        %v3665 = vpack.c.b16 %v3257, %v3249
        %v3666 = vpack.c.b16 %v3258, %v3250
        %v3667 = vpack.c.b16 %v3259, %v3251
        %v3668 = vpack.c.b16 %v3260, %v3252
        %v3669 = vpack.c.b16 %v3261, %v3253
        %v3670 = vpack.c.b16 %v3270, %v3262
        %v3671 = vpack.c.b16 %v3271, %v3263
        %v3672 = vpack.c.b16 %v3272, %v3264
        %v3673 = vpack.c.b16 %v3273, %v3265
        %v3674 = vpack.c.b16 %v3274, %v3266
        %v3675 = vpack.c.b16 %v3275, %v3267
        %v3676 = vpack.c.b16 %v3276, %v3268
        %v3677 = vpack.c.b16 %v3277, %v3269
        %v3678 = vpack.c.b16 %v3286, %v3278
        %v3679 = vpack.c.b16 %v3287, %v3279
        %v3680 = vpack.c.b16 %v3288, %v3280
        %v3681 = vpack.c.b16 %v3289, %v3281
        %v3682 = vpack.c.b16 %v3290, %v3282
        %v3683 = vpack.c.b16 %v3291, %v3283
        %v3684 = vpack.c.b16 %v3292, %v3284
        %v3685 = vpack.c.b16 %v3293, %v3285
        %v3686 = vpack.c.b16 %v3302, %v3294
        %v3687 = vpack.c.b16 %v3303, %v3295
        %v3688 = vpack.c.b16 %v3304, %v3296
        %v3689 = vpack.c.b16 %v3305, %v3297
        %v3690 = vpack.c.b16 %v3306, %v3298
        %v3691 = vpack.c.b16 %v3307, %v3299
        %v3692 = vpack.c.b16 %v3308, %v3300
        %v3693 = vpack.c.b16 %v3309, %v3301
        %v3694 = vpack.c.b16 %v3318, %v3310
        %v3695 = vpack.c.b16 %v3319, %v3311
        %v3696 = vpack.c.b16 %v3320, %v3312
        %v3697 = vpack.c.b16 %v3321, %v3313
        %v3698 = vpack.c.b16 %v3322, %v3314
        %v3699 = vpack.c.b16 %v3323, %v3315
        %v3700 = vpack.c.b16 %v3324, %v3316
        %v3701 = vpack.c.b16 %v3325, %v3317
        %v3702 = vpack.c.b16 %v3334, %v3326
        %v3703 = vpack.c.b16 %v3335, %v3327
        %v3704 = vpack.c.b16 %v3336, %v3328
        %v3705 = vpack.c.b16 %v3337, %v3329
        %v3706 = vpack.c.b16 %v3338, %v3330
        %v3707 = vpack.c.b16 %v3339, %v3331
        %v3708 = vpack.c.b16 %v3340, %v3332
        %v3709 = vpack.c.b16 %v3341, %v3333
        %v3710 = vpack.c.b16 %v3350, %v3342
        %v3711 = vpack.c.b16 %v3351, %v3343
        %v3712 = vpack.c.b16 %v3352, %v3344
        %v3713 = vpack.c.b16 %v3353, %v3345
        %v3714 = vpack.c.b16 %v3354, %v3346
        %v3715 = vpack.c.b16 %v3355, %v3347
        %v3716 = vpack.c.b16 %v3356, %v3348
        %v3717 = vpack.c.b16 %v3357, %v3349
        %v3718 = vpack.c.b16 %v3366, %v3358
        %v3719 = vpack.c.b16 %v3367, %v3359
        %v3720 = vpack.c.b16 %v3368, %v3360
        %v3721 = vpack.c.b16 %v3369, %v3361
        %v3722 = vpack.c.b16 %v3370, %v3362
        %v3723 = vpack.c.b16 %v3371, %v3363
        %v3724 = vpack.c.b16 %v3372, %v3364
        %v3725 = vpack.c.b16 %v3373, %v3365
        %v3726 = vpack.c.b16 %v3382, %v3374
        %v3727 = vpack.c.b16 %v3383, %v3375
        %v3728 = vpack.c.b16 %v3384, %v3376
        %v3729 = vpack.c.b16 %v3385, %v3377
        %v3730 = vpack.c.b16 %v3386, %v3378
        %v3731 = vpack.c.b16 %v3387, %v3379
        %v3732 = vpack.c.b16 %v3388, %v3380
        %v3733 = vpack.c.b16 %v3389, %v3381
        %v3734 = vpack.c.b16 %v3398, %v3390
        %v3735 = vpack.c.b16 %v3399, %v3391
        %v3736 = vpack.c.b16 %v3400, %v3392
        %v3737 = vpack.c.b16 %v3401, %v3393
        %v3738 = vpack.c.b16 %v3402, %v3394
        %v3739 = vpack.c.b16 %v3403, %v3395
        %v3740 = vpack.c.b16 %v3404, %v3396
        %v3741 = vpack.c.b16 %v3405, %v3397
        %v3742 = vpack.c.b16 %v3414, %v3406
        %v3743 = vpack.c.b16 %v3415, %v3407
        %v3744 = vpack.c.b16 %v3416, %v3408
        %v3745 = vpack.c.b16 %v3417, %v3409
        %v3746 = vpack.c.b16 %v3418, %v3410
        %v3747 = vpack.c.b16 %v3419, %v3411
        %v3748 = vpack.c.b16 %v3420, %v3412
        %v3749 = vpack.c.b16 %v3421, %v3413
        %v3750 = vpack.c.b16 %v3430, %v3422
        %v3751 = vpack.c.b16 %v3431, %v3423
        %v3752 = vpack.c.b16 %v3432, %v3424
        %v3753 = vpack.c.b16 %v3433, %v3425
        %v3754 = vpack.c.b16 %v3434, %v3426
        %v3755 = vpack.c.b16 %v3435, %v3427
        %v3756 = vpack.c.b16 %v3436, %v3428
        %v3757 = vpack.c.b16 %v3437, %v3429
        %v3758 = vpack.c.b16 %v3446, %v3438
        %v3759 = vpack.c.b16 %v3447, %v3439
        %v3760 = vpack.c.b16 %v3448, %v3440
        %v3761 = vpack.c.b16 %v3449, %v3441
        %v3762 = vpack.c.b16 %v3450, %v3442
        %v3763 = vpack.c.b16 %v3451, %v3443
        %v3764 = vpack.c.b16 %v3452, %v3444
        %v3765 = vpack.c.b16 %v3453, %v3445
        %v3766 = vpack.c.b16 %v3462, %v3454
        %v3767 = vpack.c.b16 %v3463, %v3455
        %v3768 = vpack.c.b16 %v3464, %v3456
        %v3769 = vpack.c.b16 %v3465, %v3457
        %v3770 = vpack.c.b16 %v3466, %v3458
        %v3771 = vpack.c.b16 %v3467, %v3459
        %v3772 = vpack.c.b16 %v3468, %v3460
        %v3773 = vpack.c.b16 %v3469, %v3461
        %v3774 = vpack.c.b16 %v3478, %v3470
        %v3775 = vpack.c.b16 %v3479, %v3471
        %v3776 = vpack.c.b16 %v3480, %v3472
        %v3777 = vpack.c.b16 %v3481, %v3473
        %v3778 = vpack.c.b16 %v3482, %v3474
        %v3779 = vpack.c.b16 %v3483, %v3475
        %v3780 = vpack.c.b16 %v3484, %v3476
        %v3781 = vpack.c.b16 %v3485, %v3477
        %v3782 = vpack.c.b16 %v3494, %v3486
        %v3783 = vpack.c.b16 %v3495, %v3487
        %v3784 = vpack.c.b16 %v3496, %v3488
        %v3785 = vpack.c.b16 %v3497, %v3489
        %v3786 = vpack.c.b16 %v3498, %v3490
        %v3787 = vpack.c.b16 %v3499, %v3491
        %v3788 = vpack.c.b16 %v3500, %v3492
        %v3789 = vpack.c.b16 %v3501, %v3493
        %v3790 = vpack.c.b16 %v3510, %v3502
        %v3791 = vpack.c.b16 %v3511, %v3503
        %v3792 = vpack.c.b16 %v3512, %v3504
        %v3793 = vpack.c.b16 %v3513, %v3505
        %v3794 = vpack.c.b16 %v3514, %v3506
        %v3795 = vpack.c.b16 %v3515, %v3507
        %v3796 = vpack.c.b16 %v3516, %v3508
        %v3797 = vpack.c.b16 %v3517, %v3509
        %v3798 = vpack.c.b16 %v3526, %v3518
        %v3799 = vpack.c.b16 %v3527, %v3519
        %v3800 = vpack.c.b16 %v3528, %v3520
        %v3801 = vpack.c.b16 %v3529, %v3521
        %v3802 = vpack.c.b16 %v3530, %v3522
        %v3803 = vpack.c.b16 %v3531, %v3523
        %v3804 = vpack.c.b16 %v3532, %v3524
        %v3805 = vpack.c.b16 %v3533, %v3525
        %v3806 = vpack.c.b16 %v3542, %v3534
        %v3807 = vpack.c.b16 %v3543, %v3535
        %v3808 = vpack.c.b16 %v3544, %v3536
        %v3809 = vpack.c.b16 %v3545, %v3537
        %v3810 = vpack.c.b16 %v3546, %v3538
        %v3811 = vpack.c.b16 %v3547, %v3539
        %v3812 = vpack.c.b16 %v3548, %v3540
        %v3813 = vpack.c.b16 %v3549, %v3541
        %v3814 = vpack.c.b16 %v3558, %v3550
        %v3815 = vpack.c.b16 %v3559, %v3551
        %v3816 = vpack.c.b16 %v3560, %v3552
        %v3817 = vpack.c.b16 %v3561, %v3553
        %v3818 = vpack.c.b16 %v3562, %v3554
        %v3819 = vpack.c.b16 %v3563, %v3555
        %v3820 = vpack.c.b16 %v3564, %v3556
        %v3821 = vpack.c.b16 %v3565, %v3557
        %4078 = vmatprep.subr.bf16.mxu0 %v3567
        %4079 = vmatpush1.bf16.msra.mxu0 %v3566
        %4080 = vmatprep.subr.bf16.mxu0 %v3575
        %4081 = vmatpush1.bf16.msra.mxu0 %v3574
        %4082 = vmatprep.subr.bf16.mxu0 %v3583
        %4083 = vmatpush1.bf16.msra.mxu0 %v3582
        %4084 = vmatprep.subr.bf16.mxu0 %v3591
        %4085 = vmatpush1.bf16.msra.mxu0 %v3590
        %4086 = vmatprep.subr.bf16.mxu0 %v3599
        %4087 = vmatpush1.bf16.msra.mxu0 %v3598
        %4088 = vmatprep.subr.bf16.mxu0 %v3607
        %4089 = vmatpush1.bf16.msra.mxu0 %v3606
        %4090 = vmatprep.subr.bf16.mxu0 %v3615
        %4091 = vmatpush1.bf16.msra.mxu0 %v3614
        %4092 = vmatprep.subr.bf16.mxu0 %v3623
        %4093 = vmatpush1.bf16.msra.mxu0 %v3622
        %4094 = vmatprep.subr.bf16.mxu0 %v3631
        %4095 = vmatpush1.bf16.msra.mxu0 %v3630
        %4096 = vmatprep.subr.bf16.mxu0 %v3639
        %4097 = vmatpush1.bf16.msra.mxu0 %v3638
        %4098 = vmatprep.subr.bf16.mxu0 %v3647
        %4099 = vmatpush1.bf16.msra.mxu0 %v3646
        %4100 = vmatprep.subr.bf16.mxu0 %v3655
        %4101 = vmatpush1.bf16.msra.mxu0 %v3654
        %4102 = vmatprep.subr.bf16.mxu0 %v3663
        %4103 = vmatpush1.bf16.msra.mxu0 %v3662
        %4104 = vmatprep.subr.bf16.mxu0 %v3671
        %4105 = vmatpush1.bf16.msra.mxu0 %v3670
        %4106 = vmatprep.subr.bf16.mxu0 %v3679
        %4107 = vmatpush1.bf16.msra.mxu0 %v3678
        %4108 = vmatprep.subr.bf16.mxu0 %v3687
        %4109 = vmatpush1.bf16.msra.mxu0 %v3686
        %4110 = vmatprep.mubr.bf16.mxu0 %v2539
        %4111 = vmatmul.mubr.bf16.gmra.mrb[0].mxu0 %v2538
        %v4112 = vpop.f32.mrb[0].mxu0
        %v4113 = vadd.f32 0.0, %v4112
        %v4114 = vpop.f32.mrb[0].mxu0
        %v4115 = vadd.f32 0.0, %v4114
        %v4116 = vpop.f32.mrb[0].mxu0
        %v4117 = vpop.f32.mrb[0].mxu0
        %4118 = vdwg.mxu0
        %4119 = vmatprep.subr.bf16.mxu0 %v3695
        %4120 = vmatpush1.bf16.msra.mxu0 %v3694
        %4121 = vmatprep.subr.bf16.mxu0 %v3703
        %4122 = vmatpush1.bf16.msra.mxu0 %v3702
        %4123 = vmatprep.subr.bf16.mxu0 %v3711
        %4124 = vmatpush1.bf16.msra.mxu0 %v3710
        %4125 = vmatprep.subr.bf16.mxu0 %v3719
        %4126 = vmatpush1.bf16.msra.mxu0 %v3718
        %4127 = vmatprep.subr.bf16.mxu0 %v3727
        %4128 = vmatpush1.bf16.msra.mxu0 %v3726
        %4129 = vmatprep.subr.bf16.mxu0 %v3735
        %4130 = vmatpush1.bf16.msra.mxu0 %v3734
        %4131 = vmatprep.subr.bf16.mxu0 %v3743
        %4132 = vmatpush1.bf16.msra.mxu0 %v3742
        %4133 = vmatprep.subr.bf16.mxu0 %v3751
        %4134 = vmatpush1.bf16.msra.mxu0 %v3750
        %4135 = vmatprep.subr.bf16.mxu0 %v3759
        %4136 = vmatpush1.bf16.msra.mxu0 %v3758
        %4137 = vmatprep.subr.bf16.mxu0 %v3767
        %4138 = vmatpush1.bf16.msra.mxu0 %v3766
        %4139 = vmatprep.subr.bf16.mxu0 %v3775
        %4140 = vmatpush1.bf16.msra.mxu0 %v3774
        %4141 = vmatprep.subr.bf16.mxu0 %v3783
        %4142 = vmatpush1.bf16.msra.mxu0 %v3782
        %4143 = vmatprep.subr.bf16.mxu0 %v3791
        %4144 = vmatpush1.bf16.msra.mxu0 %v3790
        %4145 = vmatprep.subr.bf16.mxu0 %v3799
        %4146 = vmatpush1.bf16.msra.mxu0 %v3798
        %4147 = vmatprep.subr.bf16.mxu0 %v3807
        %4148 = vmatpush1.bf16.msra.mxu0 %v3806
        %4149 = vmatprep.subr.bf16.mxu0 %v3815
        %4150 = vmatpush1.bf16.msra.mxu0 %v3814
        %4151 = vmatprep.mubr.bf16.mxu0 %v2541
        %4152 = vmatmul.mubr.bf16.gmra.mrb[0].mxu0 %v2540
        %v4153 = vpop.f32.mrb[0].mxu0
        %v4154 = vadd.f32 %v4113, %v4153
        %v4155 = vpop.f32.mrb[0].mxu0
        %v4156 = vadd.f32 %v4115, %v4155
        %v4157 = vpop.f32.mrb[0].mxu0
        %v4158 = vpop.f32.mrb[0].mxu0
        %4159 = vdwg.mxu0
        %4160 = vmatprep.subr.bf16.mxu0 %v3569
        %4161 = vmatpush1.bf16.msra.mxu0 %v3568
        %4162 = vmatprep.subr.bf16.mxu0 %v3577
        %4163 = vmatpush1.bf16.msra.mxu0 %v3576
        %4164 = vmatprep.subr.bf16.mxu0 %v3585
        %4165 = vmatpush1.bf16.msra.mxu0 %v3584
        %4166 = vmatprep.subr.bf16.mxu0 %v3593
        %4167 = vmatpush1.bf16.msra.mxu0 %v3592
        %4168 = vmatprep.subr.bf16.mxu0 %v3601
        %4169 = vmatpush1.bf16.msra.mxu0 %v3600
        %4170 = vmatprep.subr.bf16.mxu0 %v3609
        %4171 = vmatpush1.bf16.msra.mxu0 %v3608
        %4172 = vmatprep.subr.bf16.mxu0 %v3617
        %4173 = vmatpush1.bf16.msra.mxu0 %v3616
        %4174 = vmatprep.subr.bf16.mxu0 %v3625
        %4175 = vmatpush1.bf16.msra.mxu0 %v3624
        %4176 = vmatprep.subr.bf16.mxu0 %v3633
        %4177 = vmatpush1.bf16.msra.mxu0 %v3632
        %4178 = vmatprep.subr.bf16.mxu0 %v3641
        %4179 = vmatpush1.bf16.msra.mxu0 %v3640
        %4180 = vmatprep.subr.bf16.mxu0 %v3649
        %4181 = vmatpush1.bf16.msra.mxu0 %v3648
        %4182 = vmatprep.subr.bf16.mxu0 %v3657
        %4183 = vmatpush1.bf16.msra.mxu0 %v3656
        %4184 = vmatprep.subr.bf16.mxu0 %v3665
        %4185 = vmatpush1.bf16.msra.mxu0 %v3664
        %4186 = vmatprep.subr.bf16.mxu0 %v3673
        %4187 = vmatpush1.bf16.msra.mxu0 %v3672
        %4188 = vmatprep.subr.bf16.mxu0 %v3681
        %4189 = vmatpush1.bf16.msra.mxu0 %v3680
        %4190 = vmatprep.subr.bf16.mxu0 %v3689
        %4191 = vmatpush1.bf16.msra.mxu0 %v3688
        %4192 = vmatprep.mubr.bf16.mxu0 %v2539
        %4193 = vmatmul.mubr.bf16.gmra.mrb[0].mxu0 %v2538
        %v4194 = vpop.f32.mrb[0].mxu0
        %v4195 = vadd.f32 0.0, %v4194
        %v4196 = vpop.f32.mrb[0].mxu0
        %v4197 = vadd.f32 0.0, %v4196
        %v4198 = vpop.f32.mrb[0].mxu0
        %v4199 = vpop.f32.mrb[0].mxu0
        %4200 = vdwg.mxu0
        %4201 = vmatprep.subr.bf16.mxu0 %v3697
        %4202 = vmatpush1.bf16.msra.mxu0 %v3696
        %4203 = vmatprep.subr.bf16.mxu0 %v3705
        %4204 = vmatpush1.bf16.msra.mxu0 %v3704
        %4205 = vmatprep.subr.bf16.mxu0 %v3713
        %4206 = vmatpush1.bf16.msra.mxu0 %v3712
        %4207 = vmatprep.subr.bf16.mxu0 %v3721
        %4208 = vmatpush1.bf16.msra.mxu0 %v3720
        %4209 = vmatprep.subr.bf16.mxu0 %v3729
        %4210 = vmatpush1.bf16.msra.mxu0 %v3728
        %4211 = vmatprep.subr.bf16.mxu0 %v3737
        %4212 = vmatpush1.bf16.msra.mxu0 %v3736
        %4213 = vmatprep.subr.bf16.mxu0 %v3745
        %4214 = vmatpush1.bf16.msra.mxu0 %v3744
        %4215 = vmatprep.subr.bf16.mxu0 %v3753
        %4216 = vmatpush1.bf16.msra.mxu0 %v3752
        %4217 = vmatprep.subr.bf16.mxu0 %v3761
        %4218 = vmatpush1.bf16.msra.mxu0 %v3760
        %4219 = vmatprep.subr.bf16.mxu0 %v3769
        %4220 = vmatpush1.bf16.msra.mxu0 %v3768
        %4221 = vmatprep.subr.bf16.mxu0 %v3777
        %4222 = vmatpush1.bf16.msra.mxu0 %v3776
        %4223 = vmatprep.subr.bf16.mxu0 %v3785
        %4224 = vmatpush1.bf16.msra.mxu0 %v3784
        %4225 = vmatprep.subr.bf16.mxu0 %v3793
        %4226 = vmatpush1.bf16.msra.mxu0 %v3792
        %4227 = vmatprep.subr.bf16.mxu0 %v3801
        %4228 = vmatpush1.bf16.msra.mxu0 %v3800
        %4229 = vmatprep.subr.bf16.mxu0 %v3809
        %4230 = vmatpush1.bf16.msra.mxu0 %v3808
        %4231 = vmatprep.subr.bf16.mxu0 %v3817
        %4232 = vmatpush1.bf16.msra.mxu0 %v3816
        %4233 = vmatprep.mubr.bf16.mxu0 %v2541
        %4234 = vmatmul.mubr.bf16.gmra.mrb[0].mxu0 %v2540
        %v4235 = vpop.f32.mrb[0].mxu0
        %v4236 = vadd.f32 %v4195, %v4235
        %v4237 = vpop.f32.mrb[0].mxu0
        %v4238 = vadd.f32 %v4197, %v4237
        %v4239 = vpop.f32.mrb[0].mxu0
        %v4240 = vpop.f32.mrb[0].mxu0
        %4241 = vdwg.mxu0
        %4242 = vmatprep.subr.bf16.mxu0 %v3571
        %4243 = vmatpush1.bf16.msra.mxu0 %v3570
        %4244 = vmatprep.subr.bf16.mxu0 %v3579
        %4245 = vmatpush1.bf16.msra.mxu0 %v3578
        %4246 = vmatprep.subr.bf16.mxu0 %v3587
        %4247 = vmatpush1.bf16.msra.mxu0 %v3586
        %4248 = vmatprep.subr.bf16.mxu0 %v3595
        %4249 = vmatpush1.bf16.msra.mxu0 %v3594
        %4250 = vmatprep.subr.bf16.mxu0 %v3603
        %4251 = vmatpush1.bf16.msra.mxu0 %v3602
        %4252 = vmatprep.subr.bf16.mxu0 %v3611
        %4253 = vmatpush1.bf16.msra.mxu0 %v3610
        %4254 = vmatprep.subr.bf16.mxu0 %v3619
        %4255 = vmatpush1.bf16.msra.mxu0 %v3618
        %4256 = vmatprep.subr.bf16.mxu0 %v3627
        %4257 = vmatpush1.bf16.msra.mxu0 %v3626
        %4258 = vmatprep.subr.bf16.mxu0 %v3635
        %4259 = vmatpush1.bf16.msra.mxu0 %v3634
        %4260 = vmatprep.subr.bf16.mxu0 %v3643
        %4261 = vmatpush1.bf16.msra.mxu0 %v3642
        %4262 = vmatprep.subr.bf16.mxu0 %v3651
        %4263 = vmatpush1.bf16.msra.mxu0 %v3650
        %4264 = vmatprep.subr.bf16.mxu0 %v3659
        %4265 = vmatpush1.bf16.msra.mxu0 %v3658
        %4266 = vmatprep.subr.bf16.mxu0 %v3667
        %4267 = vmatpush1.bf16.msra.mxu0 %v3666
        %4268 = vmatprep.subr.bf16.mxu0 %v3675
        %4269 = vmatpush1.bf16.msra.mxu0 %v3674
        %4270 = vmatprep.subr.bf16.mxu0 %v3683
        %4271 = vmatpush1.bf16.msra.mxu0 %v3682
        %4272 = vmatprep.subr.bf16.mxu0 %v3691
        %4273 = vmatpush1.bf16.msra.mxu0 %v3690
        %4274 = vmatprep.mubr.bf16.mxu0 %v2539
        %4275 = vmatmul.mubr.bf16.gmra.mrb[0].mxu0 %v2538
        %v4276 = vpop.f32.mrb[0].mxu0
        %v4277 = vadd.f32 0.0, %v4276
        %v4278 = vpop.f32.mrb[0].mxu0
        %v4279 = vadd.f32 0.0, %v4278
        %v4280 = vpop.f32.mrb[0].mxu0
        %v4281 = vpop.f32.mrb[0].mxu0
        %4282 = vdwg.mxu0
        %4283 = vmatprep.subr.bf16.mxu0 %v3699
        %4284 = vmatpush1.bf16.msra.mxu0 %v3698
        %4285 = vmatprep.subr.bf16.mxu0 %v3707
        %4286 = vmatpush1.bf16.msra.mxu0 %v3706
        %4287 = vmatprep.subr.bf16.mxu0 %v3715
        %4288 = vmatpush1.bf16.msra.mxu0 %v3714
        %4289 = vmatprep.subr.bf16.mxu0 %v3723
        %4290 = vmatpush1.bf16.msra.mxu0 %v3722
        %4291 = vmatprep.subr.bf16.mxu0 %v3731
        %4292 = vmatpush1.bf16.msra.mxu0 %v3730
        %4293 = vmatprep.subr.bf16.mxu0 %v3739
        %4294 = vmatpush1.bf16.msra.mxu0 %v3738
        %4295 = vmatprep.subr.bf16.mxu0 %v3747
        %4296 = vmatpush1.bf16.msra.mxu0 %v3746
        %4297 = vmatprep.subr.bf16.mxu0 %v3755
        %4298 = vmatpush1.bf16.msra.mxu0 %v3754
        %4299 = vmatprep.subr.bf16.mxu0 %v3763
        %4300 = vmatpush1.bf16.msra.mxu0 %v3762
        %4301 = vmatprep.subr.bf16.mxu0 %v3771
        %4302 = vmatpush1.bf16.msra.mxu0 %v3770
        %4303 = vmatprep.subr.bf16.mxu0 %v3779
        %4304 = vmatpush1.bf16.msra.mxu0 %v3778
        %4305 = vmatprep.subr.bf16.mxu0 %v3787
        %4306 = vmatpush1.bf16.msra.mxu0 %v3786
        %4307 = vmatprep.subr.bf16.mxu0 %v3795
        %4308 = vmatpush1.bf16.msra.mxu0 %v3794
        %4309 = vmatprep.subr.bf16.mxu0 %v3803
        %4310 = vmatpush1.bf16.msra.mxu0 %v3802
        %4311 = vmatprep.subr.bf16.mxu0 %v3811
        %4312 = vmatpush1.bf16.msra.mxu0 %v3810
        %4313 = vmatprep.subr.bf16.mxu0 %v3819
        %4314 = vmatpush1.bf16.msra.mxu0 %v3818
        %4315 = vmatprep.mubr.bf16.mxu0 %v2541
        %4316 = vmatmul.mubr.bf16.gmra.mrb[0].mxu0 %v2540
        %v4317 = vpop.f32.mrb[0].mxu0
        %v4318 = vadd.f32 %v4277, %v4317
        %v4319 = vpop.f32.mrb[0].mxu0
        %v4320 = vadd.f32 %v4279, %v4319
        %v4321 = vpop.f32.mrb[0].mxu0
        %v4322 = vpop.f32.mrb[0].mxu0
        %4323 = vdwg.mxu0
        %4324 = vmatprep.subr.bf16.mxu0 %v3573
        %4325 = vmatpush1.bf16.msra.mxu0 %v3572
        %4326 = vmatprep.subr.bf16.mxu0 %v3581
        %4327 = vmatpush1.bf16.msra.mxu0 %v3580
        %4328 = vmatprep.subr.bf16.mxu0 %v3589
        %4329 = vmatpush1.bf16.msra.mxu0 %v3588
        %4330 = vmatprep.subr.bf16.mxu0 %v3597
        %4331 = vmatpush1.bf16.msra.mxu0 %v3596
        %4332 = vmatprep.subr.bf16.mxu0 %v3605
        %4333 = vmatpush1.bf16.msra.mxu0 %v3604
        %4334 = vmatprep.subr.bf16.mxu0 %v3613
        %4335 = vmatpush1.bf16.msra.mxu0 %v3612
        %4336 = vmatprep.subr.bf16.mxu0 %v3621
        %4337 = vmatpush1.bf16.msra.mxu0 %v3620
        %4338 = vmatprep.subr.bf16.mxu0 %v3629
        %4339 = vmatpush1.bf16.msra.mxu0 %v3628
        %4340 = vmatprep.subr.bf16.mxu0 %v3637
        %4341 = vmatpush1.bf16.msra.mxu0 %v3636
        %4342 = vmatprep.subr.bf16.mxu0 %v3645
        %4343 = vmatpush1.bf16.msra.mxu0 %v3644
        %4344 = vmatprep.subr.bf16.mxu0 %v3653
        %4345 = vmatpush1.bf16.msra.mxu0 %v3652
        %4346 = vmatprep.subr.bf16.mxu0 %v3661
        %4347 = vmatpush1.bf16.msra.mxu0 %v3660
        %4348 = vmatprep.subr.bf16.mxu0 %v3669
        %4349 = vmatpush1.bf16.msra.mxu0 %v3668
        %4350 = vmatprep.subr.bf16.mxu0 %v3677
        %4351 = vmatpush1.bf16.msra.mxu0 %v3676
        %4352 = vmatprep.subr.bf16.mxu0 %v3685
        %4353 = vmatpush1.bf16.msra.mxu0 %v3684
        %4354 = vmatprep.subr.bf16.mxu0 %v3693
        %4355 = vmatpush1.bf16.msra.mxu0 %v3692
        %4356 = vmatprep.mubr.bf16.mxu0 %v2539
        %4357 = vmatmul.mubr.bf16.gmra.mrb[0].mxu0 %v2538
        %v4358 = vpop.f32.mrb[0].mxu0
        %v4359 = vadd.f32 0.0, %v4358
        %v4360 = vpop.f32.mrb[0].mxu0
        %v4361 = vadd.f32 0.0, %v4360
        %v4362 = vpop.f32.mrb[0].mxu0
        %v4363 = vpop.f32.mrb[0].mxu0
        %4364 = vdwg.mxu0
        %4365 = vmatprep.subr.bf16.mxu0 %v3701
        %4366 = vmatpush1.bf16.msra.mxu0 %v3700
        %4367 = vmatprep.subr.bf16.mxu0 %v3709
        %4368 = vmatpush1.bf16.msra.mxu0 %v3708
        %4369 = vmatprep.subr.bf16.mxu0 %v3717
        %4370 = vmatpush1.bf16.msra.mxu0 %v3716
        %4371 = vmatprep.subr.bf16.mxu0 %v3725
        %4372 = vmatpush1.bf16.msra.mxu0 %v3724
        %4373 = vmatprep.subr.bf16.mxu0 %v3733
        %4374 = vmatpush1.bf16.msra.mxu0 %v3732
        %4375 = vmatprep.subr.bf16.mxu0 %v3741
        %4376 = vmatpush1.bf16.msra.mxu0 %v3740
        %4377 = vmatprep.subr.bf16.mxu0 %v3749
        %4378 = vmatpush1.bf16.msra.mxu0 %v3748
        %4379 = vmatprep.subr.bf16.mxu0 %v3757
        %4380 = vmatpush1.bf16.msra.mxu0 %v3756
        %4381 = vmatprep.subr.bf16.mxu0 %v3765
        %4382 = vmatpush1.bf16.msra.mxu0 %v3764
        %4383 = vmatprep.subr.bf16.mxu0 %v3773
        %4384 = vmatpush1.bf16.msra.mxu0 %v3772
        %4385 = vmatprep.subr.bf16.mxu0 %v3781
        %4386 = vmatpush1.bf16.msra.mxu0 %v3780
        %4387 = vmatprep.subr.bf16.mxu0 %v3789
        %4388 = vmatpush1.bf16.msra.mxu0 %v3788
        %4389 = vmatprep.subr.bf16.mxu0 %v3797
        %4390 = vmatpush1.bf16.msra.mxu0 %v3796
        %4391 = vmatprep.subr.bf16.mxu0 %v3805
        %4392 = vmatpush1.bf16.msra.mxu0 %v3804
        %4393 = vmatprep.subr.bf16.mxu0 %v3813
        %4394 = vmatpush1.bf16.msra.mxu0 %v3812
        %4395 = vmatprep.subr.bf16.mxu0 %v3821
        %4396 = vmatpush1.bf16.msra.mxu0 %v3820
        %4397 = vmatprep.mubr.bf16.mxu0 %v2541
        %4398 = vmatmul.mubr.bf16.gmra.mrb[0].mxu0 %v2540
        %v4399 = vpop.f32.mrb[0].mxu0
        %v4400 = vadd.f32 %v4359, %v4399
        %v4401 = vpop.f32.mrb[0].mxu0
        %v4402 = vadd.f32 %v4361, %v4401
        %v4403 = vpop.f32.mrb[0].mxu0
        %v4404 = vpop.f32.mrb[0].mxu0
        %4405 = vdwg.mxu0
        %v4406 = vadd.f32 %v2530, %v4154
        %v4407 = vadd.f32 %v2531, %v4156
        %v4408 = vadd.f32 %v2532, %v4236
        %v4409 = vadd.f32 %v2533, %v4238
        %v4410 = vadd.f32 %v2534, %v4318
        %v4411 = vadd.f32 %v2535, %v4320
        %v4412 = vadd.f32 %v2536, %v4400
        %v4413 = vadd.f32 %v2537, %v4402
        %4414 = vst [vmem:[#allocation2] sm:$0xff] %v4406
        %4415 = vst [vmem:[#allocation2 + $0x8] sm:$0xff] %v4407
        %4416 = vst [vmem:[#allocation2 + $0x10] sm:$0xff] %v4408
        %4417 = vst [vmem:[#allocation2 + $0x18] sm:$0xff] %v4409
        %4418 = vst [vmem:[#allocation2 + $0x20] sm:$0xff] %v4410
        %4419 = vst [vmem:[#allocation2 + $0x28] sm:$0xff] %v4411
        %4420 = vst [vmem:[#allocation2 + $0x30] sm:$0xff] %v4412
        %4421 = vst [vmem:[#allocation2 + $0x38] sm:$0xff] %v4413
        %p4422 = scmp.eq.s32.totalorder %s38, 3
        // Predicated region
        $region113: #{tpu_custom_call.1} parent=63 // pred_check
          %p4423 = pneg %p4422
        $region114: #{tpu_custom_call.1} parent=63 // pred_check_branch
          %4425 = sbr.rel (%p4423) target = $region116
        $region115: #{tpu_custom_call.1} parent=63 // pred_region
          %v4426 = vld [vmem:[#allocation2] sm:$0xff]
          %v4427 = vld [vmem:[#allocation2 + $0x8] sm:$0xff]
          %v4428 = vld [vmem:[#allocation2 + $0x10] sm:$0xff]
          %v4429 = vld [vmem:[#allocation2 + $0x18] sm:$0xff]
          %v4430 = vld [vmem:[#allocation2 + $0x20] sm:$0xff]
          %v4431 = vld [vmem:[#allocation2 + $0x28] sm:$0xff]
          %v4432 = vld [vmem:[#allocation2 + $0x30] sm:$0xff]
          %v4433 = vld [vmem:[#allocation2 + $0x38] sm:$0xff]
          %v4434 = vld [vmem:[#allocation11] sm:$0xff]
          %v4436 = vlaneseq
          %v4437 = vshrl.u32 %v4436, 7
          %v4438 = vsub.s32 0, %v4437
          %v4439 = vrot.slane %v4434, %v4438
          %v4440 = vlaneseq
          %v4441 = vshrl.u32 %v4440, 7
          %v4442 = vsub.s32 1, %v4441
          %v4443 = vrot.slane %v4434, %v4442
          %v4444 = vlaneseq
          %v4445 = vshrl.u32 %v4444, 7
          %v4446 = vsub.s32 2, %v4445
          %v4447 = vrot.slane %v4434, %v4446
          %v4448 = vlaneseq
          %v4449 = vshrl.u32 %v4448, 7
          %v4450 = vsub.s32 3, %v4449
          %v4451 = vrot.slane %v4434, %v4450
          %v4452 = vlaneseq
          %v4453 = vshrl.u32 %v4452, 7
          %v4454 = vsub.s32 4, %v4453
          %v4455 = vrot.slane %v4434, %v4454
          %v4456 = vlaneseq
          %v4457 = vshrl.u32 %v4456, 7
          %v4458 = vsub.s32 5, %v4457
          %v4459 = vrot.slane %v4434, %v4458
          %v4460 = vlaneseq
          %v4461 = vshrl.u32 %v4460, 7
          %v4462 = vsub.s32 6, %v4461
          %v4463 = vrot.slane %v4434, %v4462
          %v4464 = vlaneseq
          %v4465 = vshrl.u32 %v4464, 7
          %v4466 = vsub.s32 7, %v4465
          %v4467 = vrot.slane %v4434, %v4466
          %v4476 = vadd.f32 %v4426, %v4439
          %v4477 = vadd.f32 %v4427, %v4443
          %v4478 = vadd.f32 %v4428, %v4447
          %v4479 = vadd.f32 %v4429, %v4451
          %v4480 = vadd.f32 %v4430, %v4455
          %v4481 = vadd.f32 %v4431, %v4459
          %v4482 = vadd.f32 %v4432, %v4463
          %v4483 = vadd.f32 %v4433, %v4467
          %vm4484 = vcmp.gt.f32.partialorder %v4476, 0.0
          %vm4485 = vcmp.gt.f32.partialorder %v4477, 0.0
          %vm4486 = vcmp.gt.f32.partialorder %v4478, 0.0
          %vm4487 = vcmp.gt.f32.partialorder %v4479, 0.0
          %vm4488 = vcmp.gt.f32.partialorder %v4480, 0.0
          %vm4489 = vcmp.gt.f32.partialorder %v4481, 0.0
          %vm4490 = vcmp.gt.f32.partialorder %v4482, 0.0
          %vm4491 = vcmp.gt.f32.partialorder %v4483, 0.0
          %v4492 = vmul.f32 %v4476, 0.2
          %v4493 = vmul.f32 %v4477, 0.2
          %v4494 = vmul.f32 %v4478, 0.2
          %v4495 = vmul.f32 %v4479, 0.2
          %v4496 = vmul.f32 %v4480, 0.2
          %v4497 = vmul.f32 %v4481, 0.2
          %v4498 = vmul.f32 %v4482, 0.2
          %v4499 = vmul.f32 %v4483, 0.2
          %v4500 = vsel %vm4484, %v4476, %v4492
          %v4501 = vsel %vm4485, %v4477, %v4493
          %v4502 = vsel %vm4486, %v4478, %v4494
          %v4503 = vsel %vm4487, %v4479, %v4495
          %v4504 = vsel %vm4488, %v4480, %v4496
          %v4505 = vsel %vm4489, %v4481, %v4497
          %v4506 = vsel %vm4490, %v4482, %v4498
          %v4507 = vsel %vm4491, %v4483, %v4499
          %v4508 = vpack.c.bf16 %v4500, %v4500
          %v4509 = vpack.c.bf16 %v4501, %v4501
          %v4510 = vpack.c.bf16 %v4502, %v4502
          %v4511 = vpack.c.bf16 %v4503, %v4503
          %v4512 = vpack.c.bf16 %v4504, %v4504
          %v4513 = vpack.c.bf16 %v4505, %v4505
          %v4514 = vpack.c.bf16 %v4506, %v4506
          %v4515 = vpack.c.bf16 %v4507, %v4507
          %v4516 = vld [vmem:[#allocation12] sm:$0xff]
          %v4517 = vld [vmem:[#allocation12 + $0x8] sm:$0xff]
          %v4518 = vld [vmem:[#allocation12 + $0x10] sm:$0xff]
          %v4519 = vld [vmem:[#allocation12 + $0x18] sm:$0xff]
          %v4520 = vld [vmem:[#allocation12 + $0x20] sm:$0xff]
          %v4521 = vld [vmem:[#allocation12 + $0x28] sm:$0xff]
          %v4522 = vld [vmem:[#allocation12 + $0x30] sm:$0xff]
          %v4523 = vld [vmem:[#allocation12 + $0x38] sm:$0xff]
          %v4524 = vld [vmem:[#allocation12 + $0x40] sm:$0xff]
          %v4525 = vld [vmem:[#allocation12 + $0x48] sm:$0xff]
          %v4526 = vld [vmem:[#allocation12 + $0x50] sm:$0xff]
          %v4527 = vld [vmem:[#allocation12 + $0x58] sm:$0xff]
          %v4528 = vld [vmem:[#allocation12 + $0x60] sm:$0xff]
          %v4529 = vld [vmem:[#allocation12 + $0x68] sm:$0xff]
          %v4530 = vld [vmem:[#allocation12 + $0x70] sm:$0xff]
          %v4531 = vld [vmem:[#allocation12 + $0x78] sm:$0xff]
          %v4532 = vld [vmem:[#allocation12 + $0x80] sm:$0xff]
          %v4533 = vld [vmem:[#allocation12 + $0x88] sm:$0xff]
          %v4534 = vld [vmem:[#allocation12 + $0x90] sm:$0xff]
          %v4535 = vld [vmem:[#allocation12 + $0x98] sm:$0xff]
          %v4536 = vld [vmem:[#allocation12 + $0xa0] sm:$0xff]
          %v4537 = vld [vmem:[#allocation12 + $0xa8] sm:$0xff]
          %v4538 = vld [vmem:[#allocation12 + $0xb0] sm:$0xff]
          %v4539 = vld [vmem:[#allocation12 + $0xb8] sm:$0xff]
          %v4540 = vld [vmem:[#allocation12 + $0xc0] sm:$0xff]
          %v4541 = vld [vmem:[#allocation12 + $0xc8] sm:$0xff]
          %v4542 = vld [vmem:[#allocation12 + $0xd0] sm:$0xff]
          %v4543 = vld [vmem:[#allocation12 + $0xd8] sm:$0xff]
          %v4544 = vld [vmem:[#allocation12 + $0xe0] sm:$0xff]
          %v4545 = vld [vmem:[#allocation12 + $0xe8] sm:$0xff]
          %v4546 = vld [vmem:[#allocation12 + $0xf0] sm:$0xff]
          %v4547 = vld [vmem:[#allocation12 + $0xf8] sm:$0xff]
          %v4548 = vld [vmem:[#allocation12 + $0x100] sm:$0xff]
          %v4549 = vld [vmem:[#allocation12 + $0x108] sm:$0xff]
          %v4550 = vld [vmem:[#allocation12 + $0x110] sm:$0xff]
          %v4551 = vld [vmem:[#allocation12 + $0x118] sm:$0xff]
          %v4552 = vld [vmem:[#allocation12 + $0x120] sm:$0xff]
          %v4553 = vld [vmem:[#allocation12 + $0x128] sm:$0xff]
          %v4554 = vld [vmem:[#allocation12 + $0x130] sm:$0xff]
          %v4555 = vld [vmem:[#allocation12 + $0x138] sm:$0xff]
          %v4556 = vld [vmem:[#allocation12 + $0x140] sm:$0xff]
          %v4557 = vld [vmem:[#allocation12 + $0x148] sm:$0xff]
          %v4558 = vld [vmem:[#allocation12 + $0x150] sm:$0xff]
          %v4559 = vld [vmem:[#allocation12 + $0x158] sm:$0xff]
          %v4560 = vld [vmem:[#allocation12 + $0x160] sm:$0xff]
          %v4561 = vld [vmem:[#allocation12 + $0x168] sm:$0xff]
          %v4562 = vld [vmem:[#allocation12 + $0x170] sm:$0xff]
          %v4563 = vld [vmem:[#allocation12 + $0x178] sm:$0xff]
          %v4564 = vld [vmem:[#allocation12 + $0x180] sm:$0xff]
          %v4565 = vld [vmem:[#allocation12 + $0x188] sm:$0xff]
          %v4566 = vld [vmem:[#allocation12 + $0x190] sm:$0xff]
          %v4567 = vld [vmem:[#allocation12 + $0x198] sm:$0xff]
          %v4568 = vld [vmem:[#allocation12 + $0x1a0] sm:$0xff]
          %v4569 = vld [vmem:[#allocation12 + $0x1a8] sm:$0xff]
          %v4570 = vld [vmem:[#allocation12 + $0x1b0] sm:$0xff]
          %v4571 = vld [vmem:[#allocation12 + $0x1b8] sm:$0xff]
          %v4572 = vld [vmem:[#allocation12 + $0x1c0] sm:$0xff]
          %v4573 = vld [vmem:[#allocation12 + $0x1c8] sm:$0xff]
          %v4574 = vld [vmem:[#allocation12 + $0x1d0] sm:$0xff]
          %v4575 = vld [vmem:[#allocation12 + $0x1d8] sm:$0xff]
          %v4576 = vld [vmem:[#allocation12 + $0x1e0] sm:$0xff]
          %v4577 = vld [vmem:[#allocation12 + $0x1e8] sm:$0xff]
          %v4578 = vld [vmem:[#allocation12 + $0x1f0] sm:$0xff]
          %v4579 = vld [vmem:[#allocation12 + $0x1f8] sm:$0xff]
          %v4580 = vld [vmem:[#allocation12 + $0x200] sm:$0xff]
          %v4581 = vld [vmem:[#allocation12 + $0x208] sm:$0xff]
          %v4582 = vld [vmem:[#allocation12 + $0x210] sm:$0xff]
          %v4583 = vld [vmem:[#allocation12 + $0x218] sm:$0xff]
          %v4584 = vld [vmem:[#allocation12 + $0x220] sm:$0xff]
          %v4585 = vld [vmem:[#allocation12 + $0x228] sm:$0xff]
          %v4586 = vld [vmem:[#allocation12 + $0x230] sm:$0xff]
          %v4587 = vld [vmem:[#allocation12 + $0x238] sm:$0xff]
          %v4588 = vld [vmem:[#allocation12 + $0x240] sm:$0xff]
          %v4589 = vld [vmem:[#allocation12 + $0x248] sm:$0xff]
          %v4590 = vld [vmem:[#allocation12 + $0x250] sm:$0xff]
          %v4591 = vld [vmem:[#allocation12 + $0x258] sm:$0xff]
          %v4592 = vld [vmem:[#allocation12 + $0x260] sm:$0xff]
          %v4593 = vld [vmem:[#allocation12 + $0x268] sm:$0xff]
          %v4594 = vld [vmem:[#allocation12 + $0x270] sm:$0xff]
          %v4595 = vld [vmem:[#allocation12 + $0x278] sm:$0xff]
          %v4596 = vld [vmem:[#allocation12 + $0x280] sm:$0xff]
          %v4597 = vld [vmem:[#allocation12 + $0x288] sm:$0xff]
          %v4598 = vld [vmem:[#allocation12 + $0x290] sm:$0xff]
          %v4599 = vld [vmem:[#allocation12 + $0x298] sm:$0xff]
          %v4600 = vld [vmem:[#allocation12 + $0x2a0] sm:$0xff]
          %v4601 = vld [vmem:[#allocation12 + $0x2a8] sm:$0xff]
          %v4602 = vld [vmem:[#allocation12 + $0x2b0] sm:$0xff]
          %v4603 = vld [vmem:[#allocation12 + $0x2b8] sm:$0xff]
          %v4604 = vld [vmem:[#allocation12 + $0x2c0] sm:$0xff]
          %v4605 = vld [vmem:[#allocation12 + $0x2c8] sm:$0xff]
          %v4606 = vld [vmem:[#allocation12 + $0x2d0] sm:$0xff]
          %v4607 = vld [vmem:[#allocation12 + $0x2d8] sm:$0xff]
          %v4608 = vld [vmem:[#allocation12 + $0x2e0] sm:$0xff]
          %v4609 = vld [vmem:[#allocation12 + $0x2e8] sm:$0xff]
          %v4610 = vld [vmem:[#allocation12 + $0x2f0] sm:$0xff]
          %v4611 = vld [vmem:[#allocation12 + $0x2f8] sm:$0xff]
          %v4612 = vld [vmem:[#allocation12 + $0x300] sm:$0xff]
          %v4613 = vld [vmem:[#allocation12 + $0x308] sm:$0xff]
          %v4614 = vld [vmem:[#allocation12 + $0x310] sm:$0xff]
          %v4615 = vld [vmem:[#allocation12 + $0x318] sm:$0xff]
          %v4616 = vld [vmem:[#allocation12 + $0x320] sm:$0xff]
          %v4617 = vld [vmem:[#allocation12 + $0x328] sm:$0xff]
          %v4618 = vld [vmem:[#allocation12 + $0x330] sm:$0xff]
          %v4619 = vld [vmem:[#allocation12 + $0x338] sm:$0xff]
          %v4620 = vld [vmem:[#allocation12 + $0x340] sm:$0xff]
          %v4621 = vld [vmem:[#allocation12 + $0x348] sm:$0xff]
          %v4622 = vld [vmem:[#allocation12 + $0x350] sm:$0xff]
          %v4623 = vld [vmem:[#allocation12 + $0x358] sm:$0xff]
          %v4624 = vld [vmem:[#allocation12 + $0x360] sm:$0xff]
          %v4625 = vld [vmem:[#allocation12 + $0x368] sm:$0xff]
          %v4626 = vld [vmem:[#allocation12 + $0x370] sm:$0xff]
          %v4627 = vld [vmem:[#allocation12 + $0x378] sm:$0xff]
          %v4628 = vld [vmem:[#allocation12 + $0x380] sm:$0xff]
          %v4629 = vld [vmem:[#allocation12 + $0x388] sm:$0xff]
          %v4630 = vld [vmem:[#allocation12 + $0x390] sm:$0xff]
          %v4631 = vld [vmem:[#allocation12 + $0x398] sm:$0xff]
          %v4632 = vld [vmem:[#allocation12 + $0x3a0] sm:$0xff]
          %v4633 = vld [vmem:[#allocation12 + $0x3a8] sm:$0xff]
          %v4634 = vld [vmem:[#allocation12 + $0x3b0] sm:$0xff]
          %v4635 = vld [vmem:[#allocation12 + $0x3b8] sm:$0xff]
          %v4636 = vld [vmem:[#allocation12 + $0x3c0] sm:$0xff]
          %v4637 = vld [vmem:[#allocation12 + $0x3c8] sm:$0xff]
          %v4638 = vld [vmem:[#allocation12 + $0x3d0] sm:$0xff]
          %v4639 = vld [vmem:[#allocation12 + $0x3d8] sm:$0xff]
          %v4640 = vld [vmem:[#allocation12 + $0x3e0] sm:$0xff]
          %v4641 = vld [vmem:[#allocation12 + $0x3e8] sm:$0xff]
          %v4642 = vld [vmem:[#allocation12 + $0x3f0] sm:$0xff]
          %v4643 = vld [vmem:[#allocation12 + $0x3f8] sm:$0xff]
          %v4644 = vld [vmem:[#allocation12 + $0x400] sm:$0xff]
          %v4645 = vld [vmem:[#allocation12 + $0x408] sm:$0xff]
          %v4646 = vld [vmem:[#allocation12 + $0x410] sm:$0xff]
          %v4647 = vld [vmem:[#allocation12 + $0x418] sm:$0xff]
          %v4648 = vld [vmem:[#allocation12 + $0x420] sm:$0xff]
          %v4649 = vld [vmem:[#allocation12 + $0x428] sm:$0xff]
          %v4650 = vld [vmem:[#allocation12 + $0x430] sm:$0xff]
          %v4651 = vld [vmem:[#allocation12 + $0x438] sm:$0xff]
          %v4652 = vld [vmem:[#allocation12 + $0x440] sm:$0xff]
          %v4653 = vld [vmem:[#allocation12 + $0x448] sm:$0xff]
          %v4654 = vld [vmem:[#allocation12 + $0x450] sm:$0xff]
          %v4655 = vld [vmem:[#allocation12 + $0x458] sm:$0xff]
          %v4656 = vld [vmem:[#allocation12 + $0x460] sm:$0xff]
          %v4657 = vld [vmem:[#allocation12 + $0x468] sm:$0xff]
          %v4658 = vld [vmem:[#allocation12 + $0x470] sm:$0xff]
          %v4659 = vld [vmem:[#allocation12 + $0x478] sm:$0xff]
          %v4660 = vld [vmem:[#allocation12 + $0x480] sm:$0xff]
          %v4661 = vld [vmem:[#allocation12 + $0x488] sm:$0xff]
          %v4662 = vld [vmem:[#allocation12 + $0x490] sm:$0xff]
          %v4663 = vld [vmem:[#allocation12 + $0x498] sm:$0xff]
          %v4664 = vld [vmem:[#allocation12 + $0x4a0] sm:$0xff]
          %v4665 = vld [vmem:[#allocation12 + $0x4a8] sm:$0xff]
          %v4666 = vld [vmem:[#allocation12 + $0x4b0] sm:$0xff]
          %v4667 = vld [vmem:[#allocation12 + $0x4b8] sm:$0xff]
          %v4668 = vld [vmem:[#allocation12 + $0x4c0] sm:$0xff]
          %v4669 = vld [vmem:[#allocation12 + $0x4c8] sm:$0xff]
          %v4670 = vld [vmem:[#allocation12 + $0x4d0] sm:$0xff]
          %v4671 = vld [vmem:[#allocation12 + $0x4d8] sm:$0xff]
          %v4672 = vld [vmem:[#allocation12 + $0x4e0] sm:$0xff]
          %v4673 = vld [vmem:[#allocation12 + $0x4e8] sm:$0xff]
          %v4674 = vld [vmem:[#allocation12 + $0x4f0] sm:$0xff]
          %v4675 = vld [vmem:[#allocation12 + $0x4f8] sm:$0xff]
          %v4676 = vld [vmem:[#allocation12 + $0x500] sm:$0xff]
          %v4677 = vld [vmem:[#allocation12 + $0x508] sm:$0xff]
          %v4678 = vld [vmem:[#allocation12 + $0x510] sm:$0xff]
          %v4679 = vld [vmem:[#allocation12 + $0x518] sm:$0xff]
          %v4680 = vld [vmem:[#allocation12 + $0x520] sm:$0xff]
          %v4681 = vld [vmem:[#allocation12 + $0x528] sm:$0xff]
          %v4682 = vld [vmem:[#allocation12 + $0x530] sm:$0xff]
          %v4683 = vld [vmem:[#allocation12 + $0x538] sm:$0xff]
          %v4684 = vld [vmem:[#allocation12 + $0x540] sm:$0xff]
          %v4685 = vld [vmem:[#allocation12 + $0x548] sm:$0xff]
          %v4686 = vld [vmem:[#allocation12 + $0x550] sm:$0xff]
          %v4687 = vld [vmem:[#allocation12 + $0x558] sm:$0xff]
          %v4688 = vld [vmem:[#allocation12 + $0x560] sm:$0xff]
          %v4689 = vld [vmem:[#allocation12 + $0x568] sm:$0xff]
          %v4690 = vld [vmem:[#allocation12 + $0x570] sm:$0xff]
          %v4691 = vld [vmem:[#allocation12 + $0x578] sm:$0xff]
          %v4692 = vld [vmem:[#allocation12 + $0x580] sm:$0xff]
          %v4693 = vld [vmem:[#allocation12 + $0x588] sm:$0xff]
          %v4694 = vld [vmem:[#allocation12 + $0x590] sm:$0xff]
          %v4695 = vld [vmem:[#allocation12 + $0x598] sm:$0xff]
          %v4696 = vld [vmem:[#allocation12 + $0x5a0] sm:$0xff]
          %v4697 = vld [vmem:[#allocation12 + $0x5a8] sm:$0xff]
          %v4698 = vld [vmem:[#allocation12 + $0x5b0] sm:$0xff]
          %v4699 = vld [vmem:[#allocation12 + $0x5b8] sm:$0xff]
          %v4700 = vld [vmem:[#allocation12 + $0x5c0] sm:$0xff]
          %v4701 = vld [vmem:[#allocation12 + $0x5c8] sm:$0xff]
          %v4702 = vld [vmem:[#allocation12 + $0x5d0] sm:$0xff]
          %v4703 = vld [vmem:[#allocation12 + $0x5d8] sm:$0xff]
          %v4704 = vld [vmem:[#allocation12 + $0x5e0] sm:$0xff]
          %v4705 = vld [vmem:[#allocation12 + $0x5e8] sm:$0xff]
          %v4706 = vld [vmem:[#allocation12 + $0x5f0] sm:$0xff]
          %v4707 = vld [vmem:[#allocation12 + $0x5f8] sm:$0xff]
          %v4708 = vld [vmem:[#allocation12 + $0x600] sm:$0xff]
          %v4709 = vld [vmem:[#allocation12 + $0x608] sm:$0xff]
          %v4710 = vld [vmem:[#allocation12 + $0x610] sm:$0xff]
          %v4711 = vld [vmem:[#allocation12 + $0x618] sm:$0xff]
          %v4712 = vld [vmem:[#allocation12 + $0x620] sm:$0xff]
          %v4713 = vld [vmem:[#allocation12 + $0x628] sm:$0xff]
          %v4714 = vld [vmem:[#allocation12 + $0x630] sm:$0xff]
          %v4715 = vld [vmem:[#allocation12 + $0x638] sm:$0xff]
          %v4716 = vld [vmem:[#allocation12 + $0x640] sm:$0xff]
          %v4717 = vld [vmem:[#allocation12 + $0x648] sm:$0xff]
          %v4718 = vld [vmem:[#allocation12 + $0x650] sm:$0xff]
          %v4719 = vld [vmem:[#allocation12 + $0x658] sm:$0xff]
          %v4720 = vld [vmem:[#allocation12 + $0x660] sm:$0xff]
          %v4721 = vld [vmem:[#allocation12 + $0x668] sm:$0xff]
          %v4722 = vld [vmem:[#allocation12 + $0x670] sm:$0xff]
          %v4723 = vld [vmem:[#allocation12 + $0x678] sm:$0xff]
          %v4724 = vld [vmem:[#allocation12 + $0x680] sm:$0xff]
          %v4725 = vld [vmem:[#allocation12 + $0x688] sm:$0xff]
          %v4726 = vld [vmem:[#allocation12 + $0x690] sm:$0xff]
          %v4727 = vld [vmem:[#allocation12 + $0x698] sm:$0xff]
          %v4728 = vld [vmem:[#allocation12 + $0x6a0] sm:$0xff]
          %v4729 = vld [vmem:[#allocation12 + $0x6a8] sm:$0xff]
          %v4730 = vld [vmem:[#allocation12 + $0x6b0] sm:$0xff]
          %v4731 = vld [vmem:[#allocation12 + $0x6b8] sm:$0xff]
          %v4732 = vld [vmem:[#allocation12 + $0x6c0] sm:$0xff]
          %v4733 = vld [vmem:[#allocation12 + $0x6c8] sm:$0xff]
          %v4734 = vld [vmem:[#allocation12 + $0x6d0] sm:$0xff]
          %v4735 = vld [vmem:[#allocation12 + $0x6d8] sm:$0xff]
          %v4736 = vld [vmem:[#allocation12 + $0x6e0] sm:$0xff]
          %v4737 = vld [vmem:[#allocation12 + $0x6e8] sm:$0xff]
          %v4738 = vld [vmem:[#allocation12 + $0x6f0] sm:$0xff]
          %v4739 = vld [vmem:[#allocation12 + $0x6f8] sm:$0xff]
          %v4740 = vld [vmem:[#allocation12 + $0x700] sm:$0xff]
          %v4741 = vld [vmem:[#allocation12 + $0x708] sm:$0xff]
          %v4742 = vld [vmem:[#allocation12 + $0x710] sm:$0xff]
          %v4743 = vld [vmem:[#allocation12 + $0x718] sm:$0xff]
          %v4744 = vld [vmem:[#allocation12 + $0x720] sm:$0xff]
          %v4745 = vld [vmem:[#allocation12 + $0x728] sm:$0xff]
          %v4746 = vld [vmem:[#allocation12 + $0x730] sm:$0xff]
          %v4747 = vld [vmem:[#allocation12 + $0x738] sm:$0xff]
          %v4748 = vld [vmem:[#allocation12 + $0x740] sm:$0xff]
          %v4749 = vld [vmem:[#allocation12 + $0x748] sm:$0xff]
          %v4750 = vld [vmem:[#allocation12 + $0x750] sm:$0xff]
          %v4751 = vld [vmem:[#allocation12 + $0x758] sm:$0xff]
          %v4752 = vld [vmem:[#allocation12 + $0x760] sm:$0xff]
          %v4753 = vld [vmem:[#allocation12 + $0x768] sm:$0xff]
          %v4754 = vld [vmem:[#allocation12 + $0x770] sm:$0xff]
          %v4755 = vld [vmem:[#allocation12 + $0x778] sm:$0xff]
          %v4756 = vld [vmem:[#allocation12 + $0x780] sm:$0xff]
          %v4757 = vld [vmem:[#allocation12 + $0x788] sm:$0xff]
          %v4758 = vld [vmem:[#allocation12 + $0x790] sm:$0xff]
          %v4759 = vld [vmem:[#allocation12 + $0x798] sm:$0xff]
          %v4760 = vld [vmem:[#allocation12 + $0x7a0] sm:$0xff]
          %v4761 = vld [vmem:[#allocation12 + $0x7a8] sm:$0xff]
          %v4762 = vld [vmem:[#allocation12 + $0x7b0] sm:$0xff]
          %v4763 = vld [vmem:[#allocation12 + $0x7b8] sm:$0xff]
          %v4764 = vld [vmem:[#allocation12 + $0x7c0] sm:$0xff]
          %v4765 = vld [vmem:[#allocation12 + $0x7c8] sm:$0xff]
          %v4766 = vld [vmem:[#allocation12 + $0x7d0] sm:$0xff]
          %v4767 = vld [vmem:[#allocation12 + $0x7d8] sm:$0xff]
          %v4768 = vld [vmem:[#allocation12 + $0x7e0] sm:$0xff]
          %v4769 = vld [vmem:[#allocation12 + $0x7e8] sm:$0xff]
          %v4770 = vld [vmem:[#allocation12 + $0x7f0] sm:$0xff]
          %v4771 = vld [vmem:[#allocation12 + $0x7f8] sm:$0xff]
          %v4772 = vld [vmem:[#allocation14] sm:$0xf]
          %v4774 = vlaneseq
          %v4775 = vshrl.u32 %v4774, 7
          %v4776 = vsub.s32 0, %v4775
          %v4777 = vrot.slane %v4772, %v4776
          %v4778 = vlaneseq
          %v4779 = vshrl.u32 %v4778, 7
          %v4780 = vsub.s32 1, %v4779
          %v4781 = vrot.slane %v4772, %v4780
          %v4782 = vlaneseq
          %v4783 = vshrl.u32 %v4782, 7
          %v4784 = vsub.s32 2, %v4783
          %v4785 = vrot.slane %v4772, %v4784
          %v4786 = vlaneseq
          %v4787 = vshrl.u32 %v4786, 7
          %v4788 = vsub.s32 3, %v4787
          %v4789 = vrot.slane %v4772, %v4788
          %v5050 = vunpack.c.l.b16 %v4516
          %v5051 = vunpack.c.h.b16 %v4516
          %v5052 = vunpack.c.l.b16 %v4517
          %v5053 = vunpack.c.h.b16 %v4517
          %v5054 = vunpack.c.l.b16 %v4518
          %v5055 = vunpack.c.h.b16 %v4518
          %v5056 = vunpack.c.l.b16 %v4519
          %v5057 = vunpack.c.h.b16 %v4519
          %v5058 = vunpack.c.l.b16 %v4520
          %v5059 = vunpack.c.h.b16 %v4520
          %v5060 = vunpack.c.l.b16 %v4521
          %v5061 = vunpack.c.h.b16 %v4521
          %v5062 = vunpack.c.l.b16 %v4522
          %v5063 = vunpack.c.h.b16 %v4522
          %v5064 = vunpack.c.l.b16 %v4523
          %v5065 = vunpack.c.h.b16 %v4523
          %v5066 = vunpack.c.l.b16 %v4524
          %v5067 = vunpack.c.h.b16 %v4524
          %v5068 = vunpack.c.l.b16 %v4525
          %v5069 = vunpack.c.h.b16 %v4525
          %v5070 = vunpack.c.l.b16 %v4526
          %v5071 = vunpack.c.h.b16 %v4526
          %v5072 = vunpack.c.l.b16 %v4527
          %v5073 = vunpack.c.h.b16 %v4527
          %v5074 = vunpack.c.l.b16 %v4528
          %v5075 = vunpack.c.h.b16 %v4528
          %v5076 = vunpack.c.l.b16 %v4529
          %v5077 = vunpack.c.h.b16 %v4529
          %v5078 = vunpack.c.l.b16 %v4530
          %v5079 = vunpack.c.h.b16 %v4530
          %v5080 = vunpack.c.l.b16 %v4531
          %v5081 = vunpack.c.h.b16 %v4531
          %v5082 = vunpack.c.l.b16 %v4532
          %v5083 = vunpack.c.h.b16 %v4532
          %v5084 = vunpack.c.l.b16 %v4533
          %v5085 = vunpack.c.h.b16 %v4533
          %v5086 = vunpack.c.l.b16 %v4534
          %v5087 = vunpack.c.h.b16 %v4534
          %v5088 = vunpack.c.l.b16 %v4535
          %v5089 = vunpack.c.h.b16 %v4535
          %v5090 = vunpack.c.l.b16 %v4536
          %v5091 = vunpack.c.h.b16 %v4536
          %v5092 = vunpack.c.l.b16 %v4537
          %v5093 = vunpack.c.h.b16 %v4537
          %v5094 = vunpack.c.l.b16 %v4538
          %v5095 = vunpack.c.h.b16 %v4538
          %v5096 = vunpack.c.l.b16 %v4539
          %v5097 = vunpack.c.h.b16 %v4539
          %v5098 = vunpack.c.l.b16 %v4540
          %v5099 = vunpack.c.h.b16 %v4540
          %v5100 = vunpack.c.l.b16 %v4541
          %v5101 = vunpack.c.h.b16 %v4541
          %v5102 = vunpack.c.l.b16 %v4542
          %v5103 = vunpack.c.h.b16 %v4542
          %v5104 = vunpack.c.l.b16 %v4543
          %v5105 = vunpack.c.h.b16 %v4543
          %v5106 = vunpack.c.l.b16 %v4544
          %v5107 = vunpack.c.h.b16 %v4544
          %v5108 = vunpack.c.l.b16 %v4545
          %v5109 = vunpack.c.h.b16 %v4545
          %v5110 = vunpack.c.l.b16 %v4546
          %v5111 = vunpack.c.h.b16 %v4546
          %v5112 = vunpack.c.l.b16 %v4547
          %v5113 = vunpack.c.h.b16 %v4547
          %v5114 = vunpack.c.l.b16 %v4548
          %v5115 = vunpack.c.h.b16 %v4548
          %v5116 = vunpack.c.l.b16 %v4549
          %v5117 = vunpack.c.h.b16 %v4549
          %v5118 = vunpack.c.l.b16 %v4550
          %v5119 = vunpack.c.h.b16 %v4550
          %v5120 = vunpack.c.l.b16 %v4551
          %v5121 = vunpack.c.h.b16 %v4551
          %v5122 = vunpack.c.l.b16 %v4552
          %v5123 = vunpack.c.h.b16 %v4552
          %v5124 = vunpack.c.l.b16 %v4553
          %v5125 = vunpack.c.h.b16 %v4553
          %v5126 = vunpack.c.l.b16 %v4554
          %v5127 = vunpack.c.h.b16 %v4554
          %v5128 = vunpack.c.l.b16 %v4555
          %v5129 = vunpack.c.h.b16 %v4555
          %v5130 = vunpack.c.l.b16 %v4556
          %v5131 = vunpack.c.h.b16 %v4556
          %v5132 = vunpack.c.l.b16 %v4557
          %v5133 = vunpack.c.h.b16 %v4557
          %v5134 = vunpack.c.l.b16 %v4558
          %v5135 = vunpack.c.h.b16 %v4558
          %v5136 = vunpack.c.l.b16 %v4559
          %v5137 = vunpack.c.h.b16 %v4559
          %v5138 = vunpack.c.l.b16 %v4560
          %v5139 = vunpack.c.h.b16 %v4560
          %v5140 = vunpack.c.l.b16 %v4561
          %v5141 = vunpack.c.h.b16 %v4561
          %v5142 = vunpack.c.l.b16 %v4562
          %v5143 = vunpack.c.h.b16 %v4562
          %v5144 = vunpack.c.l.b16 %v4563
          %v5145 = vunpack.c.h.b16 %v4563
          %v5146 = vunpack.c.l.b16 %v4564
          %v5147 = vunpack.c.h.b16 %v4564
          %v5148 = vunpack.c.l.b16 %v4565
          %v5149 = vunpack.c.h.b16 %v4565
          %v5150 = vunpack.c.l.b16 %v4566
          %v5151 = vunpack.c.h.b16 %v4566
          %v5152 = vunpack.c.l.b16 %v4567
          %v5153 = vunpack.c.h.b16 %v4567
          %v5154 = vunpack.c.l.b16 %v4568
          %v5155 = vunpack.c.h.b16 %v4568
          %v5156 = vunpack.c.l.b16 %v4569
          %v5157 = vunpack.c.h.b16 %v4569
          %v5158 = vunpack.c.l.b16 %v4570
          %v5159 = vunpack.c.h.b16 %v4570
          %v5160 = vunpack.c.l.b16 %v4571
          %v5161 = vunpack.c.h.b16 %v4571
          %v5162 = vunpack.c.l.b16 %v4572
          %v5163 = vunpack.c.h.b16 %v4572
          %v5164 = vunpack.c.l.b16 %v4573
          %v5165 = vunpack.c.h.b16 %v4573
          %v5166 = vunpack.c.l.b16 %v4574
          %v5167 = vunpack.c.h.b16 %v4574
          %v5168 = vunpack.c.l.b16 %v4575
          %v5169 = vunpack.c.h.b16 %v4575
          %v5170 = vunpack.c.l.b16 %v4576
          %v5171 = vunpack.c.h.b16 %v4576
          %v5172 = vunpack.c.l.b16 %v4577
          %v5173 = vunpack.c.h.b16 %v4577
          %v5174 = vunpack.c.l.b16 %v4578
          %v5175 = vunpack.c.h.b16 %v4578
          %v5176 = vunpack.c.l.b16 %v4579
          %v5177 = vunpack.c.h.b16 %v4579
          %v5178 = vunpack.c.l.b16 %v4580
          %v5179 = vunpack.c.h.b16 %v4580
          %v5180 = vunpack.c.l.b16 %v4581
          %v5181 = vunpack.c.h.b16 %v4581
          %v5182 = vunpack.c.l.b16 %v4582
          %v5183 = vunpack.c.h.b16 %v4582
          %v5184 = vunpack.c.l.b16 %v4583
          %v5185 = vunpack.c.h.b16 %v4583
          %v5186 = vunpack.c.l.b16 %v4584
          %v5187 = vunpack.c.h.b16 %v4584
          %v5188 = vunpack.c.l.b16 %v4585
          %v5189 = vunpack.c.h.b16 %v4585
          %v5190 = vunpack.c.l.b16 %v4586
          %v5191 = vunpack.c.h.b16 %v4586
          %v5192 = vunpack.c.l.b16 %v4587
          %v5193 = vunpack.c.h.b16 %v4587
          %v5194 = vunpack.c.l.b16 %v4588
          %v5195 = vunpack.c.h.b16 %v4588
          %v5196 = vunpack.c.l.b16 %v4589
          %v5197 = vunpack.c.h.b16 %v4589
          %v5198 = vunpack.c.l.b16 %v4590
          %v5199 = vunpack.c.h.b16 %v4590
          %v5200 = vunpack.c.l.b16 %v4591
          %v5201 = vunpack.c.h.b16 %v4591
          %v5202 = vunpack.c.l.b16 %v4592
          %v5203 = vunpack.c.h.b16 %v4592
          %v5204 = vunpack.c.l.b16 %v4593
          %v5205 = vunpack.c.h.b16 %v4593
          %v5206 = vunpack.c.l.b16 %v4594
          %v5207 = vunpack.c.h.b16 %v4594
          %v5208 = vunpack.c.l.b16 %v4595
          %v5209 = vunpack.c.h.b16 %v4595
          %v5210 = vunpack.c.l.b16 %v4596
          %v5211 = vunpack.c.h.b16 %v4596
          %v5212 = vunpack.c.l.b16 %v4597
          %v5213 = vunpack.c.h.b16 %v4597
          %v5214 = vunpack.c.l.b16 %v4598
          %v5215 = vunpack.c.h.b16 %v4598
          %v5216 = vunpack.c.l.b16 %v4599
          %v5217 = vunpack.c.h.b16 %v4599
          %v5218 = vunpack.c.l.b16 %v4600
          %v5219 = vunpack.c.h.b16 %v4600
          %v5220 = vunpack.c.l.b16 %v4601
          %v5221 = vunpack.c.h.b16 %v4601
          %v5222 = vunpack.c.l.b16 %v4602
          %v5223 = vunpack.c.h.b16 %v4602
          %v5224 = vunpack.c.l.b16 %v4603
          %v5225 = vunpack.c.h.b16 %v4603
          %v5226 = vunpack.c.l.b16 %v4604
          %v5227 = vunpack.c.h.b16 %v4604
          %v5228 = vunpack.c.l.b16 %v4605
          %v5229 = vunpack.c.h.b16 %v4605
          %v5230 = vunpack.c.l.b16 %v4606
          %v5231 = vunpack.c.h.b16 %v4606
          %v5232 = vunpack.c.l.b16 %v4607
          %v5233 = vunpack.c.h.b16 %v4607
          %v5234 = vunpack.c.l.b16 %v4608
          %v5235 = vunpack.c.h.b16 %v4608
          %v5236 = vunpack.c.l.b16 %v4609
          %v5237 = vunpack.c.h.b16 %v4609
          %v5238 = vunpack.c.l.b16 %v4610
          %v5239 = vunpack.c.h.b16 %v4610
          %v5240 = vunpack.c.l.b16 %v4611
          %v5241 = vunpack.c.h.b16 %v4611
          %v5242 = vunpack.c.l.b16 %v4612
          %v5243 = vunpack.c.h.b16 %v4612
          %v5244 = vunpack.c.l.b16 %v4613
          %v5245 = vunpack.c.h.b16 %v4613
          %v5246 = vunpack.c.l.b16 %v4614
          %v5247 = vunpack.c.h.b16 %v4614
          %v5248 = vunpack.c.l.b16 %v4615
          %v5249 = vunpack.c.h.b16 %v4615
          %v5250 = vunpack.c.l.b16 %v4616
          %v5251 = vunpack.c.h.b16 %v4616
          %v5252 = vunpack.c.l.b16 %v4617
          %v5253 = vunpack.c.h.b16 %v4617
          %v5254 = vunpack.c.l.b16 %v4618
          %v5255 = vunpack.c.h.b16 %v4618
          %v5256 = vunpack.c.l.b16 %v4619
          %v5257 = vunpack.c.h.b16 %v4619
          %v5258 = vunpack.c.l.b16 %v4620
          %v5259 = vunpack.c.h.b16 %v4620
          %v5260 = vunpack.c.l.b16 %v4621
          %v5261 = vunpack.c.h.b16 %v4621
          %v5262 = vunpack.c.l.b16 %v4622
          %v5263 = vunpack.c.h.b16 %v4622
          %v5264 = vunpack.c.l.b16 %v4623
          %v5265 = vunpack.c.h.b16 %v4623
          %v5266 = vunpack.c.l.b16 %v4624
          %v5267 = vunpack.c.h.b16 %v4624
          %v5268 = vunpack.c.l.b16 %v4625
          %v5269 = vunpack.c.h.b16 %v4625
          %v5270 = vunpack.c.l.b16 %v4626
          %v5271 = vunpack.c.h.b16 %v4626
          %v5272 = vunpack.c.l.b16 %v4627
          %v5273 = vunpack.c.h.b16 %v4627
          %v5274 = vunpack.c.l.b16 %v4628
          %v5275 = vunpack.c.h.b16 %v4628
          %v5276 = vunpack.c.l.b16 %v4629
          %v5277 = vunpack.c.h.b16 %v4629
          %v5278 = vunpack.c.l.b16 %v4630
          %v5279 = vunpack.c.h.b16 %v4630
          %v5280 = vunpack.c.l.b16 %v4631
          %v5281 = vunpack.c.h.b16 %v4631
          %v5282 = vunpack.c.l.b16 %v4632
          %v5283 = vunpack.c.h.b16 %v4632
          %v5284 = vunpack.c.l.b16 %v4633
          %v5285 = vunpack.c.h.b16 %v4633
          %v5286 = vunpack.c.l.b16 %v4634
          %v5287 = vunpack.c.h.b16 %v4634
          %v5288 = vunpack.c.l.b16 %v4635
          %v5289 = vunpack.c.h.b16 %v4635
          %v5290 = vunpack.c.l.b16 %v4636
          %v5291 = vunpack.c.h.b16 %v4636
          %v5292 = vunpack.c.l.b16 %v4637
          %v5293 = vunpack.c.h.b16 %v4637
          %v5294 = vunpack.c.l.b16 %v4638
          %v5295 = vunpack.c.h.b16 %v4638
          %v5296 = vunpack.c.l.b16 %v4639
          %v5297 = vunpack.c.h.b16 %v4639
          %v5298 = vunpack.c.l.b16 %v4640
          %v5299 = vunpack.c.h.b16 %v4640
          %v5300 = vunpack.c.l.b16 %v4641
          %v5301 = vunpack.c.h.b16 %v4641
          %v5302 = vunpack.c.l.b16 %v4642
          %v5303 = vunpack.c.h.b16 %v4642
          %v5304 = vunpack.c.l.b16 %v4643
          %v5305 = vunpack.c.h.b16 %v4643
          %v5306 = vunpack.c.l.b16 %v4644
          %v5307 = vunpack.c.h.b16 %v4644
          %v5308 = vunpack.c.l.b16 %v4645
          %v5309 = vunpack.c.h.b16 %v4645
          %v5310 = vunpack.c.l.b16 %v4646
          %v5311 = vunpack.c.h.b16 %v4646
          %v5312 = vunpack.c.l.b16 %v4647
          %v5313 = vunpack.c.h.b16 %v4647
          %v5314 = vunpack.c.l.b16 %v4648
          %v5315 = vunpack.c.h.b16 %v4648
          %v5316 = vunpack.c.l.b16 %v4649
          %v5317 = vunpack.c.h.b16 %v4649
          %v5318 = vunpack.c.l.b16 %v4650
          %v5319 = vunpack.c.h.b16 %v4650
          %v5320 = vunpack.c.l.b16 %v4651
          %v5321 = vunpack.c.h.b16 %v4651
          %v5322 = vunpack.c.l.b16 %v4652
          %v5323 = vunpack.c.h.b16 %v4652
          %v5324 = vunpack.c.l.b16 %v4653
          %v5325 = vunpack.c.h.b16 %v4653
          %v5326 = vunpack.c.l.b16 %v4654
          %v5327 = vunpack.c.h.b16 %v4654
          %v5328 = vunpack.c.l.b16 %v4655
          %v5329 = vunpack.c.h.b16 %v4655
          %v5330 = vunpack.c.l.b16 %v4656
          %v5331 = vunpack.c.h.b16 %v4656
          %v5332 = vunpack.c.l.b16 %v4657
          %v5333 = vunpack.c.h.b16 %v4657
          %v5334 = vunpack.c.l.b16 %v4658
          %v5335 = vunpack.c.h.b16 %v4658
          %v5336 = vunpack.c.l.b16 %v4659
          %v5337 = vunpack.c.h.b16 %v4659
          %v5338 = vunpack.c.l.b16 %v4660
          %v5339 = vunpack.c.h.b16 %v4660
          %v5340 = vunpack.c.l.b16 %v4661
          %v5341 = vunpack.c.h.b16 %v4661
          %v5342 = vunpack.c.l.b16 %v4662
          %v5343 = vunpack.c.h.b16 %v4662
          %v5344 = vunpack.c.l.b16 %v4663
          %v5345 = vunpack.c.h.b16 %v4663
          %v5346 = vunpack.c.l.b16 %v4664
          %v5347 = vunpack.c.h.b16 %v4664
          %v5348 = vunpack.c.l.b16 %v4665
          %v5349 = vunpack.c.h.b16 %v4665
          %v5350 = vunpack.c.l.b16 %v4666
          %v5351 = vunpack.c.h.b16 %v4666
          %v5352 = vunpack.c.l.b16 %v4667
          %v5353 = vunpack.c.h.b16 %v4667
          %v5354 = vunpack.c.l.b16 %v4668
          %v5355 = vunpack.c.h.b16 %v4668
          %v5356 = vunpack.c.l.b16 %v4669
          %v5357 = vunpack.c.h.b16 %v4669
          %v5358 = vunpack.c.l.b16 %v4670
          %v5359 = vunpack.c.h.b16 %v4670
          %v5360 = vunpack.c.l.b16 %v4671
          %v5361 = vunpack.c.h.b16 %v4671
          %v5362 = vunpack.c.l.b16 %v4672
          %v5363 = vunpack.c.h.b16 %v4672
          %v5364 = vunpack.c.l.b16 %v4673
          %v5365 = vunpack.c.h.b16 %v4673
          %v5366 = vunpack.c.l.b16 %v4674
          %v5367 = vunpack.c.h.b16 %v4674
          %v5368 = vunpack.c.l.b16 %v4675
          %v5369 = vunpack.c.h.b16 %v4675
          %v5370 = vunpack.c.l.b16 %v4676
          %v5371 = vunpack.c.h.b16 %v4676
          %v5372 = vunpack.c.l.b16 %v4677
          %v5373 = vunpack.c.h.b16 %v4677
          %v5374 = vunpack.c.l.b16 %v4678
          %v5375 = vunpack.c.h.b16 %v4678
          %v5376 = vunpack.c.l.b16 %v4679
          %v5377 = vunpack.c.h.b16 %v4679
          %v5378 = vunpack.c.l.b16 %v4680
          %v5379 = vunpack.c.h.b16 %v4680
          %v5380 = vunpack.c.l.b16 %v4681
          %v5381 = vunpack.c.h.b16 %v4681
          %v5382 = vunpack.c.l.b16 %v4682
          %v5383 = vunpack.c.h.b16 %v4682
          %v5384 = vunpack.c.l.b16 %v4683
          %v5385 = vunpack.c.h.b16 %v4683
          %v5386 = vunpack.c.l.b16 %v4684
          %v5387 = vunpack.c.h.b16 %v4684
          %v5388 = vunpack.c.l.b16 %v4685
          %v5389 = vunpack.c.h.b16 %v4685
          %v5390 = vunpack.c.l.b16 %v4686
          %v5391 = vunpack.c.h.b16 %v4686
          %v5392 = vunpack.c.l.b16 %v4687
          %v5393 = vunpack.c.h.b16 %v4687
          %v5394 = vunpack.c.l.b16 %v4688
          %v5395 = vunpack.c.h.b16 %v4688
          %v5396 = vunpack.c.l.b16 %v4689
          %v5397 = vunpack.c.h.b16 %v4689
          %v5398 = vunpack.c.l.b16 %v4690
          %v5399 = vunpack.c.h.b16 %v4690
          %v5400 = vunpack.c.l.b16 %v4691
          %v5401 = vunpack.c.h.b16 %v4691
          %v5402 = vunpack.c.l.b16 %v4692
          %v5403 = vunpack.c.h.b16 %v4692
          %v5404 = vunpack.c.l.b16 %v4693
          %v5405 = vunpack.c.h.b16 %v4693
          %v5406 = vunpack.c.l.b16 %v4694
          %v5407 = vunpack.c.h.b16 %v4694
          %v5408 = vunpack.c.l.b16 %v4695
          %v5409 = vunpack.c.h.b16 %v4695
          %v5410 = vunpack.c.l.b16 %v4696
          %v5411 = vunpack.c.h.b16 %v4696
          %v5412 = vunpack.c.l.b16 %v4697
          %v5413 = vunpack.c.h.b16 %v4697
          %v5414 = vunpack.c.l.b16 %v4698
          %v5415 = vunpack.c.h.b16 %v4698
          %v5416 = vunpack.c.l.b16 %v4699
          %v5417 = vunpack.c.h.b16 %v4699
          %v5418 = vunpack.c.l.b16 %v4700
          %v5419 = vunpack.c.h.b16 %v4700
          %v5420 = vunpack.c.l.b16 %v4701
          %v5421 = vunpack.c.h.b16 %v4701
          %v5422 = vunpack.c.l.b16 %v4702
          %v5423 = vunpack.c.h.b16 %v4702
          %v5424 = vunpack.c.l.b16 %v4703
          %v5425 = vunpack.c.h.b16 %v4703
          %v5426 = vunpack.c.l.b16 %v4704
          %v5427 = vunpack.c.h.b16 %v4704
          %v5428 = vunpack.c.l.b16 %v4705
          %v5429 = vunpack.c.h.b16 %v4705
          %v5430 = vunpack.c.l.b16 %v4706
          %v5431 = vunpack.c.h.b16 %v4706
          %v5432 = vunpack.c.l.b16 %v4707
          %v5433 = vunpack.c.h.b16 %v4707
          %v5434 = vunpack.c.l.b16 %v4708
          %v5435 = vunpack.c.h.b16 %v4708
          %v5436 = vunpack.c.l.b16 %v4709
          %v5437 = vunpack.c.h.b16 %v4709
          %v5438 = vunpack.c.l.b16 %v4710
          %v5439 = vunpack.c.h.b16 %v4710
          %v5440 = vunpack.c.l.b16 %v4711
          %v5441 = vunpack.c.h.b16 %v4711
          %v5442 = vunpack.c.l.b16 %v4712
          %v5443 = vunpack.c.h.b16 %v4712
          %v5444 = vunpack.c.l.b16 %v4713
          %v5445 = vunpack.c.h.b16 %v4713
          %v5446 = vunpack.c.l.b16 %v4714
          %v5447 = vunpack.c.h.b16 %v4714
          %v5448 = vunpack.c.l.b16 %v4715
          %v5449 = vunpack.c.h.b16 %v4715
          %v5450 = vunpack.c.l.b16 %v4716
          %v5451 = vunpack.c.h.b16 %v4716
          %v5452 = vunpack.c.l.b16 %v4717
          %v5453 = vunpack.c.h.b16 %v4717
          %v5454 = vunpack.c.l.b16 %v4718
          %v5455 = vunpack.c.h.b16 %v4718
          %v5456 = vunpack.c.l.b16 %v4719
          %v5457 = vunpack.c.h.b16 %v4719
          %v5458 = vunpack.c.l.b16 %v4720
          %v5459 = vunpack.c.h.b16 %v4720
          %v5460 = vunpack.c.l.b16 %v4721
          %v5461 = vunpack.c.h.b16 %v4721
          %v5462 = vunpack.c.l.b16 %v4722
          %v5463 = vunpack.c.h.b16 %v4722
          %v5464 = vunpack.c.l.b16 %v4723
          %v5465 = vunpack.c.h.b16 %v4723
          %v5466 = vunpack.c.l.b16 %v4724
          %v5467 = vunpack.c.h.b16 %v4724
          %v5468 = vunpack.c.l.b16 %v4725
          %v5469 = vunpack.c.h.b16 %v4725
          %v5470 = vunpack.c.l.b16 %v4726
          %v5471 = vunpack.c.h.b16 %v4726
          %v5472 = vunpack.c.l.b16 %v4727
          %v5473 = vunpack.c.h.b16 %v4727
          %v5474 = vunpack.c.l.b16 %v4728
          %v5475 = vunpack.c.h.b16 %v4728
          %v5476 = vunpack.c.l.b16 %v4729
          %v5477 = vunpack.c.h.b16 %v4729
          %v5478 = vunpack.c.l.b16 %v4730
          %v5479 = vunpack.c.h.b16 %v4730
          %v5480 = vunpack.c.l.b16 %v4731
          %v5481 = vunpack.c.h.b16 %v4731
          %v5482 = vunpack.c.l.b16 %v4732
          %v5483 = vunpack.c.h.b16 %v4732
          %v5484 = vunpack.c.l.b16 %v4733
          %v5485 = vunpack.c.h.b16 %v4733
          %v5486 = vunpack.c.l.b16 %v4734
          %v5487 = vunpack.c.h.b16 %v4734
          %v5488 = vunpack.c.l.b16 %v4735
          %v5489 = vunpack.c.h.b16 %v4735
          %v5490 = vunpack.c.l.b16 %v4736
          %v5491 = vunpack.c.h.b16 %v4736
          %v5492 = vunpack.c.l.b16 %v4737
          %v5493 = vunpack.c.h.b16 %v4737
          %v5494 = vunpack.c.l.b16 %v4738
          %v5495 = vunpack.c.h.b16 %v4738
          %v5496 = vunpack.c.l.b16 %v4739
          %v5497 = vunpack.c.h.b16 %v4739
          %v5498 = vunpack.c.l.b16 %v4740
          %v5499 = vunpack.c.h.b16 %v4740
          %v5500 = vunpack.c.l.b16 %v4741
          %v5501 = vunpack.c.h.b16 %v4741
          %v5502 = vunpack.c.l.b16 %v4742
          %v5503 = vunpack.c.h.b16 %v4742
          %v5504 = vunpack.c.l.b16 %v4743
          %v5505 = vunpack.c.h.b16 %v4743
          %v5506 = vunpack.c.l.b16 %v4744
          %v5507 = vunpack.c.h.b16 %v4744
          %v5508 = vunpack.c.l.b16 %v4745
          %v5509 = vunpack.c.h.b16 %v4745
          %v5510 = vunpack.c.l.b16 %v4746
          %v5511 = vunpack.c.h.b16 %v4746
          %v5512 = vunpack.c.l.b16 %v4747
          %v5513 = vunpack.c.h.b16 %v4747
          %v5514 = vunpack.c.l.b16 %v4748
          %v5515 = vunpack.c.h.b16 %v4748
          %v5516 = vunpack.c.l.b16 %v4749
          %v5517 = vunpack.c.h.b16 %v4749
          %v5518 = vunpack.c.l.b16 %v4750
          %v5519 = vunpack.c.h.b16 %v4750
          %v5520 = vunpack.c.l.b16 %v4751
          %v5521 = vunpack.c.h.b16 %v4751
          %v5522 = vunpack.c.l.b16 %v4752
          %v5523 = vunpack.c.h.b16 %v4752
          %v5524 = vunpack.c.l.b16 %v4753
          %v5525 = vunpack.c.h.b16 %v4753
          %v5526 = vunpack.c.l.b16 %v4754
          %v5527 = vunpack.c.h.b16 %v4754
          %v5528 = vunpack.c.l.b16 %v4755
          %v5529 = vunpack.c.h.b16 %v4755
          %v5530 = vunpack.c.l.b16 %v4756
          %v5531 = vunpack.c.h.b16 %v4756
          %v5532 = vunpack.c.l.b16 %v4757
          %v5533 = vunpack.c.h.b16 %v4757
          %v5534 = vunpack.c.l.b16 %v4758
          %v5535 = vunpack.c.h.b16 %v4758
          %v5536 = vunpack.c.l.b16 %v4759
          %v5537 = vunpack.c.h.b16 %v4759
          %v5538 = vunpack.c.l.b16 %v4760
          %v5539 = vunpack.c.h.b16 %v4760
          %v5540 = vunpack.c.l.b16 %v4761
          %v5541 = vunpack.c.h.b16 %v4761
          %v5542 = vunpack.c.l.b16 %v4762
          %v5543 = vunpack.c.h.b16 %v4762
          %v5544 = vunpack.c.l.b16 %v4763
          %v5545 = vunpack.c.h.b16 %v4763
          %v5546 = vunpack.c.l.b16 %v4764
          %v5547 = vunpack.c.h.b16 %v4764
          %v5548 = vunpack.c.l.b16 %v4765
          %v5549 = vunpack.c.h.b16 %v4765
          %v5550 = vunpack.c.l.b16 %v4766
          %v5551 = vunpack.c.h.b16 %v4766
          %v5552 = vunpack.c.l.b16 %v4767
          %v5553 = vunpack.c.h.b16 %v4767
          %v5554 = vunpack.c.l.b16 %v4768
          %v5555 = vunpack.c.h.b16 %v4768
          %v5556 = vunpack.c.l.b16 %v4769
          %v5557 = vunpack.c.h.b16 %v4769
          %v5558 = vunpack.c.l.b16 %v4770
          %v5559 = vunpack.c.h.b16 %v4770
          %v5560 = vunpack.c.l.b16 %v4771
          %v5561 = vunpack.c.h.b16 %v4771
          %v5562 = vpack.c.b16 %v5054, %v5050
          %v5563 = vpack.c.b16 %v5055, %v5051
          %v5564 = vpack.c.b16 %v5056, %v5052
          %v5565 = vpack.c.b16 %v5057, %v5053
          %v5566 = vpack.c.b16 %v5062, %v5058
          %v5567 = vpack.c.b16 %v5063, %v5059
          %v5568 = vpack.c.b16 %v5064, %v5060
          %v5569 = vpack.c.b16 %v5065, %v5061
          %v5570 = vpack.c.b16 %v5070, %v5066
          %v5571 = vpack.c.b16 %v5071, %v5067
          %v5572 = vpack.c.b16 %v5072, %v5068
          %v5573 = vpack.c.b16 %v5073, %v5069
          %v5574 = vpack.c.b16 %v5078, %v5074
          %v5575 = vpack.c.b16 %v5079, %v5075
          %v5576 = vpack.c.b16 %v5080, %v5076
          %v5577 = vpack.c.b16 %v5081, %v5077
          %v5578 = vpack.c.b16 %v5086, %v5082
          %v5579 = vpack.c.b16 %v5087, %v5083
          %v5580 = vpack.c.b16 %v5088, %v5084
          %v5581 = vpack.c.b16 %v5089, %v5085
          %v5582 = vpack.c.b16 %v5094, %v5090
          %v5583 = vpack.c.b16 %v5095, %v5091
          %v5584 = vpack.c.b16 %v5096, %v5092
          %v5585 = vpack.c.b16 %v5097, %v5093
          %v5586 = vpack.c.b16 %v5102, %v5098
          %v5587 = vpack.c.b16 %v5103, %v5099
          %v5588 = vpack.c.b16 %v5104, %v5100
          %v5589 = vpack.c.b16 %v5105, %v5101
          %v5590 = vpack.c.b16 %v5110, %v5106
          %v5591 = vpack.c.b16 %v5111, %v5107
          %v5592 = vpack.c.b16 %v5112, %v5108
          %v5593 = vpack.c.b16 %v5113, %v5109
          %v5594 = vpack.c.b16 %v5118, %v5114
          %v5595 = vpack.c.b16 %v5119, %v5115
          %v5596 = vpack.c.b16 %v5120, %v5116
          %v5597 = vpack.c.b16 %v5121, %v5117
          %v5598 = vpack.c.b16 %v5126, %v5122
          %v5599 = vpack.c.b16 %v5127, %v5123
          %v5600 = vpack.c.b16 %v5128, %v5124
          %v5601 = vpack.c.b16 %v5129, %v5125
          %v5602 = vpack.c.b16 %v5134, %v5130
          %v5603 = vpack.c.b16 %v5135, %v5131
          %v5604 = vpack.c.b16 %v5136, %v5132
          %v5605 = vpack.c.b16 %v5137, %v5133
          %v5606 = vpack.c.b16 %v5142, %v5138
          %v5607 = vpack.c.b16 %v5143, %v5139
          %v5608 = vpack.c.b16 %v5144, %v5140
          %v5609 = vpack.c.b16 %v5145, %v5141
          %v5610 = vpack.c.b16 %v5150, %v5146
          %v5611 = vpack.c.b16 %v5151, %v5147
          %v5612 = vpack.c.b16 %v5152, %v5148
          %v5613 = vpack.c.b16 %v5153, %v5149
          %v5614 = vpack.c.b16 %v5158, %v5154
          %v5615 = vpack.c.b16 %v5159, %v5155
          %v5616 = vpack.c.b16 %v5160, %v5156
          %v5617 = vpack.c.b16 %v5161, %v5157
          %v5618 = vpack.c.b16 %v5166, %v5162
          %v5619 = vpack.c.b16 %v5167, %v5163
          %v5620 = vpack.c.b16 %v5168, %v5164
          %v5621 = vpack.c.b16 %v5169, %v5165
          %v5622 = vpack.c.b16 %v5174, %v5170
          %v5623 = vpack.c.b16 %v5175, %v5171
          %v5624 = vpack.c.b16 %v5176, %v5172
          %v5625 = vpack.c.b16 %v5177, %v5173
          %v5626 = vpack.c.b16 %v5182, %v5178
          %v5627 = vpack.c.b16 %v5183, %v5179
          %v5628 = vpack.c.b16 %v5184, %v5180
          %v5629 = vpack.c.b16 %v5185, %v5181
          %v5630 = vpack.c.b16 %v5190, %v5186
          %v5631 = vpack.c.b16 %v5191, %v5187
          %v5632 = vpack.c.b16 %v5192, %v5188
          %v5633 = vpack.c.b16 %v5193, %v5189
          %v5634 = vpack.c.b16 %v5198, %v5194
          %v5635 = vpack.c.b16 %v5199, %v5195
          %v5636 = vpack.c.b16 %v5200, %v5196
          %v5637 = vpack.c.b16 %v5201, %v5197
          %v5638 = vpack.c.b16 %v5206, %v5202
          %v5639 = vpack.c.b16 %v5207, %v5203
          %v5640 = vpack.c.b16 %v5208, %v5204
          %v5641 = vpack.c.b16 %v5209, %v5205
          %v5642 = vpack.c.b16 %v5214, %v5210
          %v5643 = vpack.c.b16 %v5215, %v5211
          %v5644 = vpack.c.b16 %v5216, %v5212
          %v5645 = vpack.c.b16 %v5217, %v5213
          %v5646 = vpack.c.b16 %v5222, %v5218
          %v5647 = vpack.c.b16 %v5223, %v5219
          %v5648 = vpack.c.b16 %v5224, %v5220
          %v5649 = vpack.c.b16 %v5225, %v5221
          %v5650 = vpack.c.b16 %v5230, %v5226
          %v5651 = vpack.c.b16 %v5231, %v5227
          %v5652 = vpack.c.b16 %v5232, %v5228
          %v5653 = vpack.c.b16 %v5233, %v5229
          %v5654 = vpack.c.b16 %v5238, %v5234
          %v5655 = vpack.c.b16 %v5239, %v5235
          %v5656 = vpack.c.b16 %v5240, %v5236
          %v5657 = vpack.c.b16 %v5241, %v5237
          %v5658 = vpack.c.b16 %v5246, %v5242
          %v5659 = vpack.c.b16 %v5247, %v5243
          %v5660 = vpack.c.b16 %v5248, %v5244
          %v5661 = vpack.c.b16 %v5249, %v5245
          %v5662 = vpack.c.b16 %v5254, %v5250
          %v5663 = vpack.c.b16 %v5255, %v5251
          %v5664 = vpack.c.b16 %v5256, %v5252
          %v5665 = vpack.c.b16 %v5257, %v5253
          %v5666 = vpack.c.b16 %v5262, %v5258
          %v5667 = vpack.c.b16 %v5263, %v5259
          %v5668 = vpack.c.b16 %v5264, %v5260
          %v5669 = vpack.c.b16 %v5265, %v5261
          %v5670 = vpack.c.b16 %v5270, %v5266
          %v5671 = vpack.c.b16 %v5271, %v5267
          %v5672 = vpack.c.b16 %v5272, %v5268
          %v5673 = vpack.c.b16 %v5273, %v5269
          %v5674 = vpack.c.b16 %v5278, %v5274
          %v5675 = vpack.c.b16 %v5279, %v5275
          %v5676 = vpack.c.b16 %v5280, %v5276
          %v5677 = vpack.c.b16 %v5281, %v5277
          %v5678 = vpack.c.b16 %v5286, %v5282
          %v5679 = vpack.c.b16 %v5287, %v5283
          %v5680 = vpack.c.b16 %v5288, %v5284
          %v5681 = vpack.c.b16 %v5289, %v5285
          %v5682 = vpack.c.b16 %v5294, %v5290
          %v5683 = vpack.c.b16 %v5295, %v5291
          %v5684 = vpack.c.b16 %v5296, %v5292
          %v5685 = vpack.c.b16 %v5297, %v5293
          %v5686 = vpack.c.b16 %v5302, %v5298
          %v5687 = vpack.c.b16 %v5303, %v5299
          %v5688 = vpack.c.b16 %v5304, %v5300
          %v5689 = vpack.c.b16 %v5305, %v5301
          %v5690 = vpack.c.b16 %v5310, %v5306
          %v5691 = vpack.c.b16 %v5311, %v5307
          %v5692 = vpack.c.b16 %v5312, %v5308
          %v5693 = vpack.c.b16 %v5313, %v5309
          %v5694 = vpack.c.b16 %v5318, %v5314
          %v5695 = vpack.c.b16 %v5319, %v5315
          %v5696 = vpack.c.b16 %v5320, %v5316
          %v5697 = vpack.c.b16 %v5321, %v5317
          %v5698 = vpack.c.b16 %v5326, %v5322
          %v5699 = vpack.c.b16 %v5327, %v5323
          %v5700 = vpack.c.b16 %v5328, %v5324
          %v5701 = vpack.c.b16 %v5329, %v5325
          %v5702 = vpack.c.b16 %v5334, %v5330
          %v5703 = vpack.c.b16 %v5335, %v5331
          %v5704 = vpack.c.b16 %v5336, %v5332
          %v5705 = vpack.c.b16 %v5337, %v5333
          %v5706 = vpack.c.b16 %v5342, %v5338
          %v5707 = vpack.c.b16 %v5343, %v5339
          %v5708 = vpack.c.b16 %v5344, %v5340
          %v5709 = vpack.c.b16 %v5345, %v5341
          %v5710 = vpack.c.b16 %v5350, %v5346
          %v5711 = vpack.c.b16 %v5351, %v5347
          %v5712 = vpack.c.b16 %v5352, %v5348
          %v5713 = vpack.c.b16 %v5353, %v5349
          %v5714 = vpack.c.b16 %v5358, %v5354
          %v5715 = vpack.c.b16 %v5359, %v5355
          %v5716 = vpack.c.b16 %v5360, %v5356
          %v5717 = vpack.c.b16 %v5361, %v5357
          %v5718 = vpack.c.b16 %v5366, %v5362
          %v5719 = vpack.c.b16 %v5367, %v5363
          %v5720 = vpack.c.b16 %v5368, %v5364
          %v5721 = vpack.c.b16 %v5369, %v5365
          %v5722 = vpack.c.b16 %v5374, %v5370
          %v5723 = vpack.c.b16 %v5375, %v5371
          %v5724 = vpack.c.b16 %v5376, %v5372
          %v5725 = vpack.c.b16 %v5377, %v5373
          %v5726 = vpack.c.b16 %v5382, %v5378
          %v5727 = vpack.c.b16 %v5383, %v5379
          %v5728 = vpack.c.b16 %v5384, %v5380
          %v5729 = vpack.c.b16 %v5385, %v5381
          %v5730 = vpack.c.b16 %v5390, %v5386
          %v5731 = vpack.c.b16 %v5391, %v5387
          %v5732 = vpack.c.b16 %v5392, %v5388
          %v5733 = vpack.c.b16 %v5393, %v5389
          %v5734 = vpack.c.b16 %v5398, %v5394
          %v5735 = vpack.c.b16 %v5399, %v5395
          %v5736 = vpack.c.b16 %v5400, %v5396
          %v5737 = vpack.c.b16 %v5401, %v5397
          %v5738 = vpack.c.b16 %v5406, %v5402
          %v5739 = vpack.c.b16 %v5407, %v5403
          %v5740 = vpack.c.b16 %v5408, %v5404
          %v5741 = vpack.c.b16 %v5409, %v5405
          %v5742 = vpack.c.b16 %v5414, %v5410
          %v5743 = vpack.c.b16 %v5415, %v5411
          %v5744 = vpack.c.b16 %v5416, %v5412
          %v5745 = vpack.c.b16 %v5417, %v5413
          %v5746 = vpack.c.b16 %v5422, %v5418
          %v5747 = vpack.c.b16 %v5423, %v5419
          %v5748 = vpack.c.b16 %v5424, %v5420
          %v5749 = vpack.c.b16 %v5425, %v5421
          %v5750 = vpack.c.b16 %v5430, %v5426
          %v5751 = vpack.c.b16 %v5431, %v5427
          %v5752 = vpack.c.b16 %v5432, %v5428
          %v5753 = vpack.c.b16 %v5433, %v5429
          %v5754 = vpack.c.b16 %v5438, %v5434
          %v5755 = vpack.c.b16 %v5439, %v5435
          %v5756 = vpack.c.b16 %v5440, %v5436
          %v5757 = vpack.c.b16 %v5441, %v5437
          %v5758 = vpack.c.b16 %v5446, %v5442
          %v5759 = vpack.c.b16 %v5447, %v5443
          %v5760 = vpack.c.b16 %v5448, %v5444
          %v5761 = vpack.c.b16 %v5449, %v5445
          %v5762 = vpack.c.b16 %v5454, %v5450
          %v5763 = vpack.c.b16 %v5455, %v5451
          %v5764 = vpack.c.b16 %v5456, %v5452
          %v5765 = vpack.c.b16 %v5457, %v5453
          %v5766 = vpack.c.b16 %v5462, %v5458
          %v5767 = vpack.c.b16 %v5463, %v5459
          %v5768 = vpack.c.b16 %v5464, %v5460
          %v5769 = vpack.c.b16 %v5465, %v5461
          %v5770 = vpack.c.b16 %v5470, %v5466
          %v5771 = vpack.c.b16 %v5471, %v5467
          %v5772 = vpack.c.b16 %v5472, %v5468
          %v5773 = vpack.c.b16 %v5473, %v5469
          %v5774 = vpack.c.b16 %v5478, %v5474
          %v5775 = vpack.c.b16 %v5479, %v5475
          %v5776 = vpack.c.b16 %v5480, %v5476
          %v5777 = vpack.c.b16 %v5481, %v5477
          %v5778 = vpack.c.b16 %v5486, %v5482
          %v5779 = vpack.c.b16 %v5487, %v5483
          %v5780 = vpack.c.b16 %v5488, %v5484
          %v5781 = vpack.c.b16 %v5489, %v5485
          %v5782 = vpack.c.b16 %v5494, %v5490
          %v5783 = vpack.c.b16 %v5495, %v5491
          %v5784 = vpack.c.b16 %v5496, %v5492
          %v5785 = vpack.c.b16 %v5497, %v5493
          %v5786 = vpack.c.b16 %v5502, %v5498
          %v5787 = vpack.c.b16 %v5503, %v5499
          %v5788 = vpack.c.b16 %v5504, %v5500
          %v5789 = vpack.c.b16 %v5505, %v5501
          %v5790 = vpack.c.b16 %v5510, %v5506
          %v5791 = vpack.c.b16 %v5511, %v5507
          %v5792 = vpack.c.b16 %v5512, %v5508
          %v5793 = vpack.c.b16 %v5513, %v5509
          %v5794 = vpack.c.b16 %v5518, %v5514
          %v5795 = vpack.c.b16 %v5519, %v5515
          %v5796 = vpack.c.b16 %v5520, %v5516
          %v5797 = vpack.c.b16 %v5521, %v5517
          %v5798 = vpack.c.b16 %v5526, %v5522
          %v5799 = vpack.c.b16 %v5527, %v5523
          %v5800 = vpack.c.b16 %v5528, %v5524
          %v5801 = vpack.c.b16 %v5529, %v5525
          %v5802 = vpack.c.b16 %v5534, %v5530
          %v5803 = vpack.c.b16 %v5535, %v5531
          %v5804 = vpack.c.b16 %v5536, %v5532
          %v5805 = vpack.c.b16 %v5537, %v5533
          %v5806 = vpack.c.b16 %v5542, %v5538
          %v5807 = vpack.c.b16 %v5543, %v5539
          %v5808 = vpack.c.b16 %v5544, %v5540
          %v5809 = vpack.c.b16 %v5545, %v5541
          %v5810 = vpack.c.b16 %v5550, %v5546
          %v5811 = vpack.c.b16 %v5551, %v5547
          %v5812 = vpack.c.b16 %v5552, %v5548
          %v5813 = vpack.c.b16 %v5553, %v5549
          %v5814 = vpack.c.b16 %v5558, %v5554
          %v5815 = vpack.c.b16 %v5559, %v5555
          %v5816 = vpack.c.b16 %v5560, %v5556
          %v5817 = vpack.c.b16 %v5561, %v5557
          %6074 = vmatprep.subr.bf16.mxu0 %v5563
          %6075 = vmatpush1.bf16.msra.mxu0 %v5562
          %6076 = vmatprep.subr.bf16.mxu0 %v5567
          %6077 = vmatpush1.bf16.msra.mxu0 %v5566
          %6078 = vmatprep.subr.bf16.mxu0 %v5571
          %6079 = vmatpush1.bf16.msra.mxu0 %v5570
          %6080 = vmatprep.subr.bf16.mxu0 %v5575
          %6081 = vmatpush1.bf16.msra.mxu0 %v5574
          %6082 = vmatprep.subr.bf16.mxu0 %v5579
          %6083 = vmatpush1.bf16.msra.mxu0 %v5578
          %6084 = vmatprep.subr.bf16.mxu0 %v5583
          %6085 = vmatpush1.bf16.msra.mxu0 %v5582
          %6086 = vmatprep.subr.bf16.mxu0 %v5587
          %6087 = vmatpush1.bf16.msra.mxu0 %v5586
          %6088 = vmatprep.subr.bf16.mxu0 %v5591
          %6089 = vmatpush1.bf16.msra.mxu0 %v5590
          %6090 = vmatprep.subr.bf16.mxu0 %v5595
          %6091 = vmatpush1.bf16.msra.mxu0 %v5594
          %6092 = vmatprep.subr.bf16.mxu0 %v5599
          %6093 = vmatpush1.bf16.msra.mxu0 %v5598
          %6094 = vmatprep.subr.bf16.mxu0 %v5603
          %6095 = vmatpush1.bf16.msra.mxu0 %v5602
          %6096 = vmatprep.subr.bf16.mxu0 %v5607
          %6097 = vmatpush1.bf16.msra.mxu0 %v5606
          %6098 = vmatprep.subr.bf16.mxu0 %v5611
          %6099 = vmatpush1.bf16.msra.mxu0 %v5610
          %6100 = vmatprep.subr.bf16.mxu0 %v5615
          %6101 = vmatpush1.bf16.msra.mxu0 %v5614
          %6102 = vmatprep.subr.bf16.mxu0 %v5619
          %6103 = vmatpush1.bf16.msra.mxu0 %v5618
          %6104 = vmatprep.subr.bf16.mxu0 %v5623
          %6105 = vmatpush1.bf16.msra.mxu0 %v5622
          %6106 = vmatprep.mubr.bf16.mxu0 %v4509
          %6107 = vmatmul.mubr.bf16.gmra.mrb[0].mxu0 %v4508
          %v6108 = vpop.f32.mrb[0].mxu0
          %v6109 = vadd.f32 %v4777, %v6108
          %v6110 = vpop.f32.mrb[0].mxu0
          %v6111 = vadd.f32 %v4781, %v6110
          %v6112 = vpop.f32.mrb[0].mxu0
          %v6113 = vpop.f32.mrb[0].mxu0
          %6114 = vdwg.mxu0
          %6115 = vmatprep.subr.bf16.mxu0 %v5627
          %6116 = vmatpush1.bf16.msra.mxu0 %v5626
          %6117 = vmatprep.subr.bf16.mxu0 %v5631
          %6118 = vmatpush1.bf16.msra.mxu0 %v5630
          %6119 = vmatprep.subr.bf16.mxu0 %v5635
          %6120 = vmatpush1.bf16.msra.mxu0 %v5634
          %6121 = vmatprep.subr.bf16.mxu0 %v5639
          %6122 = vmatpush1.bf16.msra.mxu0 %v5638
          %6123 = vmatprep.subr.bf16.mxu0 %v5643
          %6124 = vmatpush1.bf16.msra.mxu0 %v5642
          %6125 = vmatprep.subr.bf16.mxu0 %v5647
          %6126 = vmatpush1.bf16.msra.mxu0 %v5646
          %6127 = vmatprep.subr.bf16.mxu0 %v5651
          %6128 = vmatpush1.bf16.msra.mxu0 %v5650
          %6129 = vmatprep.subr.bf16.mxu0 %v5655
          %6130 = vmatpush1.bf16.msra.mxu0 %v5654
          %6131 = vmatprep.subr.bf16.mxu0 %v5659
          %6132 = vmatpush1.bf16.msra.mxu0 %v5658
          %6133 = vmatprep.subr.bf16.mxu0 %v5663
          %6134 = vmatpush1.bf16.msra.mxu0 %v5662
          %6135 = vmatprep.subr.bf16.mxu0 %v5667
          %6136 = vmatpush1.bf16.msra.mxu0 %v5666
          %6137 = vmatprep.subr.bf16.mxu0 %v5671
          %6138 = vmatpush1.bf16.msra.mxu0 %v5670
          %6139 = vmatprep.subr.bf16.mxu0 %v5675
          %6140 = vmatpush1.bf16.msra.mxu0 %v5674
          %6141 = vmatprep.subr.bf16.mxu0 %v5679
          %6142 = vmatpush1.bf16.msra.mxu0 %v5678
          %6143 = vmatprep.subr.bf16.mxu0 %v5683
          %6144 = vmatpush1.bf16.msra.mxu0 %v5682
          %6145 = vmatprep.subr.bf16.mxu0 %v5687
          %6146 = vmatpush1.bf16.msra.mxu0 %v5686
          %6147 = vmatprep.mubr.bf16.mxu0 %v4511
          %6148 = vmatmul.mubr.bf16.gmra.mrb[0].mxu0 %v4510
          %v6149 = vpop.f32.mrb[0].mxu0
          %v6150 = vadd.f32 %v6109, %v6149
          %v6151 = vpop.f32.mrb[0].mxu0
          %v6152 = vadd.f32 %v6111, %v6151
          %v6153 = vpop.f32.mrb[0].mxu0
          %v6154 = vpop.f32.mrb[0].mxu0
          %6155 = vdwg.mxu0
          %6156 = vmatprep.subr.bf16.mxu0 %v5691
          %6157 = vmatpush1.bf16.msra.mxu0 %v5690
          %6158 = vmatprep.subr.bf16.mxu0 %v5695
          %6159 = vmatpush1.bf16.msra.mxu0 %v5694
          %6160 = vmatprep.subr.bf16.mxu0 %v5699
          %6161 = vmatpush1.bf16.msra.mxu0 %v5698
          %6162 = vmatprep.subr.bf16.mxu0 %v5703
          %6163 = vmatpush1.bf16.msra.mxu0 %v5702
          %6164 = vmatprep.subr.bf16.mxu0 %v5707
          %6165 = vmatpush1.bf16.msra.mxu0 %v5706
          %6166 = vmatprep.subr.bf16.mxu0 %v5711
          %6167 = vmatpush1.bf16.msra.mxu0 %v5710
          %6168 = vmatprep.subr.bf16.mxu0 %v5715
          %6169 = vmatpush1.bf16.msra.mxu0 %v5714
          %6170 = vmatprep.subr.bf16.mxu0 %v5719
          %6171 = vmatpush1.bf16.msra.mxu0 %v5718
          %6172 = vmatprep.subr.bf16.mxu0 %v5723
          %6173 = vmatpush1.bf16.msra.mxu0 %v5722
          %6174 = vmatprep.subr.bf16.mxu0 %v5727
          %6175 = vmatpush1.bf16.msra.mxu0 %v5726
          %6176 = vmatprep.subr.bf16.mxu0 %v5731
          %6177 = vmatpush1.bf16.msra.mxu0 %v5730
          %6178 = vmatprep.subr.bf16.mxu0 %v5735
          %6179 = vmatpush1.bf16.msra.mxu0 %v5734
          %6180 = vmatprep.subr.bf16.mxu0 %v5739
          %6181 = vmatpush1.bf16.msra.mxu0 %v5738
          %6182 = vmatprep.subr.bf16.mxu0 %v5743
          %6183 = vmatpush1.bf16.msra.mxu0 %v5742
          %6184 = vmatprep.subr.bf16.mxu0 %v5747
          %6185 = vmatpush1.bf16.msra.mxu0 %v5746
          %6186 = vmatprep.subr.bf16.mxu0 %v5751
          %6187 = vmatpush1.bf16.msra.mxu0 %v5750
          %6188 = vmatprep.mubr.bf16.mxu0 %v4513
          %6189 = vmatmul.mubr.bf16.gmra.mrb[0].mxu0 %v4512
          %v6190 = vpop.f32.mrb[0].mxu0
          %v6191 = vadd.f32 %v6150, %v6190
          %v6192 = vpop.f32.mrb[0].mxu0
          %v6193 = vadd.f32 %v6152, %v6192
          %v6194 = vpop.f32.mrb[0].mxu0
          %v6195 = vpop.f32.mrb[0].mxu0
          %6196 = vdwg.mxu0
          %6197 = vmatprep.subr.bf16.mxu0 %v5755
          %6198 = vmatpush1.bf16.msra.mxu0 %v5754
          %6199 = vmatprep.subr.bf16.mxu0 %v5759
          %6200 = vmatpush1.bf16.msra.mxu0 %v5758
          %6201 = vmatprep.subr.bf16.mxu0 %v5763
          %6202 = vmatpush1.bf16.msra.mxu0 %v5762
          %6203 = vmatprep.subr.bf16.mxu0 %v5767
          %6204 = vmatpush1.bf16.msra.mxu0 %v5766
          %6205 = vmatprep.subr.bf16.mxu0 %v5771
          %6206 = vmatpush1.bf16.msra.mxu0 %v5770
          %6207 = vmatprep.subr.bf16.mxu0 %v5775
          %6208 = vmatpush1.bf16.msra.mxu0 %v5774
          %6209 = vmatprep.subr.bf16.mxu0 %v5779
          %6210 = vmatpush1.bf16.msra.mxu0 %v5778
          %6211 = vmatprep.subr.bf16.mxu0 %v5783
          %6212 = vmatpush1.bf16.msra.mxu0 %v5782
          %6213 = vmatprep.subr.bf16.mxu0 %v5787
          %6214 = vmatpush1.bf16.msra.mxu0 %v5786
          %6215 = vmatprep.subr.bf16.mxu0 %v5791
          %6216 = vmatpush1.bf16.msra.mxu0 %v5790
          %6217 = vmatprep.subr.bf16.mxu0 %v5795
          %6218 = vmatpush1.bf16.msra.mxu0 %v5794
          %6219 = vmatprep.subr.bf16.mxu0 %v5799
          %6220 = vmatpush1.bf16.msra.mxu0 %v5798
          %6221 = vmatprep.subr.bf16.mxu0 %v5803
          %6222 = vmatpush1.bf16.msra.mxu0 %v5802
          %6223 = vmatprep.subr.bf16.mxu0 %v5807
          %6224 = vmatpush1.bf16.msra.mxu0 %v5806
          %6225 = vmatprep.subr.bf16.mxu0 %v5811
          %6226 = vmatpush1.bf16.msra.mxu0 %v5810
          %6227 = vmatprep.subr.bf16.mxu0 %v5815
          %6228 = vmatpush1.bf16.msra.mxu0 %v5814
          %6229 = vmatprep.mubr.bf16.mxu0 %v4515
          %6230 = vmatmul.mubr.bf16.gmra.mrb[0].mxu0 %v4514
          %v6231 = vpop.f32.mrb[0].mxu0
          %v6232 = vadd.f32 %v6191, %v6231
          %v6233 = vpop.f32.mrb[0].mxu0
          %v6234 = vadd.f32 %v6193, %v6233
          %v6235 = vpop.f32.mrb[0].mxu0
          %v6236 = vpop.f32.mrb[0].mxu0
          %6237 = vdwg.mxu0
          %6238 = vmatprep.subr.bf16.mxu0 %v5565
          %6239 = vmatpush1.bf16.msra.mxu0 %v5564
          %6240 = vmatprep.subr.bf16.mxu0 %v5569
          %6241 = vmatpush1.bf16.msra.mxu0 %v5568
          %6242 = vmatprep.subr.bf16.mxu0 %v5573
          %6243 = vmatpush1.bf16.msra.mxu0 %v5572
          %6244 = vmatprep.subr.bf16.mxu0 %v5577
          %6245 = vmatpush1.bf16.msra.mxu0 %v5576
          %6246 = vmatprep.subr.bf16.mxu0 %v5581
          %6247 = vmatpush1.bf16.msra.mxu0 %v5580
          %6248 = vmatprep.subr.bf16.mxu0 %v5585
          %6249 = vmatpush1.bf16.msra.mxu0 %v5584
          %6250 = vmatprep.subr.bf16.mxu0 %v5589
          %6251 = vmatpush1.bf16.msra.mxu0 %v5588
          %6252 = vmatprep.subr.bf16.mxu0 %v5593
          %6253 = vmatpush1.bf16.msra.mxu0 %v5592
          %6254 = vmatprep.subr.bf16.mxu0 %v5597
          %6255 = vmatpush1.bf16.msra.mxu0 %v5596
          %6256 = vmatprep.subr.bf16.mxu0 %v5601
          %6257 = vmatpush1.bf16.msra.mxu0 %v5600
          %6258 = vmatprep.subr.bf16.mxu0 %v5605
          %6259 = vmatpush1.bf16.msra.mxu0 %v5604
          %6260 = vmatprep.subr.bf16.mxu0 %v5609
          %6261 = vmatpush1.bf16.msra.mxu0 %v5608
          %6262 = vmatprep.subr.bf16.mxu0 %v5613
          %6263 = vmatpush1.bf16.msra.mxu0 %v5612
          %6264 = vmatprep.subr.bf16.mxu0 %v5617
          %6265 = vmatpush1.bf16.msra.mxu0 %v5616
          %6266 = vmatprep.subr.bf16.mxu0 %v5621
          %6267 = vmatpush1.bf16.msra.mxu0 %v5620
          %6268 = vmatprep.subr.bf16.mxu0 %v5625
          %6269 = vmatpush1.bf16.msra.mxu0 %v5624
          %6270 = vmatprep.mubr.bf16.mxu0 %v4509
          %6271 = vmatmul.mubr.bf16.gmra.mrb[0].mxu0 %v4508
          %v6272 = vpop.f32.mrb[0].mxu0
          %v6273 = vadd.f32 %v4785, %v6272
          %v6274 = vpop.f32.mrb[0].mxu0
          %v6275 = vadd.f32 %v4789, %v6274
          %v6276 = vpop.f32.mrb[0].mxu0
          %v6277 = vpop.f32.mrb[0].mxu0
          %6278 = vdwg.mxu0
          %6279 = vmatprep.subr.bf16.mxu0 %v5629
          %6280 = vmatpush1.bf16.msra.mxu0 %v5628
          %6281 = vmatprep.subr.bf16.mxu0 %v5633
          %6282 = vmatpush1.bf16.msra.mxu0 %v5632
          %6283 = vmatprep.subr.bf16.mxu0 %v5637
          %6284 = vmatpush1.bf16.msra.mxu0 %v5636
          %6285 = vmatprep.subr.bf16.mxu0 %v5641
          %6286 = vmatpush1.bf16.msra.mxu0 %v5640
          %6287 = vmatprep.subr.bf16.mxu0 %v5645
          %6288 = vmatpush1.bf16.msra.mxu0 %v5644
          %6289 = vmatprep.subr.bf16.mxu0 %v5649
          %6290 = vmatpush1.bf16.msra.mxu0 %v5648
          %6291 = vmatprep.subr.bf16.mxu0 %v5653
          %6292 = vmatpush1.bf16.msra.mxu0 %v5652
          %6293 = vmatprep.subr.bf16.mxu0 %v5657
          %6294 = vmatpush1.bf16.msra.mxu0 %v5656
          %6295 = vmatprep.subr.bf16.mxu0 %v5661
          %6296 = vmatpush1.bf16.msra.mxu0 %v5660
          %6297 = vmatprep.subr.bf16.mxu0 %v5665
          %6298 = vmatpush1.bf16.msra.mxu0 %v5664
          %6299 = vmatprep.subr.bf16.mxu0 %v5669
          %6300 = vmatpush1.bf16.msra.mxu0 %v5668
          %6301 = vmatprep.subr.bf16.mxu0 %v5673
          %6302 = vmatpush1.bf16.msra.mxu0 %v5672
          %6303 = vmatprep.subr.bf16.mxu0 %v5677
          %6304 = vmatpush1.bf16.msra.mxu0 %v5676
          %6305 = vmatprep.subr.bf16.mxu0 %v5681
          %6306 = vmatpush1.bf16.msra.mxu0 %v5680
          %6307 = vmatprep.subr.bf16.mxu0 %v5685
          %6308 = vmatpush1.bf16.msra.mxu0 %v5684
          %6309 = vmatprep.subr.bf16.mxu0 %v5689
          %6310 = vmatpush1.bf16.msra.mxu0 %v5688
          %6311 = vmatprep.mubr.bf16.mxu0 %v4511
          %6312 = vmatmul.mubr.bf16.gmra.mrb[0].mxu0 %v4510
          %v6313 = vpop.f32.mrb[0].mxu0
          %v6314 = vadd.f32 %v6273, %v6313
          %v6315 = vpop.f32.mrb[0].mxu0
          %v6316 = vadd.f32 %v6275, %v6315
          %v6317 = vpop.f32.mrb[0].mxu0
          %v6318 = vpop.f32.mrb[0].mxu0
          %6319 = vdwg.mxu0
          %6320 = vmatprep.subr.bf16.mxu0 %v5693
          %6321 = vmatpush1.bf16.msra.mxu0 %v5692
          %6322 = vmatprep.subr.bf16.mxu0 %v5697
          %6323 = vmatpush1.bf16.msra.mxu0 %v5696
          %6324 = vmatprep.subr.bf16.mxu0 %v5701
          %6325 = vmatpush1.bf16.msra.mxu0 %v5700
          %6326 = vmatprep.subr.bf16.mxu0 %v5705
          %6327 = vmatpush1.bf16.msra.mxu0 %v5704
          %6328 = vmatprep.subr.bf16.mxu0 %v5709
          %6329 = vmatpush1.bf16.msra.mxu0 %v5708
          %6330 = vmatprep.subr.bf16.mxu0 %v5713
          %6331 = vmatpush1.bf16.msra.mxu0 %v5712
          %6332 = vmatprep.subr.bf16.mxu0 %v5717
          %6333 = vmatpush1.bf16.msra.mxu0 %v5716
          %6334 = vmatprep.subr.bf16.mxu0 %v5721
          %6335 = vmatpush1.bf16.msra.mxu0 %v5720
          %6336 = vmatprep.subr.bf16.mxu0 %v5725
          %6337 = vmatpush1.bf16.msra.mxu0 %v5724
          %6338 = vmatprep.subr.bf16.mxu0 %v5729
          %6339 = vmatpush1.bf16.msra.mxu0 %v5728
          %6340 = vmatprep.subr.bf16.mxu0 %v5733
          %6341 = vmatpush1.bf16.msra.mxu0 %v5732
          %6342 = vmatprep.subr.bf16.mxu0 %v5737
          %6343 = vmatpush1.bf16.msra.mxu0 %v5736
          %6344 = vmatprep.subr.bf16.mxu0 %v5741
          %6345 = vmatpush1.bf16.msra.mxu0 %v5740
          %6346 = vmatprep.subr.bf16.mxu0 %v5745
          %6347 = vmatpush1.bf16.msra.mxu0 %v5744
          %6348 = vmatprep.subr.bf16.mxu0 %v5749
          %6349 = vmatpush1.bf16.msra.mxu0 %v5748
          %6350 = vmatprep.subr.bf16.mxu0 %v5753
          %6351 = vmatpush1.bf16.msra.mxu0 %v5752
          %6352 = vmatprep.mubr.bf16.mxu0 %v4513
          %6353 = vmatmul.mubr.bf16.gmra.mrb[0].mxu0 %v4512
          %v6354 = vpop.f32.mrb[0].mxu0
          %v6355 = vadd.f32 %v6314, %v6354
          %v6356 = vpop.f32.mrb[0].mxu0
          %v6357 = vadd.f32 %v6316, %v6356
          %v6358 = vpop.f32.mrb[0].mxu0
          %v6359 = vpop.f32.mrb[0].mxu0
          %6360 = vdwg.mxu0
          %6361 = vmatprep.subr.bf16.mxu0 %v5757
          %6362 = vmatpush1.bf16.msra.mxu0 %v5756
          %6363 = vmatprep.subr.bf16.mxu0 %v5761
          %6364 = vmatpush1.bf16.msra.mxu0 %v5760
          %6365 = vmatprep.subr.bf16.mxu0 %v5765
          %6366 = vmatpush1.bf16.msra.mxu0 %v5764
          %6367 = vmatprep.subr.bf16.mxu0 %v5769
          %6368 = vmatpush1.bf16.msra.mxu0 %v5768
          %6369 = vmatprep.subr.bf16.mxu0 %v5773
          %6370 = vmatpush1.bf16.msra.mxu0 %v5772
          %6371 = vmatprep.subr.bf16.mxu0 %v5777
          %6372 = vmatpush1.bf16.msra.mxu0 %v5776
          %6373 = vmatprep.subr.bf16.mxu0 %v5781
          %6374 = vmatpush1.bf16.msra.mxu0 %v5780
          %6375 = vmatprep.subr.bf16.mxu0 %v5785
          %6376 = vmatpush1.bf16.msra.mxu0 %v5784
          %6377 = vmatprep.subr.bf16.mxu0 %v5789
          %6378 = vmatpush1.bf16.msra.mxu0 %v5788
          %6379 = vmatprep.subr.bf16.mxu0 %v5793
          %6380 = vmatpush1.bf16.msra.mxu0 %v5792
          %6381 = vmatprep.subr.bf16.mxu0 %v5797
          %6382 = vmatpush1.bf16.msra.mxu0 %v5796
          %6383 = vmatprep.subr.bf16.mxu0 %v5801
          %6384 = vmatpush1.bf16.msra.mxu0 %v5800
          %6385 = vmatprep.subr.bf16.mxu0 %v5805
          %6386 = vmatpush1.bf16.msra.mxu0 %v5804
          %6387 = vmatprep.subr.bf16.mxu0 %v5809
          %6388 = vmatpush1.bf16.msra.mxu0 %v5808
          %6389 = vmatprep.subr.bf16.mxu0 %v5813
          %6390 = vmatpush1.bf16.msra.mxu0 %v5812
          %6391 = vmatprep.subr.bf16.mxu0 %v5817
          %6392 = vmatpush1.bf16.msra.mxu0 %v5816
          %6393 = vmatprep.mubr.bf16.mxu0 %v4515
          %6394 = vmatmul.mubr.bf16.gmra.mrb[0].mxu0 %v4514
          %v6395 = vpop.f32.mrb[0].mxu0
          %v6396 = vadd.f32 %v6355, %v6395
          %v6397 = vpop.f32.mrb[0].mxu0
          %v6398 = vadd.f32 %v6357, %v6397
          %v6399 = vpop.f32.mrb[0].mxu0
          %v6400 = vpop.f32.mrb[0].mxu0
          %6401 = vdwg.mxu0
          %vm6402 = vcmp.gt.f32.partialorder %v6232, 0.0
          %vm6403 = vcmp.gt.f32.partialorder %v6234, 0.0
          %vm6404 = vcmp.gt.f32.partialorder %v6396, 0.0
          %vm6405 = vcmp.gt.f32.partialorder %v6398, 0.0
          %v6406 = vmul.f32 %v6232, 0.2
          %v6407 = vmul.f32 %v6234, 0.2
          %v6408 = vmul.f32 %v6396, 0.2
          %v6409 = vmul.f32 %v6398, 0.2
          %v6410 = vsel %vm6402, %v6232, %v6406
          %v6411 = vsel %vm6403, %v6234, %v6407
          %v6412 = vsel %vm6404, %v6396, %v6408
          %v6413 = vsel %vm6405, %v6398, %v6409
          %v6414 = vpack.c.bf16 %v6410, %v6410
          %v6415 = vpack.c.bf16 %v6411, %v6411
          %v6416 = vpack.c.bf16 %v6412, %v6412
          %v6417 = vpack.c.bf16 %v6413, %v6413
          %v6418 = vld [vmem:[#allocation15] sm:$0xff]
          %v6419 = vld [vmem:[#allocation15 + $0x8] sm:$0xff]
          %v6420 = vld [vmem:[#allocation15 + $0x10] sm:$0xff]
          %v6421 = vld [vmem:[#allocation15 + $0x18] sm:$0xff]
          %v6422 = vld [vmem:[#allocation15 + $0x20] sm:$0xff]
          %v6423 = vld [vmem:[#allocation15 + $0x28] sm:$0xff]
          %v6424 = vld [vmem:[#allocation15 + $0x30] sm:$0xff]
          %v6425 = vld [vmem:[#allocation15 + $0x38] sm:$0xff]
          %v6426 = vld [vmem:[#allocation15 + $0x40] sm:$0xff]
          %v6427 = vld [vmem:[#allocation15 + $0x48] sm:$0xff]
          %v6428 = vld [vmem:[#allocation15 + $0x50] sm:$0xff]
          %v6429 = vld [vmem:[#allocation15 + $0x58] sm:$0xff]
          %v6430 = vld [vmem:[#allocation15 + $0x60] sm:$0xff]
          %v6431 = vld [vmem:[#allocation15 + $0x68] sm:$0xff]
          %v6432 = vld [vmem:[#allocation15 + $0x70] sm:$0xff]
          %v6433 = vld [vmem:[#allocation15 + $0x78] sm:$0xff]
          %v6434 = vld [vmem:[#allocation15 + $0x80] sm:$0xff]
          %v6435 = vld [vmem:[#allocation15 + $0x88] sm:$0xff]
          %v6436 = vld [vmem:[#allocation15 + $0x90] sm:$0xff]
          %v6437 = vld [vmem:[#allocation15 + $0x98] sm:$0xff]
          %v6438 = vld [vmem:[#allocation15 + $0xa0] sm:$0xff]
          %v6439 = vld [vmem:[#allocation15 + $0xa8] sm:$0xff]
          %v6440 = vld [vmem:[#allocation15 + $0xb0] sm:$0xff]
          %v6441 = vld [vmem:[#allocation15 + $0xb8] sm:$0xff]
          %v6442 = vld [vmem:[#allocation15 + $0xc0] sm:$0xff]
          %v6443 = vld [vmem:[#allocation15 + $0xc8] sm:$0xff]
          %v6444 = vld [vmem:[#allocation15 + $0xd0] sm:$0xff]
          %v6445 = vld [vmem:[#allocation15 + $0xd8] sm:$0xff]
          %v6446 = vld [vmem:[#allocation15 + $0xe0] sm:$0xff]
          %v6447 = vld [vmem:[#allocation15 + $0xe8] sm:$0xff]
          %v6448 = vld [vmem:[#allocation15 + $0xf0] sm:$0xff]
          %v6449 = vld [vmem:[#allocation15 + $0xf8] sm:$0xff]
          %v6450 = vld [vmem:[#allocation15 + $0x100] sm:$0xff]
          %v6451 = vld [vmem:[#allocation15 + $0x108] sm:$0xff]
          %v6452 = vld [vmem:[#allocation15 + $0x110] sm:$0xff]
          %v6453 = vld [vmem:[#allocation15 + $0x118] sm:$0xff]
          %v6454 = vld [vmem:[#allocation15 + $0x120] sm:$0xff]
          %v6455 = vld [vmem:[#allocation15 + $0x128] sm:$0xff]
          %v6456 = vld [vmem:[#allocation15 + $0x130] sm:$0xff]
          %v6457 = vld [vmem:[#allocation15 + $0x138] sm:$0xff]
          %v6458 = vld [vmem:[#allocation15 + $0x140] sm:$0xff]
          %v6459 = vld [vmem:[#allocation15 + $0x148] sm:$0xff]
          %v6460 = vld [vmem:[#allocation15 + $0x150] sm:$0xff]
          %v6461 = vld [vmem:[#allocation15 + $0x158] sm:$0xff]
          %v6462 = vld [vmem:[#allocation15 + $0x160] sm:$0xff]
          %v6463 = vld [vmem:[#allocation15 + $0x168] sm:$0xff]
          %v6464 = vld [vmem:[#allocation15 + $0x170] sm:$0xff]
          %v6465 = vld [vmem:[#allocation15 + $0x178] sm:$0xff]
          %v6466 = vld [vmem:[#allocation15 + $0x180] sm:$0xff]
          %v6467 = vld [vmem:[#allocation15 + $0x188] sm:$0xff]
          %v6468 = vld [vmem:[#allocation15 + $0x190] sm:$0xff]
          %v6469 = vld [vmem:[#allocation15 + $0x198] sm:$0xff]
          %v6470 = vld [vmem:[#allocation15 + $0x1a0] sm:$0xff]
          %v6471 = vld [vmem:[#allocation15 + $0x1a8] sm:$0xff]
          %v6472 = vld [vmem:[#allocation15 + $0x1b0] sm:$0xff]
          %v6473 = vld [vmem:[#allocation15 + $0x1b8] sm:$0xff]
          %v6474 = vld [vmem:[#allocation15 + $0x1c0] sm:$0xff]
          %v6475 = vld [vmem:[#allocation15 + $0x1c8] sm:$0xff]
          %v6476 = vld [vmem:[#allocation15 + $0x1d0] sm:$0xff]
          %v6477 = vld [vmem:[#allocation15 + $0x1d8] sm:$0xff]
          %v6478 = vld [vmem:[#allocation15 + $0x1e0] sm:$0xff]
          %v6479 = vld [vmem:[#allocation15 + $0x1e8] sm:$0xff]
          %v6480 = vld [vmem:[#allocation15 + $0x1f0] sm:$0xff]
          %v6481 = vld [vmem:[#allocation15 + $0x1f8] sm:$0xff]
          %v6482 = vld [vmem:[#allocation17] sm:$0x3]
          %v6484 = vlaneseq
          %v6485 = vshrl.u32 %v6484, 7
          %v6486 = vsub.s32 0, %v6485
          %v6487 = vrot.slane %v6482, %v6486
          %v6488 = vlaneseq
          %v6489 = vshrl.u32 %v6488, 7
          %v6490 = vsub.s32 1, %v6489
          %v6491 = vrot.slane %v6482, %v6490
          %v6558 = vunpack.c.l.b16 %v6418
          %v6559 = vunpack.c.h.b16 %v6418
          %v6560 = vunpack.c.l.b16 %v6419
          %v6561 = vunpack.c.h.b16 %v6419
          %v6562 = vunpack.c.l.b16 %v6420
          %v6563 = vunpack.c.h.b16 %v6420
          %v6564 = vunpack.c.l.b16 %v6421
          %v6565 = vunpack.c.h.b16 %v6421
          %v6566 = vunpack.c.l.b16 %v6422
          %v6567 = vunpack.c.h.b16 %v6422
          %v6568 = vunpack.c.l.b16 %v6423
          %v6569 = vunpack.c.h.b16 %v6423
          %v6570 = vunpack.c.l.b16 %v6424
          %v6571 = vunpack.c.h.b16 %v6424
          %v6572 = vunpack.c.l.b16 %v6425
          %v6573 = vunpack.c.h.b16 %v6425
          %v6574 = vunpack.c.l.b16 %v6426
          %v6575 = vunpack.c.h.b16 %v6426
          %v6576 = vunpack.c.l.b16 %v6427
          %v6577 = vunpack.c.h.b16 %v6427
          %v6578 = vunpack.c.l.b16 %v6428
          %v6579 = vunpack.c.h.b16 %v6428
          %v6580 = vunpack.c.l.b16 %v6429
          %v6581 = vunpack.c.h.b16 %v6429
          %v6582 = vunpack.c.l.b16 %v6430
          %v6583 = vunpack.c.h.b16 %v6430
          %v6584 = vunpack.c.l.b16 %v6431
          %v6585 = vunpack.c.h.b16 %v6431
          %v6586 = vunpack.c.l.b16 %v6432
          %v6587 = vunpack.c.h.b16 %v6432
          %v6588 = vunpack.c.l.b16 %v6433
          %v6589 = vunpack.c.h.b16 %v6433
          %v6590 = vunpack.c.l.b16 %v6434
          %v6591 = vunpack.c.h.b16 %v6434
          %v6592 = vunpack.c.l.b16 %v6435
          %v6593 = vunpack.c.h.b16 %v6435
          %v6594 = vunpack.c.l.b16 %v6436
          %v6595 = vunpack.c.h.b16 %v6436
          %v6596 = vunpack.c.l.b16 %v6437
          %v6597 = vunpack.c.h.b16 %v6437
          %v6598 = vunpack.c.l.b16 %v6438
          %v6599 = vunpack.c.h.b16 %v6438
          %v6600 = vunpack.c.l.b16 %v6439
          %v6601 = vunpack.c.h.b16 %v6439
          %v6602 = vunpack.c.l.b16 %v6440
          %v6603 = vunpack.c.h.b16 %v6440
          %v6604 = vunpack.c.l.b16 %v6441
          %v6605 = vunpack.c.h.b16 %v6441
          %v6606 = vunpack.c.l.b16 %v6442
          %v6607 = vunpack.c.h.b16 %v6442
          %v6608 = vunpack.c.l.b16 %v6443
          %v6609 = vunpack.c.h.b16 %v6443
          %v6610 = vunpack.c.l.b16 %v6444
          %v6611 = vunpack.c.h.b16 %v6444
          %v6612 = vunpack.c.l.b16 %v6445
          %v6613 = vunpack.c.h.b16 %v6445
          %v6614 = vunpack.c.l.b16 %v6446
          %v6615 = vunpack.c.h.b16 %v6446
          %v6616 = vunpack.c.l.b16 %v6447
          %v6617 = vunpack.c.h.b16 %v6447
          %v6618 = vunpack.c.l.b16 %v6448
          %v6619 = vunpack.c.h.b16 %v6448
          %v6620 = vunpack.c.l.b16 %v6449
          %v6621 = vunpack.c.h.b16 %v6449
          %v6622 = vunpack.c.l.b16 %v6450
          %v6623 = vunpack.c.h.b16 %v6450
          %v6624 = vunpack.c.l.b16 %v6451
          %v6625 = vunpack.c.h.b16 %v6451
          %v6626 = vunpack.c.l.b16 %v6452
          %v6627 = vunpack.c.h.b16 %v6452
          %v6628 = vunpack.c.l.b16 %v6453
          %v6629 = vunpack.c.h.b16 %v6453
          %v6630 = vunpack.c.l.b16 %v6454
          %v6631 = vunpack.c.h.b16 %v6454
          %v6632 = vunpack.c.l.b16 %v6455
          %v6633 = vunpack.c.h.b16 %v6455
          %v6634 = vunpack.c.l.b16 %v6456
          %v6635 = vunpack.c.h.b16 %v6456
          %v6636 = vunpack.c.l.b16 %v6457
          %v6637 = vunpack.c.h.b16 %v6457
          %v6638 = vunpack.c.l.b16 %v6458
          %v6639 = vunpack.c.h.b16 %v6458
          %v6640 = vunpack.c.l.b16 %v6459
          %v6641 = vunpack.c.h.b16 %v6459
          %v6642 = vunpack.c.l.b16 %v6460
          %v6643 = vunpack.c.h.b16 %v6460
          %v6644 = vunpack.c.l.b16 %v6461
          %v6645 = vunpack.c.h.b16 %v6461
          %v6646 = vunpack.c.l.b16 %v6462
          %v6647 = vunpack.c.h.b16 %v6462
          %v6648 = vunpack.c.l.b16 %v6463
          %v6649 = vunpack.c.h.b16 %v6463
          %v6650 = vunpack.c.l.b16 %v6464
          %v6651 = vunpack.c.h.b16 %v6464
          %v6652 = vunpack.c.l.b16 %v6465
          %v6653 = vunpack.c.h.b16 %v6465
          %v6654 = vunpack.c.l.b16 %v6466
          %v6655 = vunpack.c.h.b16 %v6466
          %v6656 = vunpack.c.l.b16 %v6467
          %v6657 = vunpack.c.h.b16 %v6467
          %v6658 = vunpack.c.l.b16 %v6468
          %v6659 = vunpack.c.h.b16 %v6468
          %v6660 = vunpack.c.l.b16 %v6469
          %v6661 = vunpack.c.h.b16 %v6469
          %v6662 = vunpack.c.l.b16 %v6470
          %v6663 = vunpack.c.h.b16 %v6470
          %v6664 = vunpack.c.l.b16 %v6471
          %v6665 = vunpack.c.h.b16 %v6471
          %v6666 = vunpack.c.l.b16 %v6472
          %v6667 = vunpack.c.h.b16 %v6472
          %v6668 = vunpack.c.l.b16 %v6473
          %v6669 = vunpack.c.h.b16 %v6473
          %v6670 = vunpack.c.l.b16 %v6474
          %v6671 = vunpack.c.h.b16 %v6474
          %v6672 = vunpack.c.l.b16 %v6475
          %v6673 = vunpack.c.h.b16 %v6475
          %v6674 = vunpack.c.l.b16 %v6476
          %v6675 = vunpack.c.h.b16 %v6476
          %v6676 = vunpack.c.l.b16 %v6477
          %v6677 = vunpack.c.h.b16 %v6477
          %v6678 = vunpack.c.l.b16 %v6478
          %v6679 = vunpack.c.h.b16 %v6478
          %v6680 = vunpack.c.l.b16 %v6479
          %v6681 = vunpack.c.h.b16 %v6479
          %v6682 = vunpack.c.l.b16 %v6480
          %v6683 = vunpack.c.h.b16 %v6480
          %v6684 = vunpack.c.l.b16 %v6481
          %v6685 = vunpack.c.h.b16 %v6481
          %v6686 = vpack.c.b16 %v6560, %v6558
          %v6687 = vpack.c.b16 %v6561, %v6559
          %v6688 = vpack.c.b16 %v6564, %v6562
          %v6689 = vpack.c.b16 %v6565, %v6563
          %v6690 = vpack.c.b16 %v6568, %v6566
          %v6691 = vpack.c.b16 %v6569, %v6567
          %v6692 = vpack.c.b16 %v6572, %v6570
          %v6693 = vpack.c.b16 %v6573, %v6571
          %v6694 = vpack.c.b16 %v6576, %v6574
          %v6695 = vpack.c.b16 %v6577, %v6575
          %v6696 = vpack.c.b16 %v6580, %v6578
          %v6697 = vpack.c.b16 %v6581, %v6579
          %v6698 = vpack.c.b16 %v6584, %v6582
          %v6699 = vpack.c.b16 %v6585, %v6583
          %v6700 = vpack.c.b16 %v6588, %v6586
          %v6701 = vpack.c.b16 %v6589, %v6587
          %v6702 = vpack.c.b16 %v6592, %v6590
          %v6703 = vpack.c.b16 %v6593, %v6591
          %v6704 = vpack.c.b16 %v6596, %v6594
          %v6705 = vpack.c.b16 %v6597, %v6595
          %v6706 = vpack.c.b16 %v6600, %v6598
          %v6707 = vpack.c.b16 %v6601, %v6599
          %v6708 = vpack.c.b16 %v6604, %v6602
          %v6709 = vpack.c.b16 %v6605, %v6603
          %v6710 = vpack.c.b16 %v6608, %v6606
          %v6711 = vpack.c.b16 %v6609, %v6607
          %v6712 = vpack.c.b16 %v6612, %v6610
          %v6713 = vpack.c.b16 %v6613, %v6611
          %v6714 = vpack.c.b16 %v6616, %v6614
          %v6715 = vpack.c.b16 %v6617, %v6615
          %v6716 = vpack.c.b16 %v6620, %v6618
          %v6717 = vpack.c.b16 %v6621, %v6619
          %v6718 = vpack.c.b16 %v6624, %v6622
          %v6719 = vpack.c.b16 %v6625, %v6623
          %v6720 = vpack.c.b16 %v6628, %v6626
          %v6721 = vpack.c.b16 %v6629, %v6627
          %v6722 = vpack.c.b16 %v6632, %v6630
          %v6723 = vpack.c.b16 %v6633, %v6631
          %v6724 = vpack.c.b16 %v6636, %v6634
          %v6725 = vpack.c.b16 %v6637, %v6635
          %v6726 = vpack.c.b16 %v6640, %v6638
          %v6727 = vpack.c.b16 %v6641, %v6639
          %v6728 = vpack.c.b16 %v6644, %v6642
          %v6729 = vpack.c.b16 %v6645, %v6643
          %v6730 = vpack.c.b16 %v6648, %v6646
          %v6731 = vpack.c.b16 %v6649, %v6647
          %v6732 = vpack.c.b16 %v6652, %v6650
          %v6733 = vpack.c.b16 %v6653, %v6651
          %v6734 = vpack.c.b16 %v6656, %v6654
          %v6735 = vpack.c.b16 %v6657, %v6655
          %v6736 = vpack.c.b16 %v6660, %v6658
          %v6737 = vpack.c.b16 %v6661, %v6659
          %v6738 = vpack.c.b16 %v6664, %v6662
          %v6739 = vpack.c.b16 %v6665, %v6663
          %v6740 = vpack.c.b16 %v6668, %v6666
          %v6741 = vpack.c.b16 %v6669, %v6667
          %v6742 = vpack.c.b16 %v6672, %v6670
          %v6743 = vpack.c.b16 %v6673, %v6671
          %v6744 = vpack.c.b16 %v6676, %v6674
          %v6745 = vpack.c.b16 %v6677, %v6675
          %v6746 = vpack.c.b16 %v6680, %v6678
          %v6747 = vpack.c.b16 %v6681, %v6679
          %v6748 = vpack.c.b16 %v6684, %v6682
          %v6749 = vpack.c.b16 %v6685, %v6683
          %6814 = vmatprep.subr.bf16.mxu0 %v6687
          %6815 = vmatpush1.bf16.msra.mxu0 %v6686
          %6816 = vmatprep.subr.bf16.mxu0 %v6689
          %6817 = vmatpush1.bf16.msra.mxu0 %v6688
          %6818 = vmatprep.subr.bf16.mxu0 %v6691
          %6819 = vmatpush1.bf16.msra.mxu0 %v6690
          %6820 = vmatprep.subr.bf16.mxu0 %v6693
          %6821 = vmatpush1.bf16.msra.mxu0 %v6692
          %6822 = vmatprep.subr.bf16.mxu0 %v6695
          %6823 = vmatpush1.bf16.msra.mxu0 %v6694
          %6824 = vmatprep.subr.bf16.mxu0 %v6697
          %6825 = vmatpush1.bf16.msra.mxu0 %v6696
          %6826 = vmatprep.subr.bf16.mxu0 %v6699
          %6827 = vmatpush1.bf16.msra.mxu0 %v6698
          %6828 = vmatprep.subr.bf16.mxu0 %v6701
          %6829 = vmatpush1.bf16.msra.mxu0 %v6700
          %6830 = vmatprep.subr.bf16.mxu0 %v6703
          %6831 = vmatpush1.bf16.msra.mxu0 %v6702
          %6832 = vmatprep.subr.bf16.mxu0 %v6705
          %6833 = vmatpush1.bf16.msra.mxu0 %v6704
          %6834 = vmatprep.subr.bf16.mxu0 %v6707
          %6835 = vmatpush1.bf16.msra.mxu0 %v6706
          %6836 = vmatprep.subr.bf16.mxu0 %v6709
          %6837 = vmatpush1.bf16.msra.mxu0 %v6708
          %6838 = vmatprep.subr.bf16.mxu0 %v6711
          %6839 = vmatpush1.bf16.msra.mxu0 %v6710
          %6840 = vmatprep.subr.bf16.mxu0 %v6713
          %6841 = vmatpush1.bf16.msra.mxu0 %v6712
          %6842 = vmatprep.subr.bf16.mxu0 %v6715
          %6843 = vmatpush1.bf16.msra.mxu0 %v6714
          %6844 = vmatprep.subr.bf16.mxu0 %v6717
          %6845 = vmatpush1.bf16.msra.mxu0 %v6716
          %6846 = vmatprep.mubr.bf16.mxu0 %v6415
          %6847 = vmatmul.mubr.bf16.gmra.mrb[0].mxu0 %v6414
          %v6848 = vpop.f32.mrb[0].mxu0
          %v6849 = vadd.f32 %v6487, %v6848
          %v6850 = vpop.f32.mrb[0].mxu0
          %v6851 = vadd.f32 %v6491, %v6850
          %v6852 = vpop.f32.mrb[0].mxu0
          %v6853 = vpop.f32.mrb[0].mxu0
          %6854 = vdwg.mxu0
          %6855 = vmatprep.subr.bf16.mxu0 %v6719
          %6856 = vmatpush1.bf16.msra.mxu0 %v6718
          %6857 = vmatprep.subr.bf16.mxu0 %v6721
          %6858 = vmatpush1.bf16.msra.mxu0 %v6720
          %6859 = vmatprep.subr.bf16.mxu0 %v6723
          %6860 = vmatpush1.bf16.msra.mxu0 %v6722
          %6861 = vmatprep.subr.bf16.mxu0 %v6725
          %6862 = vmatpush1.bf16.msra.mxu0 %v6724
          %6863 = vmatprep.subr.bf16.mxu0 %v6727
          %6864 = vmatpush1.bf16.msra.mxu0 %v6726
          %6865 = vmatprep.subr.bf16.mxu0 %v6729
          %6866 = vmatpush1.bf16.msra.mxu0 %v6728
          %6867 = vmatprep.subr.bf16.mxu0 %v6731
          %6868 = vmatpush1.bf16.msra.mxu0 %v6730
          %6869 = vmatprep.subr.bf16.mxu0 %v6733
          %6870 = vmatpush1.bf16.msra.mxu0 %v6732
          %6871 = vmatprep.subr.bf16.mxu0 %v6735
          %6872 = vmatpush1.bf16.msra.mxu0 %v6734
          %6873 = vmatprep.subr.bf16.mxu0 %v6737
          %6874 = vmatpush1.bf16.msra.mxu0 %v6736
          %6875 = vmatprep.subr.bf16.mxu0 %v6739
          %6876 = vmatpush1.bf16.msra.mxu0 %v6738
          %6877 = vmatprep.subr.bf16.mxu0 %v6741
          %6878 = vmatpush1.bf16.msra.mxu0 %v6740
          %6879 = vmatprep.subr.bf16.mxu0 %v6743
          %6880 = vmatpush1.bf16.msra.mxu0 %v6742
          %6881 = vmatprep.subr.bf16.mxu0 %v6745
          %6882 = vmatpush1.bf16.msra.mxu0 %v6744
          %6883 = vmatprep.subr.bf16.mxu0 %v6747
          %6884 = vmatpush1.bf16.msra.mxu0 %v6746
          %6885 = vmatprep.subr.bf16.mxu0 %v6749
          %6886 = vmatpush1.bf16.msra.mxu0 %v6748
          %6887 = vmatprep.mubr.bf16.mxu0 %v6417
          %6888 = vmatmul.mubr.bf16.gmra.mrb[0].mxu0 %v6416
          %v6889 = vpop.f32.mrb[0].mxu0
          %v6890 = vadd.f32 %v6849, %v6889
          %v6891 = vpop.f32.mrb[0].mxu0
          %v6892 = vadd.f32 %v6851, %v6891
          %v6893 = vpop.f32.mrb[0].mxu0
          %v6894 = vpop.f32.mrb[0].mxu0
          %6895 = vdwg.mxu0
          %vm6896 = vcmp.gt.f32.partialorder %v6890, 0.0
          %vm6897 = vcmp.gt.f32.partialorder %v6892, 0.0
          %v6898 = vmul.f32 %v6890, 0.2
          %v6899 = vmul.f32 %v6892, 0.2
          %v6900 = vsel %vm6896, %v6890, %v6898
          %v6901 = vsel %vm6897, %v6892, %v6899
          %v6902 = vpack.c.bf16 %v6900, %v6900
          %v6903 = vpack.c.bf16 %v6901, %v6901
          %v6904 = vld [vmem:[#allocation18] sm:$0xf]
          %v6905 = vld [vmem:[#allocation18 + $0x4] sm:$0xf]
          %v6906 = vld [vmem:[#allocation18 + $0x8] sm:$0xf]
          %v6907 = vld [vmem:[#allocation18 + $0xc] sm:$0xf]
          %v6908 = vld [vmem:[#allocation18 + $0x10] sm:$0xf]
          %v6909 = vld [vmem:[#allocation18 + $0x14] sm:$0xf]
          %v6910 = vld [vmem:[#allocation18 + $0x18] sm:$0xf]
          %v6911 = vld [vmem:[#allocation18 + $0x1c] sm:$0xf]
          %v6912 = vld [vmem:[#allocation18 + $0x20] sm:$0xf]
          %v6913 = vld [vmem:[#allocation18 + $0x24] sm:$0xf]
          %v6914 = vld [vmem:[#allocation18 + $0x28] sm:$0xf]
          %v6915 = vld [vmem:[#allocation18 + $0x2c] sm:$0xf]
          %v6916 = vld [vmem:[#allocation18 + $0x30] sm:$0xf]
          %v6917 = vld [vmem:[#allocation18 + $0x34] sm:$0xf]
          %v6918 = vld [vmem:[#allocation18 + $0x38] sm:$0xf]
          %v6919 = vld [vmem:[#allocation18 + $0x3c] sm:$0xf]
          %v6920 = vld [vmem:[#allocation18 + $0x40] sm:$0xf]
          %v6921 = vld [vmem:[#allocation18 + $0x44] sm:$0xf]
          %v6922 = vld [vmem:[#allocation18 + $0x48] sm:$0xf]
          %v6923 = vld [vmem:[#allocation18 + $0x4c] sm:$0xf]
          %v6924 = vld [vmem:[#allocation18 + $0x50] sm:$0xf]
          %v6925 = vld [vmem:[#allocation18 + $0x54] sm:$0xf]
          %v6926 = vld [vmem:[#allocation18 + $0x58] sm:$0xf]
          %v6927 = vld [vmem:[#allocation18 + $0x5c] sm:$0xf]
          %v6928 = vld [vmem:[#allocation18 + $0x60] sm:$0xf]
          %v6929 = vld [vmem:[#allocation18 + $0x64] sm:$0xf]
          %v6930 = vld [vmem:[#allocation18 + $0x68] sm:$0xf]
          %v6931 = vld [vmem:[#allocation18 + $0x6c] sm:$0xf]
          %v6932 = vld [vmem:[#allocation18 + $0x70] sm:$0xf]
          %v6933 = vld [vmem:[#allocation18 + $0x74] sm:$0xf]
          %v6934 = vld [vmem:[#allocation18 + $0x78] sm:$0xf]
          %v6935 = vld [vmem:[#allocation18 + $0x7c] sm:$0xf]
          %v6936 = vld [vmem:[#allocation20] sm:$0x1]
          %v6938 = vlaneseq
          %v6939 = vshrl.u32 %v6938, 7
          %v6940 = vsub.s32 0, %v6939
          %v6941 = vrot.slane %v6936, %v6940
          %v6975 = vunpack.c.l.b16 %v6904
          %v6976 = vunpack.c.l.b16 %v6905
          %v6977 = vunpack.c.l.b16 %v6906
          %v6978 = vunpack.c.l.b16 %v6907
          %v6979 = vunpack.c.l.b16 %v6908
          %v6980 = vunpack.c.l.b16 %v6909
          %v6981 = vunpack.c.l.b16 %v6910
          %v6982 = vunpack.c.l.b16 %v6911
          %v6983 = vunpack.c.l.b16 %v6912
          %v6984 = vunpack.c.l.b16 %v6913
          %v6985 = vunpack.c.l.b16 %v6914
          %v6986 = vunpack.c.l.b16 %v6915
          %v6987 = vunpack.c.l.b16 %v6916
          %v6988 = vunpack.c.l.b16 %v6917
          %v6989 = vunpack.c.l.b16 %v6918
          %v6990 = vunpack.c.l.b16 %v6919
          %v6991 = vunpack.c.l.b16 %v6920
          %v6992 = vunpack.c.l.b16 %v6921
          %v6993 = vunpack.c.l.b16 %v6922
          %v6994 = vunpack.c.l.b16 %v6923
          %v6995 = vunpack.c.l.b16 %v6924
          %v6996 = vunpack.c.l.b16 %v6925
          %v6997 = vunpack.c.l.b16 %v6926
          %v6998 = vunpack.c.l.b16 %v6927
          %v6999 = vunpack.c.l.b16 %v6928
          %v7000 = vunpack.c.l.b16 %v6929
          %v7001 = vunpack.c.l.b16 %v6930
          %v7002 = vunpack.c.l.b16 %v6931
          %v7003 = vunpack.c.l.b16 %v6932
          %v7004 = vunpack.c.l.b16 %v6933
          %v7005 = vunpack.c.l.b16 %v6934
          %v7006 = vunpack.c.l.b16 %v6935
          %v7007 = vpack.c.b16 %v6976, %v6975
          %v7008 = vpack.c.b16 %v6978, %v6977
          %v7009 = vpack.c.b16 %v6980, %v6979
          %v7010 = vpack.c.b16 %v6982, %v6981
          %v7011 = vpack.c.b16 %v6984, %v6983
          %v7012 = vpack.c.b16 %v6986, %v6985
          %v7013 = vpack.c.b16 %v6988, %v6987
          %v7014 = vpack.c.b16 %v6990, %v6989
          %v7015 = vpack.c.b16 %v6992, %v6991
          %v7016 = vpack.c.b16 %v6994, %v6993
          %v7017 = vpack.c.b16 %v6996, %v6995
          %v7018 = vpack.c.b16 %v6998, %v6997
          %v7019 = vpack.c.b16 %v7000, %v6999
          %v7020 = vpack.c.b16 %v7002, %v7001
          %v7021 = vpack.c.b16 %v7004, %v7003
          %v7022 = vpack.c.b16 %v7006, %v7005
          %7039 = vmatprep.subr.bf16.mxu0 0
          %7040 = vmatpush1.bf16.msra.mxu0 %v7007
          %7041 = vmatprep.subr.bf16.mxu0 0
          %7042 = vmatpush1.bf16.msra.mxu0 %v7008
          %7043 = vmatprep.subr.bf16.mxu0 0
          %7044 = vmatpush1.bf16.msra.mxu0 %v7009
          %7045 = vmatprep.subr.bf16.mxu0 0
          %7046 = vmatpush1.bf16.msra.mxu0 %v7010
          %7047 = vmatprep.subr.bf16.mxu0 0
          %7048 = vmatpush1.bf16.msra.mxu0 %v7011
          %7049 = vmatprep.subr.bf16.mxu0 0
          %7050 = vmatpush1.bf16.msra.mxu0 %v7012
          %7051 = vmatprep.subr.bf16.mxu0 0
          %7052 = vmatpush1.bf16.msra.mxu0 %v7013
          %7053 = vmatprep.subr.bf16.mxu0 0
          %7054 = vmatpush1.bf16.msra.mxu0 %v7014
          %7055 = vmatprep.subr.bf16.mxu0 0
          %7056 = vmatpush1.bf16.msra.mxu0 %v7015
          %7057 = vmatprep.subr.bf16.mxu0 0
          %7058 = vmatpush1.bf16.msra.mxu0 %v7016
          %7059 = vmatprep.subr.bf16.mxu0 0
          %7060 = vmatpush1.bf16.msra.mxu0 %v7017
          %7061 = vmatprep.subr.bf16.mxu0 0
          %7062 = vmatpush1.bf16.msra.mxu0 %v7018
          %7063 = vmatprep.subr.bf16.mxu0 0
          %7064 = vmatpush1.bf16.msra.mxu0 %v7019
          %7065 = vmatprep.subr.bf16.mxu0 0
          %7066 = vmatpush1.bf16.msra.mxu0 %v7020
          %7067 = vmatprep.subr.bf16.mxu0 0
          %7068 = vmatpush1.bf16.msra.mxu0 %v7021
          %7069 = vmatprep.subr.bf16.mxu0 0
          %7070 = vmatpush1.bf16.msra.mxu0 %v7022
          %7071 = vmatprep.mubr.bf16.mxu0 %v6903
          %7072 = vmatmul.mubr.bf16.gmra.mrb[0].mxu0 %v6902
          %v7073 = vpop.f32.mrb[0].mxu0
          %v7074 = vadd.f32 %v6941, %v7073
          %v7075 = vpop.f32.mrb[0].mxu0
          %v7076 = vpop.f32.mrb[0].mxu0
          %v7077 = vpop.f32.mrb[0].mxu0
          %7078 = vdwg.mxu0
          %v7079 = vand.u32 2147483647, %v7074
          %v7080 = vsub.f32 0.0, %v7079
          %v7081 = vmul.f32 %v7080, 1.442695
          %v7082 = vpow.pop %v7081
          %v7083 = vadd.f32 %v7082, 1.0
          %v7084 = vrcp.pop %v7083
          %v7085 = vmul.f32 1.0, %v7084
          %vm7086 = vcmp.ge.f32.partialorder %v7074, 0.0
          %v7087 = vsub.f32 1.0, %v7085
          %v7088 = vsel %vm7086, %v7085, %v7087
          %7089 = vst [vmem:[#allocation21] sm:$0xff] %v7088
        $region116: #{tpu_custom_call.1} parent=63 // pred_fallthru
          _
        // Predicated region
        $region117: #{tpu_custom_call.1} parent=63 // pred_check
          %p7090 = pneg %p314
        $region118: #{tpu_custom_call.1} parent=63 // pred_check_branch
          %7092 = sbr.rel (%p7090) target = $region120
        $region119: #{tpu_custom_call.1} parent=63 // pred_region
          %s7094 = ssub.s32 128, 128
          %7095 = vsyncadd [#allocation5], %s7094
          %s7096 = smul.addr %s37, 128
          %s7097 = scalar_lea.hbm %s11, %s7096
          %s7099 = sshll.u32 [#allocation21], 4
          %s7100 = int_to_ptr.vmem [resolvable:$true] %s7099
          %7102 = dma.vmem_to_hbm [thread:$0]  %s7100, 128, %s7097, [#allocation5]
        $region120: #{tpu_custom_call.1} parent=63 // pred_fallthru
          _
        // Predicated region
        $region121: #{tpu_custom_call.1} parent=63 // pred_check
          %p7103 = pneg %p314
        $region122: #{tpu_custom_call.1} parent=63 // pred_check_branch
          %7105 = sbr.rel (%p7103) target = $region124
        $region123: #{tpu_custom_call.1} parent=63 // pred_region
          %7106 = dma.done [#allocation5], 128
        $region124: #{tpu_custom_call.1} parent=63 // pred_fallthru
          _
      $region64: #{tpu_custom_call.1} parent=5 // pred_fallthru
        _
      %p7107 = scmp.le.s32.totalorder 2, %s28
      // Predicated region
      $region125: #{tpu_custom_call.1} parent=5 // pred_check
        %p7108 = pneg %p7107
      $region126: #{tpu_custom_call.1} parent=5 // pred_check_branch
        %7110 = sbr.rel (%p7108) target = $region128
      $region127: #{tpu_custom_call.1} parent=5 // pred_region
        %s7111 = ssub.s32 %s28, 2
      $region128: #{tpu_custom_call.1} parent=5 // pred_fallthru
        _
    $region6: #{tpu_custom_call.1} parent=1 // loop_footer
      %s32 = sadd.s32 1, %s28
    $region7: #{tpu_custom_call.1} parent=1 // loop_footer_branch
      %27 = sbr.rel target = $region3
    $region8: #{tpu_custom_call.1} parent=1 // loop_exit
      _
    %7112 = vsyncpa [#allocation4], 1
    %s7113 = scalar_lea.sflag [#allocation4], 1
    %7114 = vsyncpa %s7113, 1
    %7115 = vsyncpa [#allocation7], 1
    %s7116 = scalar_lea.sflag [#allocation7], 1
    %7117 = vsyncpa %s7116, 1
    %7118 = vsyncpa [#allocation10], 1
    %s7119 = scalar_lea.sflag [#allocation10], 1
    %7120 = vsyncpa %s7119, 1
    %7121 = vsyncpa [#allocation13], 1
    %7122 = vsyncpa [#allocation16], 1
    %7123 = vsyncpa [#allocation19], 1
    %7124 = vsyncpa [#allocation5], 1
    %s7125 = scalar_lea.sflag [#allocation5], 1
    %7126 = vsyncpa %s7125, 1

</llo_original>
